<compile_context>
chip_gen: v7x
topology: tpu7x:2x2x1
jax: 0.10.0
libtpu: 0.0.40
codegen_flags: <defaults>
</compile_context>

<pallas_src>
import math
import functools

import jax
import jax.numpy as jnp
from jax.experimental import pallas as pl
from jax.experimental.pallas import tpu as pltpu

N_EMBD = 128
NUM_HEADS = 8
LN_EPS = 1e-5
_INV_SQRT2 = 0.7071067811865476


def _layer_norm(x, gamma, beta):
    mu = jnp.mean(x, axis=-1, keepdims=True)
    var = jnp.mean((x - mu) ** 2, axis=-1, keepdims=True)
    return (x - mu) * jax.lax.rsqrt(var + LN_EPS) * gamma + beta


def block_kernel(x_ref,
                 g1_ref, b1_ref,
                 wqkv_ref,
                 wp_ref, bp_ref,
                 g2_ref, b2_ref,
                 w1_ref, bf1_ref,
                 w2_ref, bf2_ref,
                 o_ref,
                 *, num_heads, approx_gelu):
    BB, T, C = x_ref.shape
    M = BB * T
    hs = C // num_heads
    mm_dtype = wqkv_ref.dtype            # bf16 on the default fast path, else f32
    cast = lambda a: a.astype(mm_dtype)

    x = x_ref[...].reshape(M, C)         # flattened token slab (M, C)

    # ---- ln1 (f32) ----
    xn = _layer_norm(x, g1_ref[0], b1_ref[0])

    # ---- fused QKV projection: single (M, C) x (C, 3C) MXU pass ----
    qkv = jnp.dot(cast(xn), wqkv_ref[...], preferred_element_type=jnp.float32)
    qkv_c = cast(qkv)

    # ---- attention: per-head lane slices, batch dim = BB ----
    o_heads = []
    for h in range(num_heads):
        lo = h * hs
        q_h = qkv_c[:, lo:lo + hs].reshape(BB, T, hs)           # scale already in Wq
        k_h = qkv_c[:, C + lo:C + lo + hs].reshape(BB, T, hs)
        v_h = qkv_c[:, 2 * C + lo:2 * C + lo + hs].reshape(BB, T, hs)

        s = jnp.einsum('btd,bsd->bts', q_h, k_h,
                       preferred_element_type=jnp.float32)       # (BB, T, T)
        s = s - jnp.max(s, axis=-1, keepdims=True)
        e = jnp.exp(s)
        l = jnp.sum(e, axis=-1, keepdims=True)                   # (BB, T, 1)
        o_h = jnp.einsum('bts,bsd->btd', cast(e), v_h,
                         preferred_element_type=jnp.float32)     # (BB, T, hs)
        # fold the 1/l softmax normalization in after PV (EUP reciprocal, free slot)
        o_h = o_h * pl.reciprocal(l, approx=True)
        o_heads.append(o_h.reshape(M, hs))

    # single lane-concat re-assembly + one full-K output projection matmul
    o_slab = jnp.concatenate(o_heads, axis=-1)                   # (M, C)
    attn = jnp.dot(cast(o_slab), wp_ref[...],
                   preferred_element_type=jnp.float32) + bp_ref[0]

    # ---- residual 1 + ln2 (f32) ----
    x2 = x + attn
    y = _layer_norm(x2, g2_ref[0], b2_ref[0])

    # ---- ffn: Linear -> GELU -> Linear ----
    h1 = jnp.dot(cast(y), w1_ref[...], preferred_element_type=jnp.float32) + bf1_ref[0]
    if approx_gelu:
        g = jax.nn.gelu(h1, approximate=True)                    # tanh -> EUP path
    else:
        g = 0.5 * h1 * (1.0 + jax.lax.erf(h1 * _INV_SQRT2))      # exact, PyTorch parity
    h2 = jnp.dot(cast(g), w2_ref[...], preferred_element_type=jnp.float32) + bf2_ref[0]

    # ---- residual 2 (adds to LN2 output, exactly as in the PyTorch code) ----
    o_ref[...] = (y + h2).reshape(BB, T, C)


def _choose_block_batch(B, T, *, min_rows=1024, vmem_budget_bytes=24 << 20):
    """Tokens-per-step selection: reach >= min_rows tokens per grid step
    (amortizes ~0.35us step overhead and fills the MXU; 1024 suits v6e/v7x,
    512 is enough on v5e) subject to a rough f32 working-set budget, and keep
    >= 2 grid steps when the batch allows (v7x megacore)."""
    bytes_per_row = 14 * 1024 + 32 * T          # intermediates + (H,T,T) scores
    max_rows = max(T, vmem_budget_bytes // bytes_per_row)
    divisors = [d for d in range(1, B + 1) if B % d == 0]
    fits = [d for d in divisors if d * T <= max_rows] or [divisors[0]]
    for need_rows, need_two in ((True, True), (True, False),
                                (False, True), (False, False)):
        cands = [d for d in fits
                 if (not need_rows or d * T >= min_rows)
                 and (not need_two or B // d >= 2)]
        if cands:
            # smallest block reaching min_rows; otherwise the largest that fits.
            return min(cands) if need_rows else max(cands)
    return fits[-1]


def block_forward(x, params, *, num_heads=NUM_HEADS, block_batch=None,
                  matmul_dtype=jnp.bfloat16, approx_gelu=False):
    B, T, C = x.shape
    H4 = 4 * C
    assert C % num_heads == 0
    (g1, b1, wq, wk, wv, wp, bp, g2, b2, w1, bf1, w2, bf2) = params

    # Fold the attention scale (n_embd**-0.5, matching the PyTorch source) into
    # Wq and fuse Wq/Wk/Wv into one (C, 3C) weight -> one MXU pass per step.
    wqkv = jnp.concatenate([wq * (C ** -0.5), wk, wv], axis=1).astype(matmul_dtype)
    wp_c = wp.astype(matmul_dtype)
    w1_c = w1.astype(matmul_dtype)
    w2_c = w2.astype(matmul_dtype)

    BB = block_batch if block_batch is not None else _choose_block_batch(B, T)
    assert B % BB == 0

    full = lambda shape: pl.BlockSpec(shape, lambda b: tuple(0 for _ in shape))

    in_specs = [
        pl.BlockSpec((BB, T, C), lambda b: (b, 0, 0)),  # x
        full((1, C)), full((1, C)),                     # ln1 gamma/beta
        full((C, 3 * C)),                               # fused Wqkv (scale folded)
        full((C, C)), full((1, C)),                     # proj W, b
        full((1, C)), full((1, C)),                     # ln2 gamma/beta
        full((C, H4)), full((1, H4)),                   # ffn W1, b1
        full((H4, C)), full((1, C)),                    # ffn W2, b2
    ]
    out_spec = pl.BlockSpec((BB, T, C), lambda b: (b, 0, 0))

    kernel = functools.partial(block_kernel, num_heads=num_heads,
                               approx_gelu=approx_gelu)

    return pl.pallas_call(
        kernel,
        out_shape=jax.ShapeDtypeStruct((B, T, C), jnp.float32),
        grid_spec=pltpu.PrefetchScalarGridSpec(
            num_scalar_prefetch=0,
            grid=(B // BB,),
            in_specs=in_specs,
            out_specs=out_spec,
        ),
        compiler_params=pltpu.CompilerParams(
            dimension_semantics=("parallel",),
            # explicit scoped-VMEM ceiling: v5e default is only 16 MiB, v6e/v7x
            # 32 MiB; 48 MiB fits every generation (v7x physical = 64 MiB).
            vmem_limit_bytes=48 * 1024 * 1024),
    )(x, g1, b1, wqkv, wp_c, bp, g2, b2, w1_c, bf1, w2_c, bf2)


def make_params(key, C=N_EMBD):
    H4 = 4 * C
    ks = jax.random.split(key, 10)
    s = 0.02
    return (
        jnp.ones((1, C), jnp.float32),                               # ln1 gamma
        jnp.zeros((1, C), jnp.float32),                              # ln1 beta
        s * jax.random.normal(ks[0], (C, C), jnp.float32),           # Wq (heads in col blocks)
        s * jax.random.normal(ks[1], (C, C), jnp.float32),           # Wk
        s * jax.random.normal(ks[2], (C, C), jnp.float32),           # Wv
        s * jax.random.normal(ks[3], (C, C), jnp.float32),           # proj W
        s * jax.random.normal(ks[4], (1, C), jnp.float32),           # proj b
        jnp.ones((1, C), jnp.float32),                               # ln2 gamma
        jnp.zeros((1, C), jnp.float32),                              # ln2 beta
        s * jax.random.normal(ks[5], (C, H4), jnp.float32),          # ffn W1
        s * jax.random.normal(ks[6], (1, H4), jnp.float32),          # ffn b1
        s * jax.random.normal(ks[7], (H4, C), jnp.float32),          # ffn W2
        s * jax.random.normal(ks[8], (1, C), jnp.float32),           # ffn b2
    )


def block_reference(x, params, *, num_heads=NUM_HEADS):
    """Pure-JAX reference mirroring the PyTorch forward (eval mode)."""
    (g1, b1, wq, wk, wv, wp, bp, g2, b2, w1, bf1, w2, bf2) = params
    B, T, C = x.shape
    hs = C // num_heads

    xn = _layer_norm(x, g1[0], b1[0])
    q = xn @ wq
    k = xn @ wk
    v = xn @ wv
    outs = []
    for h in range(num_heads):
        qh = q[..., h * hs:(h + 1) * hs]
        kh = k[..., h * hs:(h + 1) * hs]
        vh = v[..., h * hs:(h + 1) * hs]
        s = jnp.einsum('btd,bsd->bts', qh, kh) * (C ** -0.5)
        p = jax.nn.softmax(s, axis=-1)
        outs.append(jnp.einsum('bts,bsd->btd', p, vh))
    attn = jnp.concatenate(outs, axis=-1) @ wp + bp[0]
    x2 = x + attn
    y = _layer_norm(x2, g2[0], b2[0])
    h1 = y @ w1 + bf1[0]
    g = 0.5 * h1 * (1.0 + jax.lax.erf(h1 / math.sqrt(2.0)))
    return y + (g @ w2 + bf2[0])


if __name__ == "__main__":
    key = jax.random.PRNGKey(0)
    kx, kp = jax.random.split(key)

    B, T, C = 2, 8, N_EMBD
    x = jax.random.normal(kx, (B, T, C), jnp.float32)
    params = make_params(kp, C)

    ref = block_reference(x, params, num_heads=NUM_HEADS)

    # f32 matmul operands: tight check (only the approx softmax reciprocal differs).
    out_f32 = jax.block_until_ready(
        block_forward(x, params, num_heads=NUM_HEADS, matmul_dtype=jnp.float32))
    assert out_f32.shape == (B, T, C)
    assert jnp.allclose(out_f32, ref, atol=5e-3, rtol=5e-3), "f32 mismatch vs reference"

    # Default path: bf16 matmul operands (native MXU), f32 accumulation / LN /
    # softmax / GELU / residuals: loose tolerance.
    out_bf16 = jax.block_until_ready(block_forward(x, params, num_heads=NUM_HEADS))
    assert out_bf16.shape == (B, T, C)
    assert jnp.allclose(out_bf16, ref, atol=5e-2, rtol=5e-2), "bf16 mismatch vs reference"

    print("KERNEL_OK")
</pallas_src>

<mosaic_0001>
module attributes {stable_mosaic.version = 11 : i64} {
  func.func @block_kernel(%arg0: i32, %arg1: memref<1x8x128xf32, #tpu.memory_space<vmem>>, %arg2: memref<1x128xf32, #tpu.memory_space<vmem>>, %arg3: memref<1x128xf32, #tpu.memory_space<vmem>>, %arg4: memref<128x384xf32, #tpu.memory_space<vmem>>, %arg5: memref<128x128xf32, #tpu.memory_space<vmem>>, %arg6: memref<1x128xf32, #tpu.memory_space<vmem>>, %arg7: memref<1x128xf32, #tpu.memory_space<vmem>>, %arg8: memref<1x128xf32, #tpu.memory_space<vmem>>, %arg9: memref<128x512xf32, #tpu.memory_space<vmem>>, %arg10: memref<1x512xf32, #tpu.memory_space<vmem>>, %arg11: memref<512x128xf32, #tpu.memory_space<vmem>>, %arg12: memref<1x128xf32, #tpu.memory_space<vmem>>, %arg13: memref<1x8x128xf32, #tpu.memory_space<vmem>>) attributes {dimension_semantics = [#tpu.dimension_semantics<parallel>], iteration_bounds = array<i64: 2>, scalar_prefetch = 0 : i64, scratch_operands = 0 : i64, tpu.core_type = #tpu.core_type<tc>, window_params = [{transform_indices = @transform_0, window_bounds = array<i64: 1, 8, 128>}, {pipeline_mode = #tpu.pipeline_mode<synchronous>, transform_indices = @transform_1, window_bounds = array<i64: 1, 128>}, {pipeline_mode = #tpu.pipeline_mode<synchronous>, transform_indices = @transform_2, window_bounds = array<i64: 1, 128>}, {pipeline_mode = #tpu.pipeline_mode<synchronous>, transform_indices = @transform_3, window_bounds = array<i64: 128, 384>}, {pipeline_mode = #tpu.pipeline_mode<synchronous>, transform_indices = @transform_4, window_bounds = array<i64: 128, 128>}, {pipeline_mode = #tpu.pipeline_mode<synchronous>, transform_indices = @transform_5, window_bounds = array<i64: 1, 128>}, {pipeline_mode = #tpu.pipeline_mode<synchronous>, transform_indices = @transform_6, window_bounds = array<i64: 1, 128>}, {pipeline_mode = #tpu.pipeline_mode<synchronous>, transform_indices = @transform_7, window_bounds = array<i64: 1, 128>}, {pipeline_mode = #tpu.pipeline_mode<synchronous>, transform_indices = @transform_8, window_bounds = array<i64: 128, 512>}, {pipeline_mode = #tpu.pipeline_mode<synchronous>, transform_indices = @transform_9, window_bounds = array<i64: 1, 512>}, {pipeline_mode = #tpu.pipeline_mode<synchronous>, transform_indices = @transform_10, window_bounds = array<i64: 512, 128>}, {pipeline_mode = #tpu.pipeline_mode<synchronous>, transform_indices = @transform_11, window_bounds = array<i64: 1, 128>}, {transform_indices = @transform_12, window_bounds = array<i64: 1, 8, 128>}]} {
    %c0 = arith.constant 0 : index
    %c0_0 = arith.constant 0 : index
    %c0_1 = arith.constant 0 : index
    %0 = vector.load %arg1[%c0, %c0_0, %c0_1] : memref<1x8x128xf32, #tpu.memory_space<vmem>>, vector<1x8x128xf32>
    %1 = vector.shape_cast %0 : vector<1x8x128xf32> to vector<8x128xf32>
    %c0_2 = arith.constant 0 : index
    %c0_3 = arith.constant 0 : index
    %2 = vector.load %arg2[%c0_2, %c0_3] : memref<1x128xf32, #tpu.memory_space<vmem>>, vector<1x128xf32>
    %3 = vector.shape_cast %2 : vector<1x128xf32> to vector<128xf32>
    %c0_4 = arith.constant 0 : index
    %c0_5 = arith.constant 0 : index
    %4 = vector.load %arg3[%c0_4, %c0_5] : memref<1x128xf32, #tpu.memory_space<vmem>>, vector<1x128xf32>
    %5 = vector.shape_cast %4 : vector<1x128xf32> to vector<128xf32>
    %cst = arith.constant dense<0.000000e+00> : vector<8xf32>
    %6 = vector.multi_reduction <add>, %1, %cst [1] : vector<8x128xf32> to vector<8xf32>
    %7 = vector.shape_cast %6 : vector<8xf32> to vector<8x1xf32>
    %cst_6 = arith.constant 1.280000e+02 : f32
    %8 = vector.broadcast %cst_6 : f32 to vector<8x1xf32>
    %9 = arith.divf %7, %8 : vector<8x1xf32>
    %10 = vector.broadcast %9 : vector<8x1xf32> to vector<8x128xf32>
    %11 = arith.subf %1, %10 : vector<8x128xf32>
    %12 = arith.mulf %11, %11 : vector<8x128xf32>
    %cst_7 = arith.constant dense<0.000000e+00> : vector<8xf32>
    %13 = vector.multi_reduction <add>, %12, %cst_7 [1] : vector<8x128xf32> to vector<8xf32>
    %14 = vector.shape_cast %13 : vector<8xf32> to vector<8x1xf32>
    %cst_8 = arith.constant 1.280000e+02 : f32
    %15 = vector.broadcast %cst_8 : f32 to vector<8x1xf32>
    %16 = arith.divf %14, %15 : vector<8x1xf32>
    %17 = vector.broadcast %9 : vector<8x1xf32> to vector<8x128xf32>
    %18 = arith.subf %1, %17 : vector<8x128xf32>
    %cst_9 = arith.constant 9.99999974E-6 : f32
    %19 = vector.broadcast %cst_9 : f32 to vector<8x1xf32>
    %20 = arith.addf %16, %19 : vector<8x1xf32>
    %21 = math.rsqrt %20 : vector<8x1xf32>
    %22 = vector.broadcast %21 : vector<8x1xf32> to vector<8x128xf32>
    %23 = arith.mulf %18, %22 : vector<8x128xf32>
    %24 = vector.shape_cast %3 : vector<128xf32> to vector<1x128xf32>
    %25 = vector.broadcast %24 : vector<1x128xf32> to vector<8x128xf32>
    %26 = arith.mulf %23, %25 : vector<8x128xf32>
    %27 = vector.shape_cast %5 : vector<128xf32> to vector<1x128xf32>
    %28 = vector.broadcast %27 : vector<1x128xf32> to vector<8x128xf32>
    %29 = arith.addf %26, %28 : vector<8x128xf32>
    %c0_10 = arith.constant 0 : index
    %c0_11 = arith.constant 0 : index
    %30 = vector.load %arg4[%c0_10, %c0_11] : memref<128x384xf32, #tpu.memory_space<vmem>>, vector<128x384xf32>
    %cst_12 = arith.constant dense<0.000000e+00> : vector<8x384xf32>
    %31 = tpu.matmul %29, %30, %cst_12 {dimension_numbers = #tpu.dot_dimension_numbers<[1], [0], [0], [1], [0, 0, 1, 1], [], []>} : vector<8x128xf32>, vector<128x384xf32>, vector<8x384xf32> -> vector<8x384xf32>
    %32 = vector.extract_strided_slice %31 {offsets = [0, 0], sizes = [8, 16], strides = [1, 1]} : vector<8x384xf32> to vector<8x16xf32>
    %33 = vector.shape_cast %32 : vector<8x16xf32> to vector<1x8x16xf32>
    %34 = vector.extract_strided_slice %31 {offsets = [0, 128], sizes = [8, 16], strides = [1, 1]} : vector<8x384xf32> to vector<8x16xf32>
    %35 = vector.shape_cast %34 : vector<8x16xf32> to vector<1x8x16xf32>
    %36 = vector.extract_strided_slice %31 {offsets = [0, 256], sizes = [8, 16], strides = [1, 1]} : vector<8x384xf32> to vector<8x16xf32>
    %37 = vector.shape_cast %36 : vector<8x16xf32> to vector<1x8x16xf32>
    "tpu.trace_start"() <{level = 10 : i32, message = "btd,bsd->bts"}> : () -> ()
    %cst_13 = arith.constant dense<0.000000e+00> : vector<1x8x8xf32>
    %38 = tpu.matmul %33, %35, %cst_13 {dimension_numbers = #tpu.dot_dimension_numbers<[2], [2], [1], [1], [0, 0, 0, 1, 1, 1], [0], [0]>} : vector<1x8x16xf32>, vector<1x8x16xf32>, vector<1x8x8xf32> -> vector<1x8x8xf32>
    "tpu.trace_stop"() : () -> ()
    %cst_14 = arith.constant dense<0xFF800000> : vector<1x8xf32>
    %39 = vector.multi_reduction <maximumf>, %38, %cst_14 [2] : vector<1x8x8xf32> to vector<1x8xf32>
    %40 = vector.shape_cast %39 : vector<1x8xf32> to vector<1x8x1xf32>
    %41 = vector.broadcast %40 : vector<1x8x1xf32> to vector<1x8x8xf32>
    %42 = arith.subf %38, %41 : vector<1x8x8xf32>
    %43 = math.exp %42 : vector<1x8x8xf32>
    %cst_15 = arith.constant dense<0.000000e+00> : vector<1x8xf32>
    %44 = vector.multi_reduction <add>, %43, %cst_15 [2] : vector<1x8x8xf32> to vector<1x8xf32>
    %45 = vector.shape_cast %44 : vector<1x8xf32> to vector<1x8x1xf32>
    "tpu.trace_start"() <{level = 10 : i32, message = "bts,bsd->btd"}> : () -> ()
    %cst_16 = arith.constant dense<0.000000e+00> : vector<1x8x16xf32>
    %46 = tpu.matmul %43, %37, %cst_16 {dimension_numbers = #tpu.dot_dimension_numbers<[2], [1], [1], [2], [0, 0, 0, 1, 1, 2], [0], [0]>} : vector<1x8x8xf32>, vector<1x8x16xf32>, vector<1x8x16xf32> -> vector<1x8x16xf32>
    "tpu.trace_stop"() : () -> ()
    %47 = tpu.reciprocal %45 {approx = true} : vector<1x8x1xf32> -> vector<1x8x1xf32>
    %48 = vector.broadcast %47 : vector<1x8x1xf32> to vector<1x8x16xf32>
    %49 = arith.mulf %46, %48 : vector<1x8x16xf32>
    %50 = vector.shape_cast %49 : vector<1x8x16xf32> to vector<8x16xf32>
    %51 = vector.extract_strided_slice %31 {offsets = [0, 16], sizes = [8, 16], strides = [1, 1]} : vector<8x384xf32> to vector<8x16xf32>
    %52 = vector.shape_cast %51 : vector<8x16xf32> to vector<1x8x16xf32>
    %53 = vector.extract_strided_slice %31 {offsets = [0, 144], sizes = [8, 16], strides = [1, 1]} : vector<8x384xf32> to vector<8x16xf32>
    %54 = vector.shape_cast %53 : vector<8x16xf32> to vector<1x8x16xf32>
    %55 = vector.extract_strided_slice %31 {offsets = [0, 272], sizes = [8, 16], strides = [1, 1]} : vector<8x384xf32> to vector<8x16xf32>
    %56 = vector.shape_cast %55 : vector<8x16xf32> to vector<1x8x16xf32>
    "tpu.trace_start"() <{level = 10 : i32, message = "btd,bsd->bts"}> : () -> ()
    %cst_17 = arith.constant dense<0.000000e+00> : vector<1x8x8xf32>
    %57 = tpu.matmul %52, %54, %cst_17 {dimension_numbers = #tpu.dot_dimension_numbers<[2], [2], [1], [1], [0, 0, 0, 1, 1, 1], [0], [0]>} : vector<1x8x16xf32>, vector<1x8x16xf32>, vector<1x8x8xf32> -> vector<1x8x8xf32>
    "tpu.trace_stop"() : () -> ()
    %cst_18 = arith.constant dense<0xFF800000> : vector<1x8xf32>
    %58 = vector.multi_reduction <maximumf>, %57, %cst_18 [2] : vector<1x8x8xf32> to vector<1x8xf32>
    %59 = vector.shape_cast %58 : vector<1x8xf32> to vector<1x8x1xf32>
    %60 = vector.broadcast %59 : vector<1x8x1xf32> to vector<1x8x8xf32>
    %61 = arith.subf %57, %60 : vector<1x8x8xf32>
    %62 = math.exp %61 : vector<1x8x8xf32>
    %cst_19 = arith.constant dense<0.000000e+00> : vector<1x8xf32>
    %63 = vector.multi_reduction <add>, %62, %cst_19 [2] : vector<1x8x8xf32> to vector<1x8xf32>
    %64 = vector.shape_cast %63 : vector<1x8xf32> to vector<1x8x1xf32>
    "tpu.trace_start"() <{level = 10 : i32, message = "bts,bsd->btd"}> : () -> ()
    %cst_20 = arith.constant dense<0.000000e+00> : vector<1x8x16xf32>
    %65 = tpu.matmul %62, %56, %cst_20 {dimension_numbers = #tpu.dot_dimension_numbers<[2], [1], [1], [2], [0, 0, 0, 1, 1, 2], [0], [0]>} : vector<1x8x8xf32>, vector<1x8x16xf32>, vector<1x8x16xf32> -> vector<1x8x16xf32>
    "tpu.trace_stop"() : () -> ()
    %66 = tpu.reciprocal %64 {approx = true} : vector<1x8x1xf32> -> vector<1x8x1xf32>
    %67 = vector.broadcast %66 : vector<1x8x1xf32> to vector<1x8x16xf32>
    %68 = arith.mulf %65, %67 : vector<1x8x16xf32>
    %69 = vector.shape_cast %68 : vector<1x8x16xf32> to vector<8x16xf32>
    %70 = vector.extract_strided_slice %31 {offsets = [0, 32], sizes = [8, 16], strides = [1, 1]} : vector<8x384xf32> to vector<8x16xf32>
    %71 = vector.shape_cast %70 : vector<8x16xf32> to vector<1x8x16xf32>
    %72 = vector.extract_strided_slice %31 {offsets = [0, 160], sizes = [8, 16], strides = [1, 1]} : vector<8x384xf32> to vector<8x16xf32>
    %73 = vector.shape_cast %72 : vector<8x16xf32> to vector<1x8x16xf32>
    %74 = vector.extract_strided_slice %31 {offsets = [0, 288], sizes = [8, 16], strides = [1, 1]} : vector<8x384xf32> to vector<8x16xf32>
    %75 = vector.shape_cast %74 : vector<8x16xf32> to vector<1x8x16xf32>
    "tpu.trace_start"() <{level = 10 : i32, message = "btd,bsd->bts"}> : () -> ()
    %cst_21 = arith.constant dense<0.000000e+00> : vector<1x8x8xf32>
    %76 = tpu.matmul %71, %73, %cst_21 {dimension_numbers = #tpu.dot_dimension_numbers<[2], [2], [1], [1], [0, 0, 0, 1, 1, 1], [0], [0]>} : vector<1x8x16xf32>, vector<1x8x16xf32>, vector<1x8x8xf32> -> vector<1x8x8xf32>
    "tpu.trace_stop"() : () -> ()
    %cst_22 = arith.constant dense<0xFF800000> : vector<1x8xf32>
    %77 = vector.multi_reduction <maximumf>, %76, %cst_22 [2] : vector<1x8x8xf32> to vector<1x8xf32>
    %78 = vector.shape_cast %77 : vector<1x8xf32> to vector<1x8x1xf32>
    %79 = vector.broadcast %78 : vector<1x8x1xf32> to vector<1x8x8xf32>
    %80 = arith.subf %76, %79 : vector<1x8x8xf32>
    %81 = math.exp %80 : vector<1x8x8xf32>
    %cst_23 = arith.constant dense<0.000000e+00> : vector<1x8xf32>
    %82 = vector.multi_reduction <add>, %81, %cst_23 [2] : vector<1x8x8xf32> to vector<1x8xf32>
    %83 = vector.shape_cast %82 : vector<1x8xf32> to vector<1x8x1xf32>
    "tpu.trace_start"() <{level = 10 : i32, message = "bts,bsd->btd"}> : () -> ()
    %cst_24 = arith.constant dense<0.000000e+00> : vector<1x8x16xf32>
    %84 = tpu.matmul %81, %75, %cst_24 {dimension_numbers = #tpu.dot_dimension_numbers<[2], [1], [1], [2], [0, 0, 0, 1, 1, 2], [0], [0]>} : vector<1x8x8xf32>, vector<1x8x16xf32>, vector<1x8x16xf32> -> vector<1x8x16xf32>
    "tpu.trace_stop"() : () -> ()
    %85 = tpu.reciprocal %83 {approx = true} : vector<1x8x1xf32> -> vector<1x8x1xf32>
    %86 = vector.broadcast %85 : vector<1x8x1xf32> to vector<1x8x16xf32>
    %87 = arith.mulf %84, %86 : vector<1x8x16xf32>
    %88 = vector.shape_cast %87 : vector<1x8x16xf32> to vector<8x16xf32>
    %89 = vector.extract_strided_slice %31 {offsets = [0, 48], sizes = [8, 16], strides = [1, 1]} : vector<8x384xf32> to vector<8x16xf32>
    %90 = vector.shape_cast %89 : vector<8x16xf32> to vector<1x8x16xf32>
    %91 = vector.extract_strided_slice %31 {offsets = [0, 176], sizes = [8, 16], strides = [1, 1]} : vector<8x384xf32> to vector<8x16xf32>
    %92 = vector.shape_cast %91 : vector<8x16xf32> to vector<1x8x16xf32>
    %93 = vector.extract_strided_slice %31 {offsets = [0, 304], sizes = [8, 16], strides = [1, 1]} : vector<8x384xf32> to vector<8x16xf32>
    %94 = vector.shape_cast %93 : vector<8x16xf32> to vector<1x8x16xf32>
    "tpu.trace_start"() <{level = 10 : i32, message = "btd,bsd->bts"}> : () -> ()
    %cst_25 = arith.constant dense<0.000000e+00> : vector<1x8x8xf32>
    %95 = tpu.matmul %90, %92, %cst_25 {dimension_numbers = #tpu.dot_dimension_numbers<[2], [2], [1], [1], [0, 0, 0, 1, 1, 1], [0], [0]>} : vector<1x8x16xf32>, vector<1x8x16xf32>, vector<1x8x8xf32> -> vector<1x8x8xf32>
    "tpu.trace_stop"() : () -> ()
    %cst_26 = arith.constant dense<0xFF800000> : vector<1x8xf32>
    %96 = vector.multi_reduction <maximumf>, %95, %cst_26 [2] : vector<1x8x8xf32> to vector<1x8xf32>
    %97 = vector.shape_cast %96 : vector<1x8xf32> to vector<1x8x1xf32>
    %98 = vector.broadcast %97 : vector<1x8x1xf32> to vector<1x8x8xf32>
    %99 = arith.subf %95, %98 : vector<1x8x8xf32>
    %100 = math.exp %99 : vector<1x8x8xf32>
    %cst_27 = arith.constant dense<0.000000e+00> : vector<1x8xf32>
    %101 = vector.multi_reduction <add>, %100, %cst_27 [2] : vector<1x8x8xf32> to vector<1x8xf32>
    %102 = vector.shape_cast %101 : vector<1x8xf32> to vector<1x8x1xf32>
    "tpu.trace_start"() <{level = 10 : i32, message = "bts,bsd->btd"}> : () -> ()
    %cst_28 = arith.constant dense<0.000000e+00> : vector<1x8x16xf32>
    %103 = tpu.matmul %100, %94, %cst_28 {dimension_numbers = #tpu.dot_dimension_numbers<[2], [1], [1], [2], [0, 0, 0, 1, 1, 2], [0], [0]>} : vector<1x8x8xf32>, vector<1x8x16xf32>, vector<1x8x16xf32> -> vector<1x8x16xf32>
    "tpu.trace_stop"() : () -> ()
    %104 = tpu.reciprocal %102 {approx = true} : vector<1x8x1xf32> -> vector<1x8x1xf32>
    %105 = vector.broadcast %104 : vector<1x8x1xf32> to vector<1x8x16xf32>
    %106 = arith.mulf %103, %105 : vector<1x8x16xf32>
    %107 = vector.shape_cast %106 : vector<1x8x16xf32> to vector<8x16xf32>
    %108 = vector.extract_strided_slice %31 {offsets = [0, 64], sizes = [8, 16], strides = [1, 1]} : vector<8x384xf32> to vector<8x16xf32>
    %109 = vector.shape_cast %108 : vector<8x16xf32> to vector<1x8x16xf32>
    %110 = vector.extract_strided_slice %31 {offsets = [0, 192], sizes = [8, 16], strides = [1, 1]} : vector<8x384xf32> to vector<8x16xf32>
    %111 = vector.shape_cast %110 : vector<8x16xf32> to vector<1x8x16xf32>
    %112 = vector.extract_strided_slice %31 {offsets = [0, 320], sizes = [8, 16], strides = [1, 1]} : vector<8x384xf32> to vector<8x16xf32>
    %113 = vector.shape_cast %112 : vector<8x16xf32> to vector<1x8x16xf32>
    "tpu.trace_start"() <{level = 10 : i32, message = "btd,bsd->bts"}> : () -> ()
    %cst_29 = arith.constant dense<0.000000e+00> : vector<1x8x8xf32>
    %114 = tpu.matmul %109, %111, %cst_29 {dimension_numbers = #tpu.dot_dimension_numbers<[2], [2], [1], [1], [0, 0, 0, 1, 1, 1], [0], [0]>} : vector<1x8x16xf32>, vector<1x8x16xf32>, vector<1x8x8xf32> -> vector<1x8x8xf32>
    "tpu.trace_stop"() : () -> ()
    %cst_30 = arith.constant dense<0xFF800000> : vector<1x8xf32>
    %115 = vector.multi_reduction <maximumf>, %114, %cst_30 [2] : vector<1x8x8xf32> to vector<1x8xf32>
    %116 = vector.shape_cast %115 : vector<1x8xf32> to vector<1x8x1xf32>
    %117 = vector.broadcast %116 : vector<1x8x1xf32> to vector<1x8x8xf32>
    %118 = arith.subf %114, %117 : vector<1x8x8xf32>
    %119 = math.exp %118 : vector<1x8x8xf32>
    %cst_31 = arith.constant dense<0.000000e+00> : vector<1x8xf32>
    %120 = vector.multi_reduction <add>, %119, %cst_31 [2] : vector<1x8x8xf32> to vector<1x8xf32>
    %121 = vector.shape_cast %120 : vector<1x8xf32> to vector<1x8x1xf32>
    "tpu.trace_start"() <{level = 10 : i32, message = "bts,bsd->btd"}> : () -> ()
    %cst_32 = arith.constant dense<0.000000e+00> : vector<1x8x16xf32>
    %122 = tpu.matmul %119, %113, %cst_32 {dimension_numbers = #tpu.dot_dimension_numbers<[2], [1], [1], [2], [0, 0, 0, 1, 1, 2], [0], [0]>} : vector<1x8x8xf32>, vector<1x8x16xf32>, vector<1x8x16xf32> -> vector<1x8x16xf32>
    "tpu.trace_stop"() : () -> ()
    %123 = tpu.reciprocal %121 {approx = true} : vector<1x8x1xf32> -> vector<1x8x1xf32>
    %124 = vector.broadcast %123 : vector<1x8x1xf32> to vector<1x8x16xf32>
    %125 = arith.mulf %122, %124 : vector<1x8x16xf32>
    %126 = vector.shape_cast %125 : vector<1x8x16xf32> to vector<8x16xf32>
    %127 = vector.extract_strided_slice %31 {offsets = [0, 80], sizes = [8, 16], strides = [1, 1]} : vector<8x384xf32> to vector<8x16xf32>
    %128 = vector.shape_cast %127 : vector<8x16xf32> to vector<1x8x16xf32>
    %129 = vector.extract_strided_slice %31 {offsets = [0, 208], sizes = [8, 16], strides = [1, 1]} : vector<8x384xf32> to vector<8x16xf32>
    %130 = vector.shape_cast %129 : vector<8x16xf32> to vector<1x8x16xf32>
    %131 = vector.extract_strided_slice %31 {offsets = [0, 336], sizes = [8, 16], strides = [1, 1]} : vector<8x384xf32> to vector<8x16xf32>
    %132 = vector.shape_cast %131 : vector<8x16xf32> to vector<1x8x16xf32>
    "tpu.trace_start"() <{level = 10 : i32, message = "btd,bsd->bts"}> : () -> ()
    %cst_33 = arith.constant dense<0.000000e+00> : vector<1x8x8xf32>
    %133 = tpu.matmul %128, %130, %cst_33 {dimension_numbers = #tpu.dot_dimension_numbers<[2], [2], [1], [1], [0, 0, 0, 1, 1, 1], [0], [0]>} : vector<1x8x16xf32>, vector<1x8x16xf32>, vector<1x8x8xf32> -> vector<1x8x8xf32>
    "tpu.trace_stop"() : () -> ()
    %cst_34 = arith.constant dense<0xFF800000> : vector<1x8xf32>
    %134 = vector.multi_reduction <maximumf>, %133, %cst_34 [2] : vector<1x8x8xf32> to vector<1x8xf32>
    %135 = vector.shape_cast %134 : vector<1x8xf32> to vector<1x8x1xf32>
    %136 = vector.broadcast %135 : vector<1x8x1xf32> to vector<1x8x8xf32>
    %137 = arith.subf %133, %136 : vector<1x8x8xf32>
    %138 = math.exp %137 : vector<1x8x8xf32>
    %cst_35 = arith.constant dense<0.000000e+00> : vector<1x8xf32>
    %139 = vector.multi_reduction <add>, %138, %cst_35 [2] : vector<1x8x8xf32> to vector<1x8xf32>
    %140 = vector.shape_cast %139 : vector<1x8xf32> to vector<1x8x1xf32>
    "tpu.trace_start"() <{level = 10 : i32, message = "bts,bsd->btd"}> : () -> ()
    %cst_36 = arith.constant dense<0.000000e+00> : vector<1x8x16xf32>
    %141 = tpu.matmul %138, %132, %cst_36 {dimension_numbers = #tpu.dot_dimension_numbers<[2], [1], [1], [2], [0, 0, 0, 1, 1, 2], [0], [0]>} : vector<1x8x8xf32>, vector<1x8x16xf32>, vector<1x8x16xf32> -> vector<1x8x16xf32>
    "tpu.trace_stop"() : () -> ()
    %142 = tpu.reciprocal %140 {approx = true} : vector<1x8x1xf32> -> vector<1x8x1xf32>
    %143 = vector.broadcast %142 : vector<1x8x1xf32> to vector<1x8x16xf32>
    %144 = arith.mulf %141, %143 : vector<1x8x16xf32>
    %145 = vector.shape_cast %144 : vector<1x8x16xf32> to vector<8x16xf32>
    %146 = vector.extract_strided_slice %31 {offsets = [0, 96], sizes = [8, 16], strides = [1, 1]} : vector<8x384xf32> to vector<8x16xf32>
    %147 = vector.shape_cast %146 : vector<8x16xf32> to vector<1x8x16xf32>
    %148 = vector.extract_strided_slice %31 {offsets = [0, 224], sizes = [8, 16], strides = [1, 1]} : vector<8x384xf32> to vector<8x16xf32>
    %149 = vector.shape_cast %148 : vector<8x16xf32> to vector<1x8x16xf32>
    %150 = vector.extract_strided_slice %31 {offsets = [0, 352], sizes = [8, 16], strides = [1, 1]} : vector<8x384xf32> to vector<8x16xf32>
    %151 = vector.shape_cast %150 : vector<8x16xf32> to vector<1x8x16xf32>
    "tpu.trace_start"() <{level = 10 : i32, message = "btd,bsd->bts"}> : () -> ()
    %cst_37 = arith.constant dense<0.000000e+00> : vector<1x8x8xf32>
    %152 = tpu.matmul %147, %149, %cst_37 {dimension_numbers = #tpu.dot_dimension_numbers<[2], [2], [1], [1], [0, 0, 0, 1, 1, 1], [0], [0]>} : vector<1x8x16xf32>, vector<1x8x16xf32>, vector<1x8x8xf32> -> vector<1x8x8xf32>
    "tpu.trace_stop"() : () -> ()
    %cst_38 = arith.constant dense<0xFF800000> : vector<1x8xf32>
    %153 = vector.multi_reduction <maximumf>, %152, %cst_38 [2] : vector<1x8x8xf32> to vector<1x8xf32>
    %154 = vector.shape_cast %153 : vector<1x8xf32> to vector<1x8x1xf32>
    %155 = vector.broadcast %154 : vector<1x8x1xf32> to vector<1x8x8xf32>
    %156 = arith.subf %152, %155 : vector<1x8x8xf32>
    %157 = math.exp %156 : vector<1x8x8xf32>
    %cst_39 = arith.constant dense<0.000000e+00> : vector<1x8xf32>
    %158 = vector.multi_reduction <add>, %157, %cst_39 [2] : vector<1x8x8xf32> to vector<1x8xf32>
    %159 = vector.shape_cast %158 : vector<1x8xf32> to vector<1x8x1xf32>
    "tpu.trace_start"() <{level = 10 : i32, message = "bts,bsd->btd"}> : () -> ()
    %cst_40 = arith.constant dense<0.000000e+00> : vector<1x8x16xf32>
    %160 = tpu.matmul %157, %151, %cst_40 {dimension_numbers = #tpu.dot_dimension_numbers<[2], [1], [1], [2], [0, 0, 0, 1, 1, 2], [0], [0]>} : vector<1x8x8xf32>, vector<1x8x16xf32>, vector<1x8x16xf32> -> vector<1x8x16xf32>
    "tpu.trace_stop"() : () -> ()
    %161 = tpu.reciprocal %159 {approx = true} : vector<1x8x1xf32> -> vector<1x8x1xf32>
    %162 = vector.broadcast %161 : vector<1x8x1xf32> to vector<1x8x16xf32>
    %163 = arith.mulf %160, %162 : vector<1x8x16xf32>
    %164 = vector.shape_cast %163 : vector<1x8x16xf32> to vector<8x16xf32>
    %165 = vector.extract_strided_slice %31 {offsets = [0, 112], sizes = [8, 16], strides = [1, 1]} : vector<8x384xf32> to vector<8x16xf32>
    %166 = vector.shape_cast %165 : vector<8x16xf32> to vector<1x8x16xf32>
    %167 = vector.extract_strided_slice %31 {offsets = [0, 240], sizes = [8, 16], strides = [1, 1]} : vector<8x384xf32> to vector<8x16xf32>
    %168 = vector.shape_cast %167 : vector<8x16xf32> to vector<1x8x16xf32>
    %169 = vector.extract_strided_slice %31 {offsets = [0, 368], sizes = [8, 16], strides = [1, 1]} : vector<8x384xf32> to vector<8x16xf32>
    %170 = vector.shape_cast %169 : vector<8x16xf32> to vector<1x8x16xf32>
    "tpu.trace_start"() <{level = 10 : i32, message = "btd,bsd->bts"}> : () -> ()
    %cst_41 = arith.constant dense<0.000000e+00> : vector<1x8x8xf32>
    %171 = tpu.matmul %166, %168, %cst_41 {dimension_numbers = #tpu.dot_dimension_numbers<[2], [2], [1], [1], [0, 0, 0, 1, 1, 1], [0], [0]>} : vector<1x8x16xf32>, vector<1x8x16xf32>, vector<1x8x8xf32> -> vector<1x8x8xf32>
    "tpu.trace_stop"() : () -> ()
    %cst_42 = arith.constant dense<0xFF800000> : vector<1x8xf32>
    %172 = vector.multi_reduction <maximumf>, %171, %cst_42 [2] : vector<1x8x8xf32> to vector<1x8xf32>
    %173 = vector.shape_cast %172 : vector<1x8xf32> to vector<1x8x1xf32>
    %174 = vector.broadcast %173 : vector<1x8x1xf32> to vector<1x8x8xf32>
    %175 = arith.subf %171, %174 : vector<1x8x8xf32>
    %176 = math.exp %175 : vector<1x8x8xf32>
    %cst_43 = arith.constant dense<0.000000e+00> : vector<1x8xf32>
    %177 = vector.multi_reduction <add>, %176, %cst_43 [2] : vector<1x8x8xf32> to vector<1x8xf32>
    %178 = vector.shape_cast %177 : vector<1x8xf32> to vector<1x8x1xf32>
    "tpu.trace_start"() <{level = 10 : i32, message = "bts,bsd->btd"}> : () -> ()
    %cst_44 = arith.constant dense<0.000000e+00> : vector<1x8x16xf32>
    %179 = tpu.matmul %176, %170, %cst_44 {dimension_numbers = #tpu.dot_dimension_numbers<[2], [1], [1], [2], [0, 0, 0, 1, 1, 2], [0], [0]>} : vector<1x8x8xf32>, vector<1x8x16xf32>, vector<1x8x16xf32> -> vector<1x8x16xf32>
    "tpu.trace_stop"() : () -> ()
    %180 = tpu.reciprocal %178 {approx = true} : vector<1x8x1xf32> -> vector<1x8x1xf32>
    %181 = vector.broadcast %180 : vector<1x8x1xf32> to vector<1x8x16xf32>
    %182 = arith.mulf %179, %181 : vector<1x8x16xf32>
    %183 = vector.shape_cast %182 : vector<1x8x16xf32> to vector<8x16xf32>
    %184 = tpu.concatenate %50, %69, %88, %107, %126, %145, %164, %183 in 1 : vector<8x16xf32>, vector<8x16xf32>, vector<8x16xf32>, vector<8x16xf32>, vector<8x16xf32>, vector<8x16xf32>, vector<8x16xf32>, vector<8x16xf32> -> vector<8x128xf32>
    %c0_45 = arith.constant 0 : index
    %c0_46 = arith.constant 0 : index
    %185 = vector.load %arg5[%c0_45, %c0_46] : memref<128x128xf32, #tpu.memory_space<vmem>>, vector<128x128xf32>
    %cst_47 = arith.constant dense<0.000000e+00> : vector<8x128xf32>
    %186 = tpu.matmul %184, %185, %cst_47 {dimension_numbers = #tpu.dot_dimension_numbers<[1], [0], [0], [1], [0, 0, 1, 1], [], []>} : vector<8x128xf32>, vector<128x128xf32>, vector<8x128xf32> -> vector<8x128xf32>
    %c0_48 = arith.constant 0 : index
    %c0_49 = arith.constant 0 : index
    %187 = vector.load %arg6[%c0_48, %c0_49] : memref<1x128xf32, #tpu.memory_space<vmem>>, vector<1x128xf32>
    %188 = vector.shape_cast %187 : vector<1x128xf32> to vector<128xf32>
    %189 = vector.shape_cast %188 : vector<128xf32> to vector<1x128xf32>
    %190 = vector.broadcast %189 : vector<1x128xf32> to vector<8x128xf32>
    %191 = arith.addf %186, %190 : vector<8x128xf32>
    %192 = arith.addf %1, %191 : vector<8x128xf32>
    %c0_50 = arith.constant 0 : index
    %c0_51 = arith.constant 0 : index
    %193 = vector.load %arg7[%c0_50, %c0_51] : memref<1x128xf32, #tpu.memory_space<vmem>>, vector<1x128xf32>
    %194 = vector.shape_cast %193 : vector<1x128xf32> to vector<128xf32>
    %c0_52 = arith.constant 0 : index
    %c0_53 = arith.constant 0 : index
    %195 = vector.load %arg8[%c0_52, %c0_53] : memref<1x128xf32, #tpu.memory_space<vmem>>, vector<1x128xf32>
    %196 = vector.shape_cast %195 : vector<1x128xf32> to vector<128xf32>
    %cst_54 = arith.constant dense<0.000000e+00> : vector<8xf32>
    %197 = vector.multi_reduction <add>, %192, %cst_54 [1] : vector<8x128xf32> to vector<8xf32>
    %198 = vector.shape_cast %197 : vector<8xf32> to vector<8x1xf32>
    %cst_55 = arith.constant 1.280000e+02 : f32
    %199 = vector.broadcast %cst_55 : f32 to vector<8x1xf32>
    %200 = arith.divf %198, %199 : vector<8x1xf32>
    %201 = vector.broadcast %200 : vector<8x1xf32> to vector<8x128xf32>
    %202 = arith.subf %192, %201 : vector<8x128xf32>
    %203 = arith.mulf %202, %202 : vector<8x128xf32>
    %cst_56 = arith.constant dense<0.000000e+00> : vector<8xf32>
    %204 = vector.multi_reduction <add>, %203, %cst_56 [1] : vector<8x128xf32> to vector<8xf32>
    %205 = vector.shape_cast %204 : vector<8xf32> to vector<8x1xf32>
    %cst_57 = arith.constant 1.280000e+02 : f32
    %206 = vector.broadcast %cst_57 : f32 to vector<8x1xf32>
    %207 = arith.divf %205, %206 : vector<8x1xf32>
    %208 = vector.broadcast %200 : vector<8x1xf32> to vector<8x128xf32>
    %209 = arith.subf %192, %208 : vector<8x128xf32>
    %cst_58 = arith.constant 9.99999974E-6 : f32
    %210 = vector.broadcast %cst_58 : f32 to vector<8x1xf32>
    %211 = arith.addf %207, %210 : vector<8x1xf32>
    %212 = math.rsqrt %211 : vector<8x1xf32>
    %213 = vector.broadcast %212 : vector<8x1xf32> to vector<8x128xf32>
    %214 = arith.mulf %209, %213 : vector<8x128xf32>
    %215 = vector.shape_cast %194 : vector<128xf32> to vector<1x128xf32>
    %216 = vector.broadcast %215 : vector<1x128xf32> to vector<8x128xf32>
    %217 = arith.mulf %214, %216 : vector<8x128xf32>
    %218 = vector.shape_cast %196 : vector<128xf32> to vector<1x128xf32>
    %219 = vector.broadcast %218 : vector<1x128xf32> to vector<8x128xf32>
    %220 = arith.addf %217, %219 : vector<8x128xf32>
    %c0_59 = arith.constant 0 : index
    %c0_60 = arith.constant 0 : index
    %221 = vector.load %arg9[%c0_59, %c0_60] : memref<128x512xf32, #tpu.memory_space<vmem>>, vector<128x512xf32>
    %cst_61 = arith.constant dense<0.000000e+00> : vector<8x512xf32>
    %222 = tpu.matmul %220, %221, %cst_61 {dimension_numbers = #tpu.dot_dimension_numbers<[1], [0], [0], [1], [0, 0, 1, 1], [], []>} : vector<8x128xf32>, vector<128x512xf32>, vector<8x512xf32> -> vector<8x512xf32>
    %c0_62 = arith.constant 0 : index
    %c0_63 = arith.constant 0 : index
    %223 = vector.load %arg10[%c0_62, %c0_63] : memref<1x512xf32, #tpu.memory_space<vmem>>, vector<1x512xf32>
    %224 = vector.shape_cast %223 : vector<1x512xf32> to vector<512xf32>
    %225 = vector.shape_cast %224 : vector<512xf32> to vector<1x512xf32>
    %226 = vector.broadcast %225 : vector<1x512xf32> to vector<8x512xf32>
    %227 = arith.addf %222, %226 : vector<8x512xf32>
    %cst_64 = arith.constant 5.000000e-01 : f32
    %228 = vector.broadcast %cst_64 : f32 to vector<8x512xf32>
    %229 = arith.mulf %228, %227 : vector<8x512xf32>
    %cst_65 = arith.constant 0.707106769 : f32
    %230 = vector.broadcast %cst_65 : f32 to vector<8x512xf32>
    %231 = arith.mulf %227, %230 : vector<8x512xf32>
    %232 = math.erf %231 : vector<8x512xf32>
    %cst_66 = arith.constant 1.000000e+00 : f32
    %233 = vector.broadcast %cst_66 : f32 to vector<8x512xf32>
    %234 = arith.addf %233, %232 : vector<8x512xf32>
    %235 = arith.mulf %229, %234 : vector<8x512xf32>
    %c0_67 = arith.constant 0 : index
    %c0_68 = arith.constant 0 : index
    %236 = vector.load %arg11[%c0_67, %c0_68] : memref<512x128xf32, #tpu.memory_space<vmem>>, vector<512x128xf32>
    %cst_69 = arith.constant dense<0.000000e+00> : vector<8x128xf32>
    %237 = tpu.matmul %235, %236, %cst_69 {dimension_numbers = #tpu.dot_dimension_numbers<[1], [0], [0], [1], [0, 0, 1, 1], [], []>} : vector<8x512xf32>, vector<512x128xf32>, vector<8x128xf32> -> vector<8x128xf32>
    %c0_70 = arith.constant 0 : index
    %c0_71 = arith.constant 0 : index
    %238 = vector.load %arg12[%c0_70, %c0_71] : memref<1x128xf32, #tpu.memory_space<vmem>>, vector<1x128xf32>
    %239 = vector.shape_cast %238 : vector<1x128xf32> to vector<128xf32>
    %240 = vector.shape_cast %239 : vector<128xf32> to vector<1x128xf32>
    %241 = vector.broadcast %240 : vector<1x128xf32> to vector<8x128xf32>
    %242 = arith.addf %237, %241 : vector<8x128xf32>
    %243 = arith.addf %220, %242 : vector<8x128xf32>
    %244 = vector.shape_cast %243 : vector<8x128xf32> to vector<1x8x128xf32>
    %c0_72 = arith.constant 0 : index
    %c0_73 = arith.constant 0 : index
    %c0_74 = arith.constant 0 : index
    %245 = vector.load %arg13[%c0_72, %c0_73, %c0_74] : memref<1x8x128xf32, #tpu.memory_space<vmem>>, vector<1x8x128xf32>
    tpu.vector_store %arg13[%c0_72, %c0_73, %c0_74], %244 {strides = array<i32>} : memref<1x8x128xf32, #tpu.memory_space<vmem>>, vector<1x8x128xf32>,
    return
  }
  func.func @transform_0(%arg0: i32) -> (i32, i32, i32) {
    %c0_i32 = arith.constant 0 : i32
    %c0_i32_0 = arith.constant 0 : i32
    %c0_i32_1 = arith.constant 0 : i32
    return %arg0, %c0_i32, %c0_i32_0 : i32, i32, i32
  }
  func.func @transform_1(%arg0: i32) -> (i32, i32) {
    %c0_i32 = arith.constant 0 : i32
    %c0_i32_0 = arith.constant 0 : i32
    %c0_i32_1 = arith.constant 0 : i32
    return %c0_i32, %c0_i32_0 : i32, i32
  }
  func.func @transform_2(%arg0: i32) -> (i32, i32) {
    %c0_i32 = arith.constant 0 : i32
    %c0_i32_0 = arith.constant 0 : i32
    %c0_i32_1 = arith.constant 0 : i32
    return %c0_i32, %c0_i32_0 : i32, i32
  }
  func.func @transform_3(%arg0: i32) -> (i32, i32) {
    %c0_i32 = arith.constant 0 : i32
    %c0_i32_0 = arith.constant 0 : i32
    %c0_i32_1 = arith.constant 0 : i32
    return %c0_i32, %c0_i32_0 : i32, i32
  }
  func.func @transform_4(%arg0: i32) -> (i32, i32) {
    %c0_i32 = arith.constant 0 : i32
    %c0_i32_0 = arith.constant 0 : i32
    %c0_i32_1 = arith.constant 0 : i32
    return %c0_i32, %c0_i32_0 : i32, i32
  }
  func.func @transform_5(%arg0: i32) -> (i32, i32) {
    %c0_i32 = arith.constant 0 : i32
    %c0_i32_0 = arith.constant 0 : i32
    %c0_i32_1 = arith.constant 0 : i32
    return %c0_i32, %c0_i32_0 : i32, i32
  }
  func.func @transform_6(%arg0: i32) -> (i32, i32) {
    %c0_i32 = arith.constant 0 : i32
    %c0_i32_0 = arith.constant 0 : i32
    %c0_i32_1 = arith.constant 0 : i32
    return %c0_i32, %c0_i32_0 : i32, i32
  }
  func.func @transform_7(%arg0: i32) -> (i32, i32) {
    %c0_i32 = arith.constant 0 : i32
    %c0_i32_0 = arith.constant 0 : i32
    %c0_i32_1 = arith.constant 0 : i32
    return %c0_i32, %c0_i32_0 : i32, i32
  }
  func.func @transform_8(%arg0: i32) -> (i32, i32) {
    %c0_i32 = arith.constant 0 : i32
    %c0_i32_0 = arith.constant 0 : i32
    %c0_i32_1 = arith.constant 0 : i32
    return %c0_i32, %c0_i32_0 : i32, i32
  }
  func.func @transform_9(%arg0: i32) -> (i32, i32) {
    %c0_i32 = arith.constant 0 : i32
    %c0_i32_0 = arith.constant 0 : i32
    %c0_i32_1 = arith.constant 0 : i32
    return %c0_i32, %c0_i32_0 : i32, i32
  }
  func.func @transform_10(%arg0: i32) -> (i32, i32) {
    %c0_i32 = arith.constant 0 : i32
    %c0_i32_0 = arith.constant 0 : i32
    %c0_i32_1 = arith.constant 0 : i32
    return %c0_i32, %c0_i32_0 : i32, i32
  }
  func.func @transform_11(%arg0: i32) -> (i32, i32) {
    %c0_i32 = arith.constant 0 : i32
    %c0_i32_0 = arith.constant 0 : i32
    %c0_i32_1 = arith.constant 0 : i32
    return %c0_i32, %c0_i32_0 : i32, i32
  }
  func.func @transform_12(%arg0: i32) -> (i32, i32, i32) {
    %c0_i32 = arith.constant 0 : i32
    %c0_i32_0 = arith.constant 0 : i32
    %c0_i32_1 = arith.constant 0 : i32
    return %arg0, %c0_i32, %c0_i32_0 : i32, i32, i32
  }
}

</mosaic_0001>

<llo_original>
// kernel: tpu_custom_call.1
$region0: #{tpu_custom_call.1}
  #allocation0 [shape = 'u32[]', space=smem, size = 0x4, offset = 0x4, fixed_abs, tag = 'smem constant byte address 0x4 - core index']
  #allocation1 [shape = 'u32[144,128]{1,0:T(1,128)}', space=vmem, size = 0x12000, scoped, tag = 'internal scratch']
  %s0 = inlined_call_operand.hbm [shape: f32[2,8,128], index: 0, kind: input, shape index: {}]
  %s1 = inlined_call_operand.vmem [shape: f32[1,128], index: 1, kind: input, shape index: {}]
  %s2 = inlined_call_operand.vmem [shape: f32[1,128], index: 2, kind: input, shape index: {}]
  %s3 = inlined_call_operand.hbm [shape: f32[128,384], index: 3, kind: input, shape index: {}]
  %s4 = inlined_call_operand.hbm [shape: f32[128,128], index: 4, kind: input, shape index: {}]
  %s5 = inlined_call_operand.vmem [shape: f32[1,128], index: 5, kind: input, shape index: {}]
  %s6 = inlined_call_operand.vmem [shape: f32[1,128], index: 6, kind: input, shape index: {}]
  %s7 = inlined_call_operand.vmem [shape: f32[1,128], index: 7, kind: input, shape index: {}]
  %s8 = inlined_call_operand.hbm [shape: f32[128,512], index: 8, kind: input, shape index: {}]
  %s9 = inlined_call_operand.vmem [shape: f32[1,512], index: 9, kind: input, shape index: {}]
  %s10 = inlined_call_operand.hbm [shape: f32[512,128], index: 10, kind: input, shape index: {}]
  %s11 = inlined_call_operand.vmem [shape: f32[1,128], index: 11, kind: input, shape index: {}]
  %s12 = inlined_call_operand.hbm [shape: f32[2,8,128], index: 12, kind: output, shape index: {}]
  %s13 = sld [smem:[#allocation0]]
  $region101: #{tpu_custom_call.1} parent=0
    _
  %s15 = ssub.s32 1, %s13
  %s16 = scalar_select 0, %s15, %s13
  $region1: #{tpu_custom_call.1} parent=0
    #allocation2 [shape = 'u8[8192]{0}', space=vmem, size = 0x2000, scoped, tag = 'input window, operand 0']
    #allocation3 [shape = 's32[2]{0}', space=sflag, size = 0x8, scoped, tag = 'scoped memory for tpu_custom_call.1']
    #allocation4 [shape = 's32[2]{0}', space=sflag, size = 0x8, scoped, tag = 'scoped memory for tpu_custom_call.1']
    #allocation5 [shape = 'u8[196608]{0}', space=vmem, size = 0x30000, scoped, tag = 'input window, operand 3, single buffered']
    #allocation6 [shape = 's32[1]{0}', space=sflag, size = 0x4, scoped, tag = 'scoped memory for tpu_custom_call.1']
    #allocation7 [shape = 'u8[65536]{0}', space=vmem, size = 0x10000, scoped, tag = 'input window, operand 4, single buffered']
    #allocation8 [shape = 'u8[262144]{0}', space=vmem, size = 0x40000, scoped, tag = 'input window, operand 8, single buffered']
    #allocation9 [shape = 's32[1]{0}', space=sflag, size = 0x4, scoped, tag = 'scoped memory for tpu_custom_call.1']
    #allocation10 [shape = 'u8[262144]{0}', space=vmem, size = 0x40000, scoped, tag = 'input window, operand 10, single buffered']
    #allocation11 [shape = 'u8[8192]{0}', space=vmem, size = 0x2000, scoped, tag = 'output window, operand 0']
    %17 = vsyncpa [#allocation3], 0
    %s18 = scalar_lea.sflag [#allocation3], 1
    %19 = vsyncpa %s18, 0
    %20 = vsyncpa [#allocation6], 0
    %21 = vsyncpa [#allocation9], 0
    %22 = vsyncpa [#allocation4], 0
    %s23 = scalar_lea.sflag [#allocation4], 1
    %24 = vsyncpa %s23, 0
    loop: start=0, step=1, limit=4
    $region2: #{tpu_custom_call.1} parent=1 // loop_pre_header
      _
    $region3: #{tpu_custom_call.1} parent=1 // loop_header
      %s26 = sphi 0, %s30
      %p27 = scmp.ge.s32.totalorder %s26, 4
      %s36 = sphi 0, %s38
      %s39 = sphi 0, %s36
      %s40 = sphi 0, %s39
      %s56 = sphi 0, %s40
      %s60 = sphi 0, %s60
      %s62 = sphi 0, %s60
      %s63 = sphi 0, %s62
      %s77 = sphi 0, %s63
      %s81 = sphi 0, %s81
      %s83 = sphi 0, %s81
      %s84 = sphi 0, %s83
      %s98 = sphi 0, %s84
      %s102 = sphi 0, %s102
      %s104 = sphi 0, %s102
      %s105 = sphi 0, %s104
      %s119 = sphi 0, %s105
      %s123 = sphi 0, %s123
      %s125 = sphi 0, %s123
      %s126 = sphi 0, %s125
      %s140 = sphi 0, %s126
      %s144 = sphi 0, %s144
      %s146 = sphi 0, %s144
      %s147 = sphi 0, %s146
      %s161 = sphi 0, %s147
      %s165 = sphi 0, %s165
      %s167 = sphi 0, %s165
      %s168 = sphi 0, %s167
      %s182 = sphi 0, %s168
      %s186 = sphi 0, %s186
      %s188 = sphi 0, %s186
      %s189 = sphi 0, %s188
      %s203 = sphi 0, %s189
      %s207 = sphi 0, %s207
      %s209 = sphi 0, %s207
      %s210 = sphi 0, %s209
      %s224 = sphi 0, %s210
      %s228 = sphi 0, %s228
      %s230 = sphi 0, %s228
      %s231 = sphi 0, %s230
      %s245 = sphi 0, %s231
      %s249 = sphi 0, %s249
      %s251 = sphi 0, %s249
      %s252 = sphi 0, %s251
      %s266 = sphi 0, %s252
      %s270 = sphi 0, %s270
      %s272 = sphi 0, %s270
      %s273 = sphi 0, %s272
      %s287 = sphi 0, %s273
      %s293 = sphi 0, %s295
      %s296 = sphi 0, %s293
      %s297 = sphi 0, %s296
      %s313 = sphi 0, %s297
    $region4: #{tpu_custom_call.1} parent=1 // loop_header_branch
      %29 = sbr.rel (%p27) target = $region8
    $region5: #{tpu_custom_call.1} parent=1 // loop_body
      %s31 = ssub.s32 %s26, 1
      %s32 = ssub.s32 %s26, 2
      %s33 = sadd.s32 %s26, 1
      %s34 = ssub.s32 %s26, %s33
      %p35 = scmp.eq.s32.totalorder %s34, 0
      %s37 = sadd.s32 %s36, 1
      %s38 = scalar_select %p35, %s36, %s37
      %p41 = pneg %p35
      %p42 = scmp.eq.s32.totalorder %s26, 1
      %p43 = por %p41, %p42
      %p44 = scmp.ne.s32.totalorder %s36, %s39
      %p45 = scmp.eq.s32.totalorder %s26, 0
      %p46 = por %p44, %p45
      %p47 = scmp.ne.s32.totalorder %s36, %s39
      %p48 = scmp.eq.s32.totalorder %s31, 1
      %p49 = por %p47, %p48
      %p50 = scmp.ne.s32.totalorder %s39, %s40
      %p51 = scmp.eq.s32.totalorder %s31, 0
      %p52 = por %p50, %p51
      %p53 = scmp.ne.s32.totalorder %s39, %s40
      %p54 = scmp.eq.s32.totalorder %s32, 1
      %p55 = por %p53, %p54
      %p57 = scmp.ne.s32.totalorder %s40, %s56
      %p58 = scmp.eq.s32.totalorder %s32, 0
      %p59 = por %p57, %p58
      %s61 = sadd.s32 %s60, 1
      %p64 = scmp.eq.s32.totalorder %s26, 1
      %p65 = scmp.ne.s32.totalorder %s60, %s62
      %p66 = scmp.eq.s32.totalorder %s26, 0
      %p67 = por %p65, %p66
      %p68 = scmp.ne.s32.totalorder %s60, %s62
      %p69 = scmp.eq.s32.totalorder %s31, 1
      %p70 = por %p68, %p69
      %p71 = scmp.ne.s32.totalorder %s62, %s63
      %p72 = scmp.eq.s32.totalorder %s31, 0
      %p73 = por %p71, %p72
      %p74 = scmp.ne.s32.totalorder %s62, %s63
      %p75 = scmp.eq.s32.totalorder %s32, 1
      %p76 = por %p74, %p75
      %p78 = scmp.ne.s32.totalorder %s63, %s77
      %p79 = scmp.eq.s32.totalorder %s32, 0
      %p80 = por %p78, %p79
      %s82 = sadd.s32 %s81, 1
      %p85 = scmp.eq.s32.totalorder %s26, 1
      %p86 = scmp.ne.s32.totalorder %s81, %s83
      %p87 = scmp.eq.s32.totalorder %s26, 0
      %p88 = por %p86, %p87
      %p89 = scmp.ne.s32.totalorder %s81, %s83
      %p90 = scmp.eq.s32.totalorder %s31, 1
      %p91 = por %p89, %p90
      %p92 = scmp.ne.s32.totalorder %s83, %s84
      %p93 = scmp.eq.s32.totalorder %s31, 0
      %p94 = por %p92, %p93
      %p95 = scmp.ne.s32.totalorder %s83, %s84
      %p96 = scmp.eq.s32.totalorder %s32, 1
      %p97 = por %p95, %p96
      %p99 = scmp.ne.s32.totalorder %s84, %s98
      %p100 = scmp.eq.s32.totalorder %s32, 0
      %p101 = por %p99, %p100
      %s103 = sadd.s32 %s102, 1
      %p106 = scmp.eq.s32.totalorder %s26, 1
      %p107 = scmp.ne.s32.totalorder %s102, %s104
      %p108 = scmp.eq.s32.totalorder %s26, 0
      %p109 = por %p107, %p108
      %p110 = scmp.ne.s32.totalorder %s102, %s104
      %p111 = scmp.eq.s32.totalorder %s31, 1
      %p112 = por %p110, %p111
      %p113 = scmp.ne.s32.totalorder %s104, %s105
      %p114 = scmp.eq.s32.totalorder %s31, 0
      %p115 = por %p113, %p114
      %p116 = scmp.ne.s32.totalorder %s104, %s105
      %p117 = scmp.eq.s32.totalorder %s32, 1
      %p118 = por %p116, %p117
      %p120 = scmp.ne.s32.totalorder %s105, %s119
      %p121 = scmp.eq.s32.totalorder %s32, 0
      %p122 = por %p120, %p121
      %s124 = sadd.s32 %s123, 1
      %p127 = scmp.eq.s32.totalorder %s26, 1
      %p128 = scmp.ne.s32.totalorder %s123, %s125
      %p129 = scmp.eq.s32.totalorder %s26, 0
      %p130 = por %p128, %p129
      %p131 = scmp.ne.s32.totalorder %s123, %s125
      %p132 = scmp.eq.s32.totalorder %s31, 1
      %p133 = por %p131, %p132
      %p134 = scmp.ne.s32.totalorder %s125, %s126
      %p135 = scmp.eq.s32.totalorder %s31, 0
      %p136 = por %p134, %p135
      %p137 = scmp.ne.s32.totalorder %s125, %s126
      %p138 = scmp.eq.s32.totalorder %s32, 1
      %p139 = por %p137, %p138
      %p141 = scmp.ne.s32.totalorder %s126, %s140
      %p142 = scmp.eq.s32.totalorder %s32, 0
      %p143 = por %p141, %p142
      %s145 = sadd.s32 %s144, 1
      %p148 = scmp.eq.s32.totalorder %s26, 1
      %p149 = scmp.ne.s32.totalorder %s144, %s146
      %p150 = scmp.eq.s32.totalorder %s26, 0
      %p151 = por %p149, %p150
      %p152 = scmp.ne.s32.totalorder %s144, %s146
      %p153 = scmp.eq.s32.totalorder %s31, 1
      %p154 = por %p152, %p153
      %p155 = scmp.ne.s32.totalorder %s146, %s147
      %p156 = scmp.eq.s32.totalorder %s31, 0
      %p157 = por %p155, %p156
      %p158 = scmp.ne.s32.totalorder %s146, %s147
      %p159 = scmp.eq.s32.totalorder %s32, 1
      %p160 = por %p158, %p159
      %p162 = scmp.ne.s32.totalorder %s147, %s161
      %p163 = scmp.eq.s32.totalorder %s32, 0
      %p164 = por %p162, %p163
      %s166 = sadd.s32 %s165, 1
      %p169 = scmp.eq.s32.totalorder %s26, 1
      %p170 = scmp.ne.s32.totalorder %s165, %s167
      %p171 = scmp.eq.s32.totalorder %s26, 0
      %p172 = por %p170, %p171
      %p173 = scmp.ne.s32.totalorder %s165, %s167
      %p174 = scmp.eq.s32.totalorder %s31, 1
      %p175 = por %p173, %p174
      %p176 = scmp.ne.s32.totalorder %s167, %s168
      %p177 = scmp.eq.s32.totalorder %s31, 0
      %p178 = por %p176, %p177
      %p179 = scmp.ne.s32.totalorder %s167, %s168
      %p180 = scmp.eq.s32.totalorder %s32, 1
      %p181 = por %p179, %p180
      %p183 = scmp.ne.s32.totalorder %s168, %s182
      %p184 = scmp.eq.s32.totalorder %s32, 0
      %p185 = por %p183, %p184
      %s187 = sadd.s32 %s186, 1
      %p190 = scmp.eq.s32.totalorder %s26, 1
      %p191 = scmp.ne.s32.totalorder %s186, %s188
      %p192 = scmp.eq.s32.totalorder %s26, 0
      %p193 = por %p191, %p192
      %p194 = scmp.ne.s32.totalorder %s186, %s188
      %p195 = scmp.eq.s32.totalorder %s31, 1
      %p196 = por %p194, %p195
      %p197 = scmp.ne.s32.totalorder %s188, %s189
      %p198 = scmp.eq.s32.totalorder %s31, 0
      %p199 = por %p197, %p198
      %p200 = scmp.ne.s32.totalorder %s188, %s189
      %p201 = scmp.eq.s32.totalorder %s32, 1
      %p202 = por %p200, %p201
      %p204 = scmp.ne.s32.totalorder %s189, %s203
      %p205 = scmp.eq.s32.totalorder %s32, 0
      %p206 = por %p204, %p205
      %s208 = sadd.s32 %s207, 1
      %p211 = scmp.eq.s32.totalorder %s26, 1
      %p212 = scmp.ne.s32.totalorder %s207, %s209
      %p213 = scmp.eq.s32.totalorder %s26, 0
      %p214 = por %p212, %p213
      %p215 = scmp.ne.s32.totalorder %s207, %s209
      %p216 = scmp.eq.s32.totalorder %s31, 1
      %p217 = por %p215, %p216
      %p218 = scmp.ne.s32.totalorder %s209, %s210
      %p219 = scmp.eq.s32.totalorder %s31, 0
      %p220 = por %p218, %p219
      %p221 = scmp.ne.s32.totalorder %s209, %s210
      %p222 = scmp.eq.s32.totalorder %s32, 1
      %p223 = por %p221, %p222
      %p225 = scmp.ne.s32.totalorder %s210, %s224
      %p226 = scmp.eq.s32.totalorder %s32, 0
      %p227 = por %p225, %p226
      %s229 = sadd.s32 %s228, 1
      %p232 = scmp.eq.s32.totalorder %s26, 1
      %p233 = scmp.ne.s32.totalorder %s228, %s230
      %p234 = scmp.eq.s32.totalorder %s26, 0
      %p235 = por %p233, %p234
      %p236 = scmp.ne.s32.totalorder %s228, %s230
      %p237 = scmp.eq.s32.totalorder %s31, 1
      %p238 = por %p236, %p237
      %p239 = scmp.ne.s32.totalorder %s230, %s231
      %p240 = scmp.eq.s32.totalorder %s31, 0
      %p241 = por %p239, %p240
      %p242 = scmp.ne.s32.totalorder %s230, %s231
      %p243 = scmp.eq.s32.totalorder %s32, 1
      %p244 = por %p242, %p243
      %p246 = scmp.ne.s32.totalorder %s231, %s245
      %p247 = scmp.eq.s32.totalorder %s32, 0
      %p248 = por %p246, %p247
      %s250 = sadd.s32 %s249, 1
      %p253 = scmp.eq.s32.totalorder %s26, 1
      %p254 = scmp.ne.s32.totalorder %s249, %s251
      %p255 = scmp.eq.s32.totalorder %s26, 0
      %p256 = por %p254, %p255
      %p257 = scmp.ne.s32.totalorder %s249, %s251
      %p258 = scmp.eq.s32.totalorder %s31, 1
      %p259 = por %p257, %p258
      %p260 = scmp.ne.s32.totalorder %s251, %s252
      %p261 = scmp.eq.s32.totalorder %s31, 0
      %p262 = por %p260, %p261
      %p263 = scmp.ne.s32.totalorder %s251, %s252
      %p264 = scmp.eq.s32.totalorder %s32, 1
      %p265 = por %p263, %p264
      %p267 = scmp.ne.s32.totalorder %s252, %s266
      %p268 = scmp.eq.s32.totalorder %s32, 0
      %p269 = por %p267, %p268
      %s271 = sadd.s32 %s270, 1
      %p274 = scmp.eq.s32.totalorder %s26, 1
      %p275 = scmp.ne.s32.totalorder %s270, %s272
      %p276 = scmp.eq.s32.totalorder %s26, 0
      %p277 = por %p275, %p276
      %p278 = scmp.ne.s32.totalorder %s270, %s272
      %p279 = scmp.eq.s32.totalorder %s31, 1
      %p280 = por %p278, %p279
      %p281 = scmp.ne.s32.totalorder %s272, %s273
      %p282 = scmp.eq.s32.totalorder %s31, 0
      %p283 = por %p281, %p282
      %p284 = scmp.ne.s32.totalorder %s272, %s273
      %p285 = scmp.eq.s32.totalorder %s32, 1
      %p286 = por %p284, %p285
      %p288 = scmp.ne.s32.totalorder %s273, %s287
      %p289 = scmp.eq.s32.totalorder %s32, 0
      %p290 = por %p288, %p289
      %s291 = ssub.s32 %s26, %s33
      %p292 = scmp.eq.s32.totalorder %s291, 0
      %s294 = sadd.s32 %s293, 1
      %s295 = scalar_select %p292, %s293, %s294
      %p298 = pneg %p292
      %p299 = scmp.eq.s32.totalorder %s26, 1
      %p300 = por %p298, %p299
      %p301 = scmp.ne.s32.totalorder %s293, %s296
      %p302 = scmp.eq.s32.totalorder %s26, 0
      %p303 = por %p301, %p302
      %p304 = scmp.ne.s32.totalorder %s293, %s296
      %p305 = scmp.eq.s32.totalorder %s31, 1
      %p306 = por %p304, %p305
      %p307 = scmp.ne.s32.totalorder %s296, %s297
      %p308 = scmp.eq.s32.totalorder %s31, 0
      %p309 = por %p307, %p308
      %p310 = scmp.ne.s32.totalorder %s296, %s297
      %p311 = scmp.eq.s32.totalorder %s32, 1
      %p312 = por %p310, %p311
      %p314 = scmp.ne.s32.totalorder %s297, %s313
      %p315 = scmp.eq.s32.totalorder %s32, 0
      %p316 = por %p314, %p315
      %p317 = scmp.le.s32.totalorder 1, %s26
      %p318 = scmp.lt.s32.totalorder %s26, 3
      %p319 = pnand %p317, %p318
      %p320 = pneg %p319
      // Predicated region
      $region9: #{tpu_custom_call.1} parent=5 // pred_check
        _
      $region10: #{tpu_custom_call.1} parent=5 // pred_check_branch
        %322 = sbr.rel (%p319) target = $region12
      $region11: #{tpu_custom_call.1} parent=5 // pred_region
        %s323 = ssub.s32 %s26, 1
        // Predicated region
        $region13: #{tpu_custom_call.1} parent=11 // pred_check
          %p324 = pneg %p73
        $region14: #{tpu_custom_call.1} parent=11 // pred_check_branch
          %326 = sbr.rel (%p324) target = $region16
        $region15: #{tpu_custom_call.1} parent=11 // pred_region
          _
        $region16: #{tpu_custom_call.1} parent=11 // pred_fallthru
          _
        // Predicated region
        $region17: #{tpu_custom_call.1} parent=11 // pred_check
          %p327 = pneg %p94
        $region18: #{tpu_custom_call.1} parent=11 // pred_check_branch
          %329 = sbr.rel (%p327) target = $region20
        $region19: #{tpu_custom_call.1} parent=11 // pred_region
          _
        $region20: #{tpu_custom_call.1} parent=11 // pred_fallthru
          _
        // Predicated region
        $region21: #{tpu_custom_call.1} parent=11 // pred_check
          %p330 = pneg %p115
        $region22: #{tpu_custom_call.1} parent=11 // pred_check_branch
          %332 = sbr.rel (%p330) target = $region24
        $region23: #{tpu_custom_call.1} parent=11 // pred_region
          %s334 = ssub.s32 6144, 6144
          %335 = vsyncadd [#allocation6], %s334
          %s336 = sshll.u32 [#allocation5], 4
          %s337 = int_to_ptr.vmem [resolvable:$true] %s336
          %342 = dma.hbm_to_vmem [thread:$0]  %s3, 6144, %s337, [#allocation6], 384, 384, 24
        $region24: #{tpu_custom_call.1} parent=11 // pred_fallthru
          _
        // Predicated region
        $region25: #{tpu_custom_call.1} parent=11 // pred_check
          %p343 = pneg %p136
        $region26: #{tpu_custom_call.1} parent=11 // pred_check_branch
          %345 = sbr.rel (%p343) target = $region28
        $region27: #{tpu_custom_call.1} parent=11 // pred_region
          %s347 = ssub.s32 2048, 2048
          %348 = vsyncadd [#allocation6], %s347
          %s349 = sshll.u32 [#allocation7], 4
          %s350 = int_to_ptr.vmem [resolvable:$true] %s349
          %355 = dma.hbm_to_vmem [thread:$0]  %s4, 2048, %s350, [#allocation6], 128, 128, 8
        $region28: #{tpu_custom_call.1} parent=11 // pred_fallthru
          _
        // Predicated region
        $region29: #{tpu_custom_call.1} parent=11 // pred_check
          %p356 = pneg %p157
        $region30: #{tpu_custom_call.1} parent=11 // pred_check_branch
          %358 = sbr.rel (%p356) target = $region32
        $region31: #{tpu_custom_call.1} parent=11 // pred_region
          _
        $region32: #{tpu_custom_call.1} parent=11 // pred_fallthru
          _
        // Predicated region
        $region33: #{tpu_custom_call.1} parent=11 // pred_check
          %p359 = pneg %p178
        $region34: #{tpu_custom_call.1} parent=11 // pred_check_branch
          %361 = sbr.rel (%p359) target = $region36
        $region35: #{tpu_custom_call.1} parent=11 // pred_region
          _
        $region36: #{tpu_custom_call.1} parent=11 // pred_fallthru
          _
        // Predicated region
        $region37: #{tpu_custom_call.1} parent=11 // pred_check
          %p362 = pneg %p199
        $region38: #{tpu_custom_call.1} parent=11 // pred_check_branch
          %364 = sbr.rel (%p362) target = $region40
        $region39: #{tpu_custom_call.1} parent=11 // pred_region
          _
        $region40: #{tpu_custom_call.1} parent=11 // pred_fallthru
          _
        // Predicated region
        $region41: #{tpu_custom_call.1} parent=11 // pred_check
          %p365 = pneg %p220
        $region42: #{tpu_custom_call.1} parent=11 // pred_check_branch
          %367 = sbr.rel (%p365) target = $region44
        $region43: #{tpu_custom_call.1} parent=11 // pred_region
          %s369 = ssub.s32 8192, 8192
          %370 = vsyncadd [#allocation9], %s369
          %s371 = sshll.u32 [#allocation8], 4
          %s372 = int_to_ptr.vmem [resolvable:$true] %s371
          %377 = dma.hbm_to_vmem [thread:$0]  %s8, 8192, %s372, [#allocation9], 512, 512, 32
        $region44: #{tpu_custom_call.1} parent=11 // pred_fallthru
          _
        // Predicated region
        $region45: #{tpu_custom_call.1} parent=11 // pred_check
          %p378 = pneg %p241
        $region46: #{tpu_custom_call.1} parent=11 // pred_check_branch
          %380 = sbr.rel (%p378) target = $region48
        $region47: #{tpu_custom_call.1} parent=11 // pred_region
          _
        $region48: #{tpu_custom_call.1} parent=11 // pred_fallthru
          _
        // Predicated region
        $region49: #{tpu_custom_call.1} parent=11 // pred_check
          %p381 = pneg %p262
        $region50: #{tpu_custom_call.1} parent=11 // pred_check_branch
          %383 = sbr.rel (%p381) target = $region52
        $region51: #{tpu_custom_call.1} parent=11 // pred_region
          %s385 = ssub.s32 8192, 8192
          %386 = vsyncadd [#allocation9], %s385
          %s387 = sshll.u32 [#allocation10], 4
          %s388 = int_to_ptr.vmem [resolvable:$true] %s387
          %393 = dma.hbm_to_vmem [thread:$0]  %s10, 8192, %s388, [#allocation9], 128, 128, 8
        $region52: #{tpu_custom_call.1} parent=11 // pred_fallthru
          _
        // Predicated region
        $region53: #{tpu_custom_call.1} parent=11 // pred_check
          %p394 = pneg %p283
        $region54: #{tpu_custom_call.1} parent=11 // pred_check_branch
          %396 = sbr.rel (%p394) target = $region56
        $region55: #{tpu_custom_call.1} parent=11 // pred_region
          _
        $region56: #{tpu_custom_call.1} parent=11 // pred_fallthru
          _
      $region12: #{tpu_custom_call.1} parent=5 // pred_fallthru
        _
      %p397 = scmp.lt.s32.totalorder %s26, 2
      // Predicated region
      $region57: #{tpu_custom_call.1} parent=5 // pred_check
        %p398 = pneg %p397
      $region58: #{tpu_custom_call.1} parent=5 // pred_check_branch
        %400 = sbr.rel (%p398) target = $region60
      $region59: #{tpu_custom_call.1} parent=5 // pred_region
        // Predicated region
        $region61: #{tpu_custom_call.1} parent=59 // pred_check
          %p401 = pneg %p46
        $region62: #{tpu_custom_call.1} parent=59 // pred_check_branch
          %403 = sbr.rel (%p401) target = $region64
        $region63: #{tpu_custom_call.1} parent=59 // pred_region
          %s404 = sand.u32 %s36, 1
          %s405 = scalar_lea.sflag [#allocation3], %s404
          %s406 = sand.u32 %s36, 1
          %s407 = smul.addr %s406, 8
          %s408 = scalar_lea.vmem [#allocation2], %s407
          %s410 = ssub.s32 128, 128
          %411 = vsyncadd %s405, %s410
          %s412 = smul.addr %s26, 128
          %s413 = scalar_lea.hbm %s0, %s412
          %s415 = sshll.u32 %s408, 4
          %s416 = int_to_ptr.vmem [resolvable:$true] %s415
          %418 = dma.hbm_to_vmem [thread:$0]  %s413, 128, %s416, %s405
        $region64: #{tpu_custom_call.1} parent=59 // pred_fallthru
          _
      $region60: #{tpu_custom_call.1} parent=5 // pred_fallthru
        _
      %p419 = scmp.le.s32.totalorder 1, %s26
      %p420 = scmp.lt.s32.totalorder %s26, 3
      %p421 = pnand %p419, %p420
      %p422 = pneg %p421
      // Predicated region
      $region65: #{tpu_custom_call.1} parent=5 // pred_check
        _
      $region66: #{tpu_custom_call.1} parent=5 // pred_check_branch
        %424 = sbr.rel (%p421) target = $region68
      $region67: #{tpu_custom_call.1} parent=5 // pred_region
        %s425 = ssub.s32 %s26, 1
        %s426 = sand.u32 %s39, 1
        %s427 = scalar_lea.sflag [#allocation3], %s426
        %s428 = sand.u32 %s39, 1
        %s429 = smul.addr %s428, 8
        %s430 = scalar_lea.vmem [#allocation2], %s429
        // Predicated region
        $region69: #{tpu_custom_call.1} parent=67 // pred_check
          %p431 = pneg %p52
        $region70: #{tpu_custom_call.1} parent=67 // pred_check_branch
          %433 = sbr.rel (%p431) target = $region72
        $region71: #{tpu_custom_call.1} parent=67 // pred_region
          %434 = dma.done %s427, 128
        $region72: #{tpu_custom_call.1} parent=67 // pred_fallthru
          _
        // Predicated region
        $region73: #{tpu_custom_call.1} parent=67 // pred_check
          %p435 = pneg %p115
        $region74: #{tpu_custom_call.1} parent=67 // pred_check_branch
          %437 = sbr.rel (%p435) target = $region76
        $region75: #{tpu_custom_call.1} parent=67 // pred_region
          %438 = dma.done [#allocation6], 6144
        $region76: #{tpu_custom_call.1} parent=67 // pred_fallthru
          _
        // Predicated region
        $region77: #{tpu_custom_call.1} parent=67 // pred_check
          %p439 = pneg %p136
        $region78: #{tpu_custom_call.1} parent=67 // pred_check_branch
          %441 = sbr.rel (%p439) target = $region80
        $region79: #{tpu_custom_call.1} parent=67 // pred_region
          %442 = dma.done [#allocation6], 2048
        $region80: #{tpu_custom_call.1} parent=67 // pred_fallthru
          _
        // Predicated region
        $region81: #{tpu_custom_call.1} parent=67 // pred_check
          %p443 = pneg %p220
        $region82: #{tpu_custom_call.1} parent=67 // pred_check_branch
          %445 = sbr.rel (%p443) target = $region84
        $region83: #{tpu_custom_call.1} parent=67 // pred_region
          %446 = dma.done [#allocation9], 8192
        $region84: #{tpu_custom_call.1} parent=67 // pred_fallthru
          _
        // Predicated region
        $region85: #{tpu_custom_call.1} parent=67 // pred_check
          %p447 = pneg %p262
        $region86: #{tpu_custom_call.1} parent=67 // pred_check_branch
          %449 = sbr.rel (%p447) target = $region88
        $region87: #{tpu_custom_call.1} parent=67 // pred_region
          %450 = dma.done [#allocation9], 8192
        $region88: #{tpu_custom_call.1} parent=67 // pred_fallthru
          _
        %s451 = sand.u32 %s39, 1
        %s452 = scalar_lea.sflag [#allocation3], %s451
        %s453 = sand.u32 %s39, 1
        %s454 = smul.addr %s453, 8
        %s455 = scalar_lea.vmem [#allocation2], %s454
        %p456 = pneg %p52
        %p457 = pneg %p49
        %p458 = pneg %p73
        %p459 = pneg %p70
        %p460 = pneg %p94
        %p461 = pneg %p91
        %p462 = pneg %p115
        %p463 = pneg %p112
        %p464 = pneg %p136
        %p465 = pneg %p133
        %p466 = pneg %p157
        %p467 = pneg %p154
        %p468 = pneg %p178
        %p469 = pneg %p175
        %p470 = pneg %p199
        %p471 = pneg %p196
        %p472 = pneg %p220
        %p473 = pneg %p217
        %p474 = pneg %p241
        %p475 = pneg %p238
        %p476 = pneg %p262
        %p477 = pneg %p259
        %p478 = pneg %p283
        %p479 = pneg %p280
        %p480 = pneg %p309
        %p481 = pneg %p306
        %s482 = sand.u32 %s296, 1
        %s483 = scalar_lea.sflag [#allocation4], %s482
        %s484 = sand.u32 %s296, 1
        %s485 = smul.addr %s484, 8
        %s486 = scalar_lea.vmem [#allocation11], %s485
        %v487 = vld [vmem:[%s430] sm:$0xff]
        %v488 = vld [vmem:[%s1] sm:$0x1]
        %v489 = vld [vmem:[%s2] sm:$0x1]
        %490 = vadd.xlane.f32.xlu0 %v487
        %v491 = vpop.xlane.xlu0 %490
        %v492 = vrcp.pop 128.0
        %v493 = vmul.f32 %v491, %v492
        %v494 = vsub.f32 %v487, %v493
        %v495 = vmul.f32 %v494, %v494
        %496 = vadd.xlane.f32.xlu0 %v495
        %v497 = vpop.xlane.xlu0 %496
        %v498 = vmul.f32 %v497, %v492
        %v499 = vadd.f32 %v498, 1e-05
        %v500 = vrsqrt.pop %v499
        %v501 = vmul.f32 %v494, %v500
        %v503 = vlaneseq
        %v504 = vshrl.u32 %v503, 7
        %v505 = vsub.s32 0, %v504
        %v506 = vrot.slane %v488, %v505
        %v508 = vmul.f32 %v501, %v506
        %v510 = vlaneseq
        %v511 = vshrl.u32 %v510, 7
        %v512 = vsub.s32 0, %v511
        %v513 = vrot.slane %v489, %v512
        %v515 = vadd.f32 %v508, %v513
        %v516 = vld [vmem:[#allocation5] sm:$0xff]
        %v517 = vld [vmem:[#allocation5 + $0x8] sm:$0xff]
        %v518 = vld [vmem:[#allocation5 + $0x10] sm:$0xff]
        %v519 = vld [vmem:[#allocation5 + $0x18] sm:$0xff]
        %v520 = vld [vmem:[#allocation5 + $0x20] sm:$0xff]
        %v521 = vld [vmem:[#allocation5 + $0x28] sm:$0xff]
        %v522 = vld [vmem:[#allocation5 + $0x30] sm:$0xff]
        %v523 = vld [vmem:[#allocation5 + $0x38] sm:$0xff]
        %v524 = vld [vmem:[#allocation5 + $0x40] sm:$0xff]
        %v525 = vld [vmem:[#allocation5 + $0x48] sm:$0xff]
        %v526 = vld [vmem:[#allocation5 + $0x50] sm:$0xff]
        %v527 = vld [vmem:[#allocation5 + $0x58] sm:$0xff]
        %v528 = vld [vmem:[#allocation5 + $0x60] sm:$0xff]
        %v529 = vld [vmem:[#allocation5 + $0x68] sm:$0xff]
        %v530 = vld [vmem:[#allocation5 + $0x70] sm:$0xff]
        %v531 = vld [vmem:[#allocation5 + $0x78] sm:$0xff]
        %v532 = vld [vmem:[#allocation5 + $0x80] sm:$0xff]
        %v533 = vld [vmem:[#allocation5 + $0x88] sm:$0xff]
        %v534 = vld [vmem:[#allocation5 + $0x90] sm:$0xff]
        %v535 = vld [vmem:[#allocation5 + $0x98] sm:$0xff]
        %v536 = vld [vmem:[#allocation5 + $0xa0] sm:$0xff]
        %v537 = vld [vmem:[#allocation5 + $0xa8] sm:$0xff]
        %v538 = vld [vmem:[#allocation5 + $0xb0] sm:$0xff]
        %v539 = vld [vmem:[#allocation5 + $0xb8] sm:$0xff]
        %v540 = vld [vmem:[#allocation5 + $0xc0] sm:$0xff]
        %v541 = vld [vmem:[#allocation5 + $0xc8] sm:$0xff]
        %v542 = vld [vmem:[#allocation5 + $0xd0] sm:$0xff]
        %v543 = vld [vmem:[#allocation5 + $0xd8] sm:$0xff]
        %v544 = vld [vmem:[#allocation5 + $0xe0] sm:$0xff]
        %v545 = vld [vmem:[#allocation5 + $0xe8] sm:$0xff]
        %v546 = vld [vmem:[#allocation5 + $0xf0] sm:$0xff]
        %v547 = vld [vmem:[#allocation5 + $0xf8] sm:$0xff]
        %v548 = vld [vmem:[#allocation5 + $0x100] sm:$0xff]
        %v549 = vld [vmem:[#allocation5 + $0x108] sm:$0xff]
        %v550 = vld [vmem:[#allocation5 + $0x110] sm:$0xff]
        %v551 = vld [vmem:[#allocation5 + $0x118] sm:$0xff]
        %v552 = vld [vmem:[#allocation5 + $0x120] sm:$0xff]
        %v553 = vld [vmem:[#allocation5 + $0x128] sm:$0xff]
        %v554 = vld [vmem:[#allocation5 + $0x130] sm:$0xff]
        %v555 = vld [vmem:[#allocation5 + $0x138] sm:$0xff]
        %v556 = vld [vmem:[#allocation5 + $0x140] sm:$0xff]
        %v557 = vld [vmem:[#allocation5 + $0x148] sm:$0xff]
        %v558 = vld [vmem:[#allocation5 + $0x150] sm:$0xff]
        %v559 = vld [vmem:[#allocation5 + $0x158] sm:$0xff]
        %v560 = vld [vmem:[#allocation5 + $0x160] sm:$0xff]
        %v561 = vld [vmem:[#allocation5 + $0x168] sm:$0xff]
        %v562 = vld [vmem:[#allocation5 + $0x170] sm:$0xff]
        %v563 = vld [vmem:[#allocation5 + $0x178] sm:$0xff]
        %564 = vmatprep.subr.mxu0 %v517
        %565 = vmatpush1.msra.mxu0 %v516
        %566 = vmatprep.subr.mxu0 %v520
        %567 = vmatpush1.msra.mxu0 %v519
        %568 = vmatprep.subr.mxu0 %v523
        %569 = vmatpush1.msra.mxu0 %v522
        %570 = vmatprep.subr.mxu0 %v526
        %571 = vmatpush1.msra.mxu0 %v525
        %572 = vmatprep.subr.mxu0 %v529
        %573 = vmatpush1.msra.mxu0 %v528
        %574 = vmatprep.subr.mxu0 %v532
        %575 = vmatpush1.msra.mxu0 %v531
        %576 = vmatprep.subr.mxu0 %v535
        %577 = vmatpush1.msra.mxu0 %v534
        %578 = vmatprep.subr.mxu0 %v538
        %579 = vmatpush1.msra.mxu0 %v537
        %580 = vmatprep.subr.mxu0 %v541
        %581 = vmatpush1.msra.mxu0 %v540
        %582 = vmatprep.subr.mxu0 %v544
        %583 = vmatpush1.msra.mxu0 %v543
        %584 = vmatprep.subr.mxu0 %v547
        %585 = vmatpush1.msra.mxu0 %v546
        %586 = vmatprep.subr.mxu0 %v550
        %587 = vmatpush1.msra.mxu0 %v549
        %588 = vmatprep.subr.mxu0 %v553
        %589 = vmatpush1.msra.mxu0 %v552
        %590 = vmatprep.subr.mxu0 %v556
        %591 = vmatpush1.msra.mxu0 %v555
        %592 = vmatprep.subr.mxu0 %v559
        %593 = vmatpush1.msra.mxu0 %v558
        %594 = vmatprep.subr.mxu0 %v562
        %595 = vmatpush1.msra.mxu0 %v561
        %596 = vmatprep.subr.mxu0 0.0
        %597 = vmatpush1.msra.mxu0 0.0
        %598 = vmatprep.subr.mxu0 0.0
        %599 = vmatpush1.msra.mxu0 0.0
        %600 = vmatprep.subr.mxu0 0.0
        %601 = vmatpush1.msra.mxu0 0.0
        %602 = vmatprep.subr.mxu0 0.0
        %603 = vmatpush1.msra.mxu0 0.0
        %604 = vmatprep.subr.mxu0 0.0
        %605 = vmatpush1.msra.mxu0 0.0
        %606 = vmatprep.subr.mxu0 0.0
        %607 = vmatpush1.msra.mxu0 0.0
        %608 = vmatprep.subr.mxu0 0.0
        %609 = vmatpush1.msra.mxu0 0.0
        %610 = vmatprep.subr.mxu0 0.0
        %611 = vmatpush1.msra.mxu0 0.0
        %612 = vmatprep.subr.mxu0 0.0
        %613 = vmatpush1.msra.mxu0 0.0
        %614 = vmatprep.subr.mxu0 0.0
        %615 = vmatpush1.msra.mxu0 0.0
        %616 = vmatprep.subr.mxu0 0.0
        %617 = vmatpush1.msra.mxu0 0.0
        %618 = vmatprep.subr.mxu0 0.0
        %619 = vmatpush1.msra.mxu0 0.0
        %620 = vmatprep.subr.mxu0 0.0
        %621 = vmatpush1.msra.mxu0 0.0
        %622 = vmatprep.subr.mxu0 0.0
        %623 = vmatpush1.msra.mxu0 0.0
        %624 = vmatprep.subr.mxu0 0.0
        %625 = vmatpush1.msra.mxu0 0.0
        %626 = vmatprep.subr.mxu0 0.0
        %627 = vmatpush1.msra.mxu0 0.0
        %628 = vmatprep.mubr.f32.mxu0 0.0
        %629 = vmatmul.mubr.f32.gmra.mrb[0].mxu0 %v515
        %v630 = vpop.f32.mrb[0].mxu0
        %v631 = vadd.f32 0.0, %v630
        %v632 = vpop.f32.mrb[0].mxu0
        %v633 = vadd.f32 0.0, %v632
        %634 = vdwg.mxu0
        %635 = vmatprep.subr.mxu0 0.0
        %636 = vmatpush1.msra.mxu0 %v518
        %637 = vmatprep.subr.mxu0 0.0
        %638 = vmatpush1.msra.mxu0 %v521
        %639 = vmatprep.subr.mxu0 0.0
        %640 = vmatpush1.msra.mxu0 %v524
        %641 = vmatprep.subr.mxu0 0.0
        %642 = vmatpush1.msra.mxu0 %v527
        %643 = vmatprep.subr.mxu0 0.0
        %644 = vmatpush1.msra.mxu0 %v530
        %645 = vmatprep.subr.mxu0 0.0
        %646 = vmatpush1.msra.mxu0 %v533
        %647 = vmatprep.subr.mxu0 0.0
        %648 = vmatpush1.msra.mxu0 %v536
        %649 = vmatprep.subr.mxu0 0.0
        %650 = vmatpush1.msra.mxu0 %v539
        %651 = vmatprep.subr.mxu0 0.0
        %652 = vmatpush1.msra.mxu0 %v542
        %653 = vmatprep.subr.mxu0 0.0
        %654 = vmatpush1.msra.mxu0 %v545
        %655 = vmatprep.subr.mxu0 0.0
        %656 = vmatpush1.msra.mxu0 %v548
        %657 = vmatprep.subr.mxu0 0.0
        %658 = vmatpush1.msra.mxu0 %v551
        %659 = vmatprep.subr.mxu0 0.0
        %660 = vmatpush1.msra.mxu0 %v554
        %661 = vmatprep.subr.mxu0 0.0
        %662 = vmatpush1.msra.mxu0 %v557
        %663 = vmatprep.subr.mxu0 0.0
        %664 = vmatpush1.msra.mxu0 %v560
        %665 = vmatprep.subr.mxu0 0.0
        %666 = vmatpush1.msra.mxu0 %v563
        %667 = vmatprep.subr.mxu0 0.0
        %668 = vmatpush1.msra.mxu0 0.0
        %669 = vmatprep.subr.mxu0 0.0
        %670 = vmatpush1.msra.mxu0 0.0
        %671 = vmatprep.subr.mxu0 0.0
        %672 = vmatpush1.msra.mxu0 0.0
        %673 = vmatprep.subr.mxu0 0.0
        %674 = vmatpush1.msra.mxu0 0.0
        %675 = vmatprep.subr.mxu0 0.0
        %676 = vmatpush1.msra.mxu0 0.0
        %677 = vmatprep.subr.mxu0 0.0
        %678 = vmatpush1.msra.mxu0 0.0
        %679 = vmatprep.subr.mxu0 0.0
        %680 = vmatpush1.msra.mxu0 0.0
        %681 = vmatprep.subr.mxu0 0.0
        %682 = vmatpush1.msra.mxu0 0.0
        %683 = vmatprep.subr.mxu0 0.0
        %684 = vmatpush1.msra.mxu0 0.0
        %685 = vmatprep.subr.mxu0 0.0
        %686 = vmatpush1.msra.mxu0 0.0
        %687 = vmatprep.subr.mxu0 0.0
        %688 = vmatpush1.msra.mxu0 0.0
        %689 = vmatprep.subr.mxu0 0.0
        %690 = vmatpush1.msra.mxu0 0.0
        %691 = vmatprep.subr.mxu0 0.0
        %692 = vmatpush1.msra.mxu0 0.0
        %693 = vmatprep.subr.mxu0 0.0
        %694 = vmatpush1.msra.mxu0 0.0
        %695 = vmatprep.subr.mxu0 0.0
        %696 = vmatpush1.msra.mxu0 0.0
        %697 = vmatprep.subr.mxu0 0.0
        %698 = vmatpush1.msra.mxu0 0.0
        %699 = vmatprep.mubr.f32.mxu0 0.0
        %700 = vmatmul.mubr.f32.gmra.mrb[0].mxu0 %v515
        %v701 = vpop.f32.mrb[0].mxu0
        %v702 = vadd.f32 0.0, %v701
        %v703 = vpop.f32.mrb[0].mxu0
        %704 = vdwg.mxu0
        %vm705 = vcmask 130048
        %v707 = vsel %vm705, %v631, 0
        %v710 = vsel %vm705, %v633, 0
        %712 = vmatprep.subr.mxu0 0.0
        %713 = vmatpush1.xpose.msra.mxu0 %v710
        %714 = vmatprep.subr.mxu0 0.0
        %715 = vmatpush1.xpose.msra.mxu0 0.0
        %716 = vmatprep.subr.mxu0 0.0
        %717 = vmatpush1.xpose.msra.mxu0 0.0
        %718 = vmatprep.subr.mxu0 0.0
        %719 = vmatpush1.xpose.msra.mxu0 0.0
        %720 = vmatprep.subr.mxu0 0.0
        %721 = vmatpush1.xpose.msra.mxu0 0.0
        %722 = vmatprep.subr.mxu0 0.0
        %723 = vmatpush1.xpose.msra.mxu0 0.0
        %724 = vmatprep.subr.mxu0 0.0
        %725 = vmatpush1.xpose.msra.mxu0 0.0
        %726 = vmatprep.subr.mxu0 0.0
        %727 = vmatpush1.xpose.msra.mxu0 0.0
        %728 = vmatprep.subr.mxu0 0.0
        %729 = vmatpush1.xpose.msra.mxu0 0.0
        %730 = vmatprep.subr.mxu0 0.0
        %731 = vmatpush1.xpose.msra.mxu0 0.0
        %732 = vmatprep.subr.mxu0 0.0
        %733 = vmatpush1.xpose.msra.mxu0 0.0
        %734 = vmatprep.subr.mxu0 0.0
        %735 = vmatpush1.xpose.msra.mxu0 0.0
        %736 = vmatprep.subr.mxu0 0.0
        %737 = vmatpush1.xpose.msra.mxu0 0.0
        %738 = vmatprep.subr.mxu0 0.0
        %739 = vmatpush1.xpose.msra.mxu0 0.0
        %740 = vmatprep.subr.mxu0 0.0
        %741 = vmatpush1.xpose.msra.mxu0 0.0
        %742 = vmatprep.subr.mxu0 0.0
        %743 = vmatpush1.xpose.msra.mxu0 0.0
        %744 = vmatprep.subr.mxu0 0.0
        %745 = vmatpush1.xpose.msra.mxu0 0.0
        %746 = vmatprep.subr.mxu0 0.0
        %747 = vmatpush1.xpose.msra.mxu0 0.0
        %748 = vmatprep.subr.mxu0 0.0
        %749 = vmatpush1.xpose.msra.mxu0 0.0
        %750 = vmatprep.subr.mxu0 0.0
        %751 = vmatpush1.xpose.msra.mxu0 0.0
        %752 = vmatprep.subr.mxu0 0.0
        %753 = vmatpush1.xpose.msra.mxu0 0.0
        %754 = vmatprep.subr.mxu0 0.0
        %755 = vmatpush1.xpose.msra.mxu0 0.0
        %756 = vmatprep.subr.mxu0 0.0
        %757 = vmatpush1.xpose.msra.mxu0 0.0
        %758 = vmatprep.subr.mxu0 0.0
        %759 = vmatpush1.xpose.msra.mxu0 0.0
        %760 = vmatprep.subr.mxu0 0.0
        %761 = vmatpush1.xpose.msra.mxu0 0.0
        %762 = vmatprep.subr.mxu0 0.0
        %763 = vmatpush1.xpose.msra.mxu0 0.0
        %764 = vmatprep.subr.mxu0 0.0
        %765 = vmatpush1.xpose.msra.mxu0 0.0
        %766 = vmatprep.subr.mxu0 0.0
        %767 = vmatpush1.xpose.msra.mxu0 0.0
        %768 = vmatprep.subr.mxu0 0.0
        %769 = vmatpush1.xpose.msra.mxu0 0.0
        %770 = vmatprep.subr.mxu0 0.0
        %771 = vmatpush1.xpose.msra.mxu0 0.0
        %772 = vmatprep.subr.mxu0 0.0
        %773 = vmatpush1.xpose.msra.mxu0 0.0
        %774 = vmatprep.subr.mxu0 0.0
        %775 = vmatpush1.xpose.msra.mxu0 0.0
        %776 = vmatprep.mubr.f32.mxu0 0.0
        %777 = vmatmul.mubr.f32.gmra.mrb[0].mxu0 %v707
        %v778 = vpop.f32.mrb[0].mxu0
        %v779 = vadd.f32 0.0, %v778
        %v780 = vpop.f32.mrb[0].mxu0
        %781 = vdwg.mxu0
        %vm782 = vcmask 64512
        %v783 = vsel %vm782, %v779, -inf
        %784 = vmax.xlane.f32.xlu0 %v783
        %v785 = vpop.xlane.xlu0 %784
        %v786 = vsub.f32 %v779, %v785
        %v787 = vmul.f32 %v786, 1.442695
        %v788 = vpow.pop %v787
        %v789 = vsel %vm782, %v788, 0.0
        %790 = vadd.xlane.f32.xlu0 %v789
        %v791 = vpop.xlane.xlu0 %790
        %v793 = vsel %vm782, %v788, 0
        %795 = vmatprep.subr.mxu0 0.0
        %796 = vmatpush1.msra.mxu0 %v702
        %797 = vmatprep.subr.mxu0 0.0
        %798 = vmatpush1.msra.mxu0 0.0
        %799 = vmatprep.subr.mxu0 0.0
        %800 = vmatpush1.msra.mxu0 0.0
        %801 = vmatprep.subr.mxu0 0.0
        %802 = vmatpush1.msra.mxu0 0.0
        %803 = vmatprep.subr.mxu0 0.0
        %804 = vmatpush1.msra.mxu0 0.0
        %805 = vmatprep.subr.mxu0 0.0
        %806 = vmatpush1.msra.mxu0 0.0
        %807 = vmatprep.subr.mxu0 0.0
        %808 = vmatpush1.msra.mxu0 0.0
        %809 = vmatprep.subr.mxu0 0.0
        %810 = vmatpush1.msra.mxu0 0.0
        %811 = vmatprep.subr.mxu0 0.0
        %812 = vmatpush1.msra.mxu0 0.0
        %813 = vmatprep.subr.mxu0 0.0
        %814 = vmatpush1.msra.mxu0 0.0
        %815 = vmatprep.subr.mxu0 0.0
        %816 = vmatpush1.msra.mxu0 0.0
        %817 = vmatprep.subr.mxu0 0.0
        %818 = vmatpush1.msra.mxu0 0.0
        %819 = vmatprep.subr.mxu0 0.0
        %820 = vmatpush1.msra.mxu0 0.0
        %821 = vmatprep.subr.mxu0 0.0
        %822 = vmatpush1.msra.mxu0 0.0
        %823 = vmatprep.subr.mxu0 0.0
        %824 = vmatpush1.msra.mxu0 0.0
        %825 = vmatprep.subr.mxu0 0.0
        %826 = vmatpush1.msra.mxu0 0.0
        %827 = vmatprep.subr.mxu0 0.0
        %828 = vmatpush1.msra.mxu0 0.0
        %829 = vmatprep.subr.mxu0 0.0
        %830 = vmatpush1.msra.mxu0 0.0
        %831 = vmatprep.subr.mxu0 0.0
        %832 = vmatpush1.msra.mxu0 0.0
        %833 = vmatprep.subr.mxu0 0.0
        %834 = vmatpush1.msra.mxu0 0.0
        %835 = vmatprep.subr.mxu0 0.0
        %836 = vmatpush1.msra.mxu0 0.0
        %837 = vmatprep.subr.mxu0 0.0
        %838 = vmatpush1.msra.mxu0 0.0
        %839 = vmatprep.subr.mxu0 0.0
        %840 = vmatpush1.msra.mxu0 0.0
        %841 = vmatprep.subr.mxu0 0.0
        %842 = vmatpush1.msra.mxu0 0.0
        %843 = vmatprep.subr.mxu0 0.0
        %844 = vmatpush1.msra.mxu0 0.0
        %845 = vmatprep.subr.mxu0 0.0
        %846 = vmatpush1.msra.mxu0 0.0
        %847 = vmatprep.subr.mxu0 0.0
        %848 = vmatpush1.msra.mxu0 0.0
        %849 = vmatprep.subr.mxu0 0.0
        %850 = vmatpush1.msra.mxu0 0.0
        %851 = vmatprep.subr.mxu0 0.0
        %852 = vmatpush1.msra.mxu0 0.0
        %853 = vmatprep.subr.mxu0 0.0
        %854 = vmatpush1.msra.mxu0 0.0
        %855 = vmatprep.subr.mxu0 0.0
        %856 = vmatpush1.msra.mxu0 0.0
        %857 = vmatprep.subr.mxu0 0.0
        %858 = vmatpush1.msra.mxu0 0.0
        %859 = vmatprep.mubr.f32.mxu0 0.0
        %860 = vmatmul.mubr.f32.gmra.mrb[0].mxu0 %v793
        %v861 = vpop.f32.mrb[0].mxu0
        %v862 = vadd.f32 0.0, %v861
        %v863 = vpop.f32.mrb[0].mxu0
        %864 = vdwg.mxu0
        %v865 = vrcp.pop %v791
        %v866 = vmul.f32 %v862, %v865
        %867 = vrot.lane.b32.xlu0 %v631, 112
        %v868 = vpop.permute.xlu0 %867
        %869 = vrot.lane.b32.xlu0 %v633, 112
        %v870 = vpop.permute.xlu0 %869
        %v871 = vsel %vm705, %v868, 0
        %v873 = vsel %vm705, %v870, 0
        %875 = vmatprep.subr.mxu0 0.0
        %876 = vmatpush1.xpose.msra.mxu0 %v873
        %877 = vmatprep.subr.mxu0 0.0
        %878 = vmatpush1.xpose.msra.mxu0 0.0
        %879 = vmatprep.subr.mxu0 0.0
        %880 = vmatpush1.xpose.msra.mxu0 0.0
        %881 = vmatprep.subr.mxu0 0.0
        %882 = vmatpush1.xpose.msra.mxu0 0.0
        %883 = vmatprep.subr.mxu0 0.0
        %884 = vmatpush1.xpose.msra.mxu0 0.0
        %885 = vmatprep.subr.mxu0 0.0
        %886 = vmatpush1.xpose.msra.mxu0 0.0
        %887 = vmatprep.subr.mxu0 0.0
        %888 = vmatpush1.xpose.msra.mxu0 0.0
        %889 = vmatprep.subr.mxu0 0.0
        %890 = vmatpush1.xpose.msra.mxu0 0.0
        %891 = vmatprep.subr.mxu0 0.0
        %892 = vmatpush1.xpose.msra.mxu0 0.0
        %893 = vmatprep.subr.mxu0 0.0
        %894 = vmatpush1.xpose.msra.mxu0 0.0
        %895 = vmatprep.subr.mxu0 0.0
        %896 = vmatpush1.xpose.msra.mxu0 0.0
        %897 = vmatprep.subr.mxu0 0.0
        %898 = vmatpush1.xpose.msra.mxu0 0.0
        %899 = vmatprep.subr.mxu0 0.0
        %900 = vmatpush1.xpose.msra.mxu0 0.0
        %901 = vmatprep.subr.mxu0 0.0
        %902 = vmatpush1.xpose.msra.mxu0 0.0
        %903 = vmatprep.subr.mxu0 0.0
        %904 = vmatpush1.xpose.msra.mxu0 0.0
        %905 = vmatprep.subr.mxu0 0.0
        %906 = vmatpush1.xpose.msra.mxu0 0.0
        %907 = vmatprep.subr.mxu0 0.0
        %908 = vmatpush1.xpose.msra.mxu0 0.0
        %909 = vmatprep.subr.mxu0 0.0
        %910 = vmatpush1.xpose.msra.mxu0 0.0
        %911 = vmatprep.subr.mxu0 0.0
        %912 = vmatpush1.xpose.msra.mxu0 0.0
        %913 = vmatprep.subr.mxu0 0.0
        %914 = vmatpush1.xpose.msra.mxu0 0.0
        %915 = vmatprep.subr.mxu0 0.0
        %916 = vmatpush1.xpose.msra.mxu0 0.0
        %917 = vmatprep.subr.mxu0 0.0
        %918 = vmatpush1.xpose.msra.mxu0 0.0
        %919 = vmatprep.subr.mxu0 0.0
        %920 = vmatpush1.xpose.msra.mxu0 0.0
        %921 = vmatprep.subr.mxu0 0.0
        %922 = vmatpush1.xpose.msra.mxu0 0.0
        %923 = vmatprep.subr.mxu0 0.0
        %924 = vmatpush1.xpose.msra.mxu0 0.0
        %925 = vmatprep.subr.mxu0 0.0
        %926 = vmatpush1.xpose.msra.mxu0 0.0
        %927 = vmatprep.subr.mxu0 0.0
        %928 = vmatpush1.xpose.msra.mxu0 0.0
        %929 = vmatprep.subr.mxu0 0.0
        %930 = vmatpush1.xpose.msra.mxu0 0.0
        %931 = vmatprep.subr.mxu0 0.0
        %932 = vmatpush1.xpose.msra.mxu0 0.0
        %933 = vmatprep.subr.mxu0 0.0
        %934 = vmatpush1.xpose.msra.mxu0 0.0
        %935 = vmatprep.subr.mxu0 0.0
        %936 = vmatpush1.xpose.msra.mxu0 0.0
        %937 = vmatprep.subr.mxu0 0.0
        %938 = vmatpush1.xpose.msra.mxu0 0.0
        %939 = vmatprep.mubr.f32.mxu0 0.0
        %940 = vmatmul.mubr.f32.gmra.mrb[0].mxu0 %v871
        %v941 = vpop.f32.mrb[0].mxu0
        %v942 = vadd.f32 0.0, %v941
        %v943 = vpop.f32.mrb[0].mxu0
        %944 = vdwg.mxu0
        %v945 = vsel %vm782, %v942, -inf
        %946 = vmax.xlane.f32.xlu0 %v945
        %v947 = vpop.xlane.xlu0 %946
        %v948 = vsub.f32 %v942, %v947
        %v949 = vmul.f32 %v948, 1.442695
        %v950 = vpow.pop %v949
        %v951 = vsel %vm782, %v950, 0.0
        %952 = vadd.xlane.f32.xlu0 %v951
        %v953 = vpop.xlane.xlu0 %952
        %955 = vrot.lane.b32.xlu0 %v702, 112
        %v956 = vpop.permute.xlu0 %955
        %v959 = vsel %vm782, %v950, 0
        %961 = vmatprep.subr.mxu0 0.0
        %962 = vmatpush1.msra.mxu0 %v956
        %963 = vmatprep.subr.mxu0 0.0
        %964 = vmatpush1.msra.mxu0 0.0
        %965 = vmatprep.subr.mxu0 0.0
        %966 = vmatpush1.msra.mxu0 0.0
        %967 = vmatprep.subr.mxu0 0.0
        %968 = vmatpush1.msra.mxu0 0.0
        %969 = vmatprep.subr.mxu0 0.0
        %970 = vmatpush1.msra.mxu0 0.0
        %971 = vmatprep.subr.mxu0 0.0
        %972 = vmatpush1.msra.mxu0 0.0
        %973 = vmatprep.subr.mxu0 0.0
        %974 = vmatpush1.msra.mxu0 0.0
        %975 = vmatprep.subr.mxu0 0.0
        %976 = vmatpush1.msra.mxu0 0.0
        %977 = vmatprep.subr.mxu0 0.0
        %978 = vmatpush1.msra.mxu0 0.0
        %979 = vmatprep.subr.mxu0 0.0
        %980 = vmatpush1.msra.mxu0 0.0
        %981 = vmatprep.subr.mxu0 0.0
        %982 = vmatpush1.msra.mxu0 0.0
        %983 = vmatprep.subr.mxu0 0.0
        %984 = vmatpush1.msra.mxu0 0.0
        %985 = vmatprep.subr.mxu0 0.0
        %986 = vmatpush1.msra.mxu0 0.0
        %987 = vmatprep.subr.mxu0 0.0
        %988 = vmatpush1.msra.mxu0 0.0
        %989 = vmatprep.subr.mxu0 0.0
        %990 = vmatpush1.msra.mxu0 0.0
        %991 = vmatprep.subr.mxu0 0.0
        %992 = vmatpush1.msra.mxu0 0.0
        %993 = vmatprep.subr.mxu0 0.0
        %994 = vmatpush1.msra.mxu0 0.0
        %995 = vmatprep.subr.mxu0 0.0
        %996 = vmatpush1.msra.mxu0 0.0
        %997 = vmatprep.subr.mxu0 0.0
        %998 = vmatpush1.msra.mxu0 0.0
        %999 = vmatprep.subr.mxu0 0.0
        %1000 = vmatpush1.msra.mxu0 0.0
        %1001 = vmatprep.subr.mxu0 0.0
        %1002 = vmatpush1.msra.mxu0 0.0
        %1003 = vmatprep.subr.mxu0 0.0
        %1004 = vmatpush1.msra.mxu0 0.0
        %1005 = vmatprep.subr.mxu0 0.0
        %1006 = vmatpush1.msra.mxu0 0.0
        %1007 = vmatprep.subr.mxu0 0.0
        %1008 = vmatpush1.msra.mxu0 0.0
        %1009 = vmatprep.subr.mxu0 0.0
        %1010 = vmatpush1.msra.mxu0 0.0
        %1011 = vmatprep.subr.mxu0 0.0
        %1012 = vmatpush1.msra.mxu0 0.0
        %1013 = vmatprep.subr.mxu0 0.0
        %1014 = vmatpush1.msra.mxu0 0.0
        %1015 = vmatprep.subr.mxu0 0.0
        %1016 = vmatpush1.msra.mxu0 0.0
        %1017 = vmatprep.subr.mxu0 0.0
        %1018 = vmatpush1.msra.mxu0 0.0
        %1019 = vmatprep.subr.mxu0 0.0
        %1020 = vmatpush1.msra.mxu0 0.0
        %1021 = vmatprep.subr.mxu0 0.0
        %1022 = vmatpush1.msra.mxu0 0.0
        %1023 = vmatprep.subr.mxu0 0.0
        %1024 = vmatpush1.msra.mxu0 0.0
        %1025 = vmatprep.mubr.f32.mxu0 0.0
        %1026 = vmatmul.mubr.f32.gmra.mrb[0].mxu0 %v959
        %v1027 = vpop.f32.mrb[0].mxu0
        %v1028 = vadd.f32 0.0, %v1027
        %v1029 = vpop.f32.mrb[0].mxu0
        %1030 = vdwg.mxu0
        %v1031 = vrcp.pop %v953
        %v1032 = vmul.f32 %v1028, %v1031
        %1033 = vrot.lane.b32.xlu0 %v631, 96
        %v1034 = vpop.permute.xlu0 %1033
        %1035 = vrot.lane.b32.xlu0 %v633, 96
        %v1036 = vpop.permute.xlu0 %1035
        %v1037 = vsel %vm705, %v1034, 0
        %v1039 = vsel %vm705, %v1036, 0
        %1041 = vmatprep.subr.mxu0 0.0
        %1042 = vmatpush1.xpose.msra.mxu0 %v1039
        %1043 = vmatprep.subr.mxu0 0.0
        %1044 = vmatpush1.xpose.msra.mxu0 0.0
        %1045 = vmatprep.subr.mxu0 0.0
        %1046 = vmatpush1.xpose.msra.mxu0 0.0
        %1047 = vmatprep.subr.mxu0 0.0
        %1048 = vmatpush1.xpose.msra.mxu0 0.0
        %1049 = vmatprep.subr.mxu0 0.0
        %1050 = vmatpush1.xpose.msra.mxu0 0.0
        %1051 = vmatprep.subr.mxu0 0.0
        %1052 = vmatpush1.xpose.msra.mxu0 0.0
        %1053 = vmatprep.subr.mxu0 0.0
        %1054 = vmatpush1.xpose.msra.mxu0 0.0
        %1055 = vmatprep.subr.mxu0 0.0
        %1056 = vmatpush1.xpose.msra.mxu0 0.0
        %1057 = vmatprep.subr.mxu0 0.0
        %1058 = vmatpush1.xpose.msra.mxu0 0.0
        %1059 = vmatprep.subr.mxu0 0.0
        %1060 = vmatpush1.xpose.msra.mxu0 0.0
        %1061 = vmatprep.subr.mxu0 0.0
        %1062 = vmatpush1.xpose.msra.mxu0 0.0
        %1063 = vmatprep.subr.mxu0 0.0
        %1064 = vmatpush1.xpose.msra.mxu0 0.0
        %1065 = vmatprep.subr.mxu0 0.0
        %1066 = vmatpush1.xpose.msra.mxu0 0.0
        %1067 = vmatprep.subr.mxu0 0.0
        %1068 = vmatpush1.xpose.msra.mxu0 0.0
        %1069 = vmatprep.subr.mxu0 0.0
        %1070 = vmatpush1.xpose.msra.mxu0 0.0
        %1071 = vmatprep.subr.mxu0 0.0
        %1072 = vmatpush1.xpose.msra.mxu0 0.0
        %1073 = vmatprep.subr.mxu0 0.0
        %1074 = vmatpush1.xpose.msra.mxu0 0.0
        %1075 = vmatprep.subr.mxu0 0.0
        %1076 = vmatpush1.xpose.msra.mxu0 0.0
        %1077 = vmatprep.subr.mxu0 0.0
        %1078 = vmatpush1.xpose.msra.mxu0 0.0
        %1079 = vmatprep.subr.mxu0 0.0
        %1080 = vmatpush1.xpose.msra.mxu0 0.0
        %1081 = vmatprep.subr.mxu0 0.0
        %1082 = vmatpush1.xpose.msra.mxu0 0.0
        %1083 = vmatprep.subr.mxu0 0.0
        %1084 = vmatpush1.xpose.msra.mxu0 0.0
        %1085 = vmatprep.subr.mxu0 0.0
        %1086 = vmatpush1.xpose.msra.mxu0 0.0
        %1087 = vmatprep.subr.mxu0 0.0
        %1088 = vmatpush1.xpose.msra.mxu0 0.0
        %1089 = vmatprep.subr.mxu0 0.0
        %1090 = vmatpush1.xpose.msra.mxu0 0.0
        %1091 = vmatprep.subr.mxu0 0.0
        %1092 = vmatpush1.xpose.msra.mxu0 0.0
        %1093 = vmatprep.subr.mxu0 0.0
        %1094 = vmatpush1.xpose.msra.mxu0 0.0
        %1095 = vmatprep.subr.mxu0 0.0
        %1096 = vmatpush1.xpose.msra.mxu0 0.0
        %1097 = vmatprep.subr.mxu0 0.0
        %1098 = vmatpush1.xpose.msra.mxu0 0.0
        %1099 = vmatprep.subr.mxu0 0.0
        %1100 = vmatpush1.xpose.msra.mxu0 0.0
        %1101 = vmatprep.subr.mxu0 0.0
        %1102 = vmatpush1.xpose.msra.mxu0 0.0
        %1103 = vmatprep.subr.mxu0 0.0
        %1104 = vmatpush1.xpose.msra.mxu0 0.0
        %1105 = vmatprep.mubr.f32.mxu0 0.0
        %1106 = vmatmul.mubr.f32.gmra.mrb[0].mxu0 %v1037
        %v1107 = vpop.f32.mrb[0].mxu0
        %v1108 = vadd.f32 0.0, %v1107
        %v1109 = vpop.f32.mrb[0].mxu0
        %1110 = vdwg.mxu0
        %v1111 = vsel %vm782, %v1108, -inf
        %1112 = vmax.xlane.f32.xlu0 %v1111
        %v1113 = vpop.xlane.xlu0 %1112
        %v1114 = vsub.f32 %v1108, %v1113
        %v1115 = vmul.f32 %v1114, 1.442695
        %v1116 = vpow.pop %v1115
        %v1117 = vsel %vm782, %v1116, 0.0
        %1118 = vadd.xlane.f32.xlu0 %v1117
        %v1119 = vpop.xlane.xlu0 %1118
        %1120 = vrot.lane.b32.xlu0 %v702, 96
        %v1121 = vpop.permute.xlu0 %1120
        %v1124 = vsel %vm782, %v1116, 0
        %1126 = vmatprep.subr.mxu0 0.0
        %1127 = vmatpush1.msra.mxu0 %v1121
        %1128 = vmatprep.subr.mxu0 0.0
        %1129 = vmatpush1.msra.mxu0 0.0
        %1130 = vmatprep.subr.mxu0 0.0
        %1131 = vmatpush1.msra.mxu0 0.0
        %1132 = vmatprep.subr.mxu0 0.0
        %1133 = vmatpush1.msra.mxu0 0.0
        %1134 = vmatprep.subr.mxu0 0.0
        %1135 = vmatpush1.msra.mxu0 0.0
        %1136 = vmatprep.subr.mxu0 0.0
        %1137 = vmatpush1.msra.mxu0 0.0
        %1138 = vmatprep.subr.mxu0 0.0
        %1139 = vmatpush1.msra.mxu0 0.0
        %1140 = vmatprep.subr.mxu0 0.0
        %1141 = vmatpush1.msra.mxu0 0.0
        %1142 = vmatprep.subr.mxu0 0.0
        %1143 = vmatpush1.msra.mxu0 0.0
        %1144 = vmatprep.subr.mxu0 0.0
        %1145 = vmatpush1.msra.mxu0 0.0
        %1146 = vmatprep.subr.mxu0 0.0
        %1147 = vmatpush1.msra.mxu0 0.0
        %1148 = vmatprep.subr.mxu0 0.0
        %1149 = vmatpush1.msra.mxu0 0.0
        %1150 = vmatprep.subr.mxu0 0.0
        %1151 = vmatpush1.msra.mxu0 0.0
        %1152 = vmatprep.subr.mxu0 0.0
        %1153 = vmatpush1.msra.mxu0 0.0
        %1154 = vmatprep.subr.mxu0 0.0
        %1155 = vmatpush1.msra.mxu0 0.0
        %1156 = vmatprep.subr.mxu0 0.0
        %1157 = vmatpush1.msra.mxu0 0.0
        %1158 = vmatprep.subr.mxu0 0.0
        %1159 = vmatpush1.msra.mxu0 0.0
        %1160 = vmatprep.subr.mxu0 0.0
        %1161 = vmatpush1.msra.mxu0 0.0
        %1162 = vmatprep.subr.mxu0 0.0
        %1163 = vmatpush1.msra.mxu0 0.0
        %1164 = vmatprep.subr.mxu0 0.0
        %1165 = vmatpush1.msra.mxu0 0.0
        %1166 = vmatprep.subr.mxu0 0.0
        %1167 = vmatpush1.msra.mxu0 0.0
        %1168 = vmatprep.subr.mxu0 0.0
        %1169 = vmatpush1.msra.mxu0 0.0
        %1170 = vmatprep.subr.mxu0 0.0
        %1171 = vmatpush1.msra.mxu0 0.0
        %1172 = vmatprep.subr.mxu0 0.0
        %1173 = vmatpush1.msra.mxu0 0.0
        %1174 = vmatprep.subr.mxu0 0.0
        %1175 = vmatpush1.msra.mxu0 0.0
        %1176 = vmatprep.subr.mxu0 0.0
        %1177 = vmatpush1.msra.mxu0 0.0
        %1178 = vmatprep.subr.mxu0 0.0
        %1179 = vmatpush1.msra.mxu0 0.0
        %1180 = vmatprep.subr.mxu0 0.0
        %1181 = vmatpush1.msra.mxu0 0.0
        %1182 = vmatprep.subr.mxu0 0.0
        %1183 = vmatpush1.msra.mxu0 0.0
        %1184 = vmatprep.subr.mxu0 0.0
        %1185 = vmatpush1.msra.mxu0 0.0
        %1186 = vmatprep.subr.mxu0 0.0
        %1187 = vmatpush1.msra.mxu0 0.0
        %1188 = vmatprep.subr.mxu0 0.0
        %1189 = vmatpush1.msra.mxu0 0.0
        %1190 = vmatprep.mubr.f32.mxu0 0.0
        %1191 = vmatmul.mubr.f32.gmra.mrb[0].mxu0 %v1124
        %v1192 = vpop.f32.mrb[0].mxu0
        %v1193 = vadd.f32 0.0, %v1192
        %v1194 = vpop.f32.mrb[0].mxu0
        %1195 = vdwg.mxu0
        %v1196 = vrcp.pop %v1119
        %v1197 = vmul.f32 %v1193, %v1196
        %1198 = vrot.lane.b32.xlu0 %v631, 80
        %v1199 = vpop.permute.xlu0 %1198
        %1200 = vrot.lane.b32.xlu0 %v633, 80
        %v1201 = vpop.permute.xlu0 %1200
        %v1202 = vsel %vm705, %v1199, 0
        %v1204 = vsel %vm705, %v1201, 0
        %1206 = vmatprep.subr.mxu0 0.0
        %1207 = vmatpush1.xpose.msra.mxu0 %v1204
        %1208 = vmatprep.subr.mxu0 0.0
        %1209 = vmatpush1.xpose.msra.mxu0 0.0
        %1210 = vmatprep.subr.mxu0 0.0
        %1211 = vmatpush1.xpose.msra.mxu0 0.0
        %1212 = vmatprep.subr.mxu0 0.0
        %1213 = vmatpush1.xpose.msra.mxu0 0.0
        %1214 = vmatprep.subr.mxu0 0.0
        %1215 = vmatpush1.xpose.msra.mxu0 0.0
        %1216 = vmatprep.subr.mxu0 0.0
        %1217 = vmatpush1.xpose.msra.mxu0 0.0
        %1218 = vmatprep.subr.mxu0 0.0
        %1219 = vmatpush1.xpose.msra.mxu0 0.0
        %1220 = vmatprep.subr.mxu0 0.0
        %1221 = vmatpush1.xpose.msra.mxu0 0.0
        %1222 = vmatprep.subr.mxu0 0.0
        %1223 = vmatpush1.xpose.msra.mxu0 0.0
        %1224 = vmatprep.subr.mxu0 0.0
        %1225 = vmatpush1.xpose.msra.mxu0 0.0
        %1226 = vmatprep.subr.mxu0 0.0
        %1227 = vmatpush1.xpose.msra.mxu0 0.0
        %1228 = vmatprep.subr.mxu0 0.0
        %1229 = vmatpush1.xpose.msra.mxu0 0.0
        %1230 = vmatprep.subr.mxu0 0.0
        %1231 = vmatpush1.xpose.msra.mxu0 0.0
        %1232 = vmatprep.subr.mxu0 0.0
        %1233 = vmatpush1.xpose.msra.mxu0 0.0
        %1234 = vmatprep.subr.mxu0 0.0
        %1235 = vmatpush1.xpose.msra.mxu0 0.0
        %1236 = vmatprep.subr.mxu0 0.0
        %1237 = vmatpush1.xpose.msra.mxu0 0.0
        %1238 = vmatprep.subr.mxu0 0.0
        %1239 = vmatpush1.xpose.msra.mxu0 0.0
        %1240 = vmatprep.subr.mxu0 0.0
        %1241 = vmatpush1.xpose.msra.mxu0 0.0
        %1242 = vmatprep.subr.mxu0 0.0
        %1243 = vmatpush1.xpose.msra.mxu0 0.0
        %1244 = vmatprep.subr.mxu0 0.0
        %1245 = vmatpush1.xpose.msra.mxu0 0.0
        %1246 = vmatprep.subr.mxu0 0.0
        %1247 = vmatpush1.xpose.msra.mxu0 0.0
        %1248 = vmatprep.subr.mxu0 0.0
        %1249 = vmatpush1.xpose.msra.mxu0 0.0
        %1250 = vmatprep.subr.mxu0 0.0
        %1251 = vmatpush1.xpose.msra.mxu0 0.0
        %1252 = vmatprep.subr.mxu0 0.0
        %1253 = vmatpush1.xpose.msra.mxu0 0.0
        %1254 = vmatprep.subr.mxu0 0.0
        %1255 = vmatpush1.xpose.msra.mxu0 0.0
        %1256 = vmatprep.subr.mxu0 0.0
        %1257 = vmatpush1.xpose.msra.mxu0 0.0
        %1258 = vmatprep.subr.mxu0 0.0
        %1259 = vmatpush1.xpose.msra.mxu0 0.0
        %1260 = vmatprep.subr.mxu0 0.0
        %1261 = vmatpush1.xpose.msra.mxu0 0.0
        %1262 = vmatprep.subr.mxu0 0.0
        %1263 = vmatpush1.xpose.msra.mxu0 0.0
        %1264 = vmatprep.subr.mxu0 0.0
        %1265 = vmatpush1.xpose.msra.mxu0 0.0
        %1266 = vmatprep.subr.mxu0 0.0
        %1267 = vmatpush1.xpose.msra.mxu0 0.0
        %1268 = vmatprep.subr.mxu0 0.0
        %1269 = vmatpush1.xpose.msra.mxu0 0.0
        %1270 = vmatprep.mubr.f32.mxu0 0.0
        %1271 = vmatmul.mubr.f32.gmra.mrb[0].mxu0 %v1202
        %v1272 = vpop.f32.mrb[0].mxu0
        %v1273 = vadd.f32 0.0, %v1272
        %v1274 = vpop.f32.mrb[0].mxu0
        %1275 = vdwg.mxu0
        %v1276 = vsel %vm782, %v1273, -inf
        %1277 = vmax.xlane.f32.xlu0 %v1276
        %v1278 = vpop.xlane.xlu0 %1277
        %v1279 = vsub.f32 %v1273, %v1278
        %v1280 = vmul.f32 %v1279, 1.442695
        %v1281 = vpow.pop %v1280
        %v1282 = vsel %vm782, %v1281, 0.0
        %1283 = vadd.xlane.f32.xlu0 %v1282
        %v1284 = vpop.xlane.xlu0 %1283
        %1285 = vrot.lane.b32.xlu0 %v702, 80
        %v1286 = vpop.permute.xlu0 %1285
        %v1289 = vsel %vm782, %v1281, 0
        %1291 = vmatprep.subr.mxu0 0.0
        %1292 = vmatpush1.msra.mxu0 %v1286
        %1293 = vmatprep.subr.mxu0 0.0
        %1294 = vmatpush1.msra.mxu0 0.0
        %1295 = vmatprep.subr.mxu0 0.0
        %1296 = vmatpush1.msra.mxu0 0.0
        %1297 = vmatprep.subr.mxu0 0.0
        %1298 = vmatpush1.msra.mxu0 0.0
        %1299 = vmatprep.subr.mxu0 0.0
        %1300 = vmatpush1.msra.mxu0 0.0
        %1301 = vmatprep.subr.mxu0 0.0
        %1302 = vmatpush1.msra.mxu0 0.0
        %1303 = vmatprep.subr.mxu0 0.0
        %1304 = vmatpush1.msra.mxu0 0.0
        %1305 = vmatprep.subr.mxu0 0.0
        %1306 = vmatpush1.msra.mxu0 0.0
        %1307 = vmatprep.subr.mxu0 0.0
        %1308 = vmatpush1.msra.mxu0 0.0
        %1309 = vmatprep.subr.mxu0 0.0
        %1310 = vmatpush1.msra.mxu0 0.0
        %1311 = vmatprep.subr.mxu0 0.0
        %1312 = vmatpush1.msra.mxu0 0.0
        %1313 = vmatprep.subr.mxu0 0.0
        %1314 = vmatpush1.msra.mxu0 0.0
        %1315 = vmatprep.subr.mxu0 0.0
        %1316 = vmatpush1.msra.mxu0 0.0
        %1317 = vmatprep.subr.mxu0 0.0
        %1318 = vmatpush1.msra.mxu0 0.0
        %1319 = vmatprep.subr.mxu0 0.0
        %1320 = vmatpush1.msra.mxu0 0.0
        %1321 = vmatprep.subr.mxu0 0.0
        %1322 = vmatpush1.msra.mxu0 0.0
        %1323 = vmatprep.subr.mxu0 0.0
        %1324 = vmatpush1.msra.mxu0 0.0
        %1325 = vmatprep.subr.mxu0 0.0
        %1326 = vmatpush1.msra.mxu0 0.0
        %1327 = vmatprep.subr.mxu0 0.0
        %1328 = vmatpush1.msra.mxu0 0.0
        %1329 = vmatprep.subr.mxu0 0.0
        %1330 = vmatpush1.msra.mxu0 0.0
        %1331 = vmatprep.subr.mxu0 0.0
        %1332 = vmatpush1.msra.mxu0 0.0
        %1333 = vmatprep.subr.mxu0 0.0
        %1334 = vmatpush1.msra.mxu0 0.0
        %1335 = vmatprep.subr.mxu0 0.0
        %1336 = vmatpush1.msra.mxu0 0.0
        %1337 = vmatprep.subr.mxu0 0.0
        %1338 = vmatpush1.msra.mxu0 0.0
        %1339 = vmatprep.subr.mxu0 0.0
        %1340 = vmatpush1.msra.mxu0 0.0
        %1341 = vmatprep.subr.mxu0 0.0
        %1342 = vmatpush1.msra.mxu0 0.0
        %1343 = vmatprep.subr.mxu0 0.0
        %1344 = vmatpush1.msra.mxu0 0.0
        %1345 = vmatprep.subr.mxu0 0.0
        %1346 = vmatpush1.msra.mxu0 0.0
        %1347 = vmatprep.subr.mxu0 0.0
        %1348 = vmatpush1.msra.mxu0 0.0
        %1349 = vmatprep.subr.mxu0 0.0
        %1350 = vmatpush1.msra.mxu0 0.0
        %1351 = vmatprep.subr.mxu0 0.0
        %1352 = vmatpush1.msra.mxu0 0.0
        %1353 = vmatprep.subr.mxu0 0.0
        %1354 = vmatpush1.msra.mxu0 0.0
        %1355 = vmatprep.mubr.f32.mxu0 0.0
        %1356 = vmatmul.mubr.f32.gmra.mrb[0].mxu0 %v1289
        %v1357 = vpop.f32.mrb[0].mxu0
        %v1358 = vadd.f32 0.0, %v1357
        %v1359 = vpop.f32.mrb[0].mxu0
        %1360 = vdwg.mxu0
        %v1361 = vrcp.pop %v1284
        %v1362 = vmul.f32 %v1358, %v1361
        %1363 = vrot.lane.b32.xlu0 %v631, 64
        %v1364 = vpop.permute.xlu0 %1363
        %1365 = vrot.lane.b32.xlu0 %v633, 64
        %v1366 = vpop.permute.xlu0 %1365
        %v1367 = vsel %vm705, %v1364, 0
        %v1369 = vsel %vm705, %v1366, 0
        %1371 = vmatprep.subr.mxu0 0.0
        %1372 = vmatpush1.xpose.msra.mxu0 %v1369
        %1373 = vmatprep.subr.mxu0 0.0
        %1374 = vmatpush1.xpose.msra.mxu0 0.0
        %1375 = vmatprep.subr.mxu0 0.0
        %1376 = vmatpush1.xpose.msra.mxu0 0.0
        %1377 = vmatprep.subr.mxu0 0.0
        %1378 = vmatpush1.xpose.msra.mxu0 0.0
        %1379 = vmatprep.subr.mxu0 0.0
        %1380 = vmatpush1.xpose.msra.mxu0 0.0
        %1381 = vmatprep.subr.mxu0 0.0
        %1382 = vmatpush1.xpose.msra.mxu0 0.0
        %1383 = vmatprep.subr.mxu0 0.0
        %1384 = vmatpush1.xpose.msra.mxu0 0.0
        %1385 = vmatprep.subr.mxu0 0.0
        %1386 = vmatpush1.xpose.msra.mxu0 0.0
        %1387 = vmatprep.subr.mxu0 0.0
        %1388 = vmatpush1.xpose.msra.mxu0 0.0
        %1389 = vmatprep.subr.mxu0 0.0
        %1390 = vmatpush1.xpose.msra.mxu0 0.0
        %1391 = vmatprep.subr.mxu0 0.0
        %1392 = vmatpush1.xpose.msra.mxu0 0.0
        %1393 = vmatprep.subr.mxu0 0.0
        %1394 = vmatpush1.xpose.msra.mxu0 0.0
        %1395 = vmatprep.subr.mxu0 0.0
        %1396 = vmatpush1.xpose.msra.mxu0 0.0
        %1397 = vmatprep.subr.mxu0 0.0
        %1398 = vmatpush1.xpose.msra.mxu0 0.0
        %1399 = vmatprep.subr.mxu0 0.0
        %1400 = vmatpush1.xpose.msra.mxu0 0.0
        %1401 = vmatprep.subr.mxu0 0.0
        %1402 = vmatpush1.xpose.msra.mxu0 0.0
        %1403 = vmatprep.subr.mxu0 0.0
        %1404 = vmatpush1.xpose.msra.mxu0 0.0
        %1405 = vmatprep.subr.mxu0 0.0
        %1406 = vmatpush1.xpose.msra.mxu0 0.0
        %1407 = vmatprep.subr.mxu0 0.0
        %1408 = vmatpush1.xpose.msra.mxu0 0.0
        %1409 = vmatprep.subr.mxu0 0.0
        %1410 = vmatpush1.xpose.msra.mxu0 0.0
        %1411 = vmatprep.subr.mxu0 0.0
        %1412 = vmatpush1.xpose.msra.mxu0 0.0
        %1413 = vmatprep.subr.mxu0 0.0
        %1414 = vmatpush1.xpose.msra.mxu0 0.0
        %1415 = vmatprep.subr.mxu0 0.0
        %1416 = vmatpush1.xpose.msra.mxu0 0.0
        %1417 = vmatprep.subr.mxu0 0.0
        %1418 = vmatpush1.xpose.msra.mxu0 0.0
        %1419 = vmatprep.subr.mxu0 0.0
        %1420 = vmatpush1.xpose.msra.mxu0 0.0
        %1421 = vmatprep.subr.mxu0 0.0
        %1422 = vmatpush1.xpose.msra.mxu0 0.0
        %1423 = vmatprep.subr.mxu0 0.0
        %1424 = vmatpush1.xpose.msra.mxu0 0.0
        %1425 = vmatprep.subr.mxu0 0.0
        %1426 = vmatpush1.xpose.msra.mxu0 0.0
        %1427 = vmatprep.subr.mxu0 0.0
        %1428 = vmatpush1.xpose.msra.mxu0 0.0
        %1429 = vmatprep.subr.mxu0 0.0
        %1430 = vmatpush1.xpose.msra.mxu0 0.0
        %1431 = vmatprep.subr.mxu0 0.0
        %1432 = vmatpush1.xpose.msra.mxu0 0.0
        %1433 = vmatprep.subr.mxu0 0.0
        %1434 = vmatpush1.xpose.msra.mxu0 0.0
        %1435 = vmatprep.mubr.f32.mxu0 0.0
        %1436 = vmatmul.mubr.f32.gmra.mrb[0].mxu0 %v1367
        %v1437 = vpop.f32.mrb[0].mxu0
        %v1438 = vadd.f32 0.0, %v1437
        %v1439 = vpop.f32.mrb[0].mxu0
        %1440 = vdwg.mxu0
        %v1441 = vsel %vm782, %v1438, -inf
        %1442 = vmax.xlane.f32.xlu0 %v1441
        %v1443 = vpop.xlane.xlu0 %1442
        %v1444 = vsub.f32 %v1438, %v1443
        %v1445 = vmul.f32 %v1444, 1.442695
        %v1446 = vpow.pop %v1445
        %v1447 = vsel %vm782, %v1446, 0.0
        %1448 = vadd.xlane.f32.xlu0 %v1447
        %v1449 = vpop.xlane.xlu0 %1448
        %1450 = vrot.lane.b32.xlu0 %v702, 64
        %v1451 = vpop.permute.xlu0 %1450
        %v1454 = vsel %vm782, %v1446, 0
        %1456 = vmatprep.subr.mxu0 0.0
        %1457 = vmatpush1.msra.mxu0 %v1451
        %1458 = vmatprep.subr.mxu0 0.0
        %1459 = vmatpush1.msra.mxu0 0.0
        %1460 = vmatprep.subr.mxu0 0.0
        %1461 = vmatpush1.msra.mxu0 0.0
        %1462 = vmatprep.subr.mxu0 0.0
        %1463 = vmatpush1.msra.mxu0 0.0
        %1464 = vmatprep.subr.mxu0 0.0
        %1465 = vmatpush1.msra.mxu0 0.0
        %1466 = vmatprep.subr.mxu0 0.0
        %1467 = vmatpush1.msra.mxu0 0.0
        %1468 = vmatprep.subr.mxu0 0.0
        %1469 = vmatpush1.msra.mxu0 0.0
        %1470 = vmatprep.subr.mxu0 0.0
        %1471 = vmatpush1.msra.mxu0 0.0
        %1472 = vmatprep.subr.mxu0 0.0
        %1473 = vmatpush1.msra.mxu0 0.0
        %1474 = vmatprep.subr.mxu0 0.0
        %1475 = vmatpush1.msra.mxu0 0.0
        %1476 = vmatprep.subr.mxu0 0.0
        %1477 = vmatpush1.msra.mxu0 0.0
        %1478 = vmatprep.subr.mxu0 0.0
        %1479 = vmatpush1.msra.mxu0 0.0
        %1480 = vmatprep.subr.mxu0 0.0
        %1481 = vmatpush1.msra.mxu0 0.0
        %1482 = vmatprep.subr.mxu0 0.0
        %1483 = vmatpush1.msra.mxu0 0.0
        %1484 = vmatprep.subr.mxu0 0.0
        %1485 = vmatpush1.msra.mxu0 0.0
        %1486 = vmatprep.subr.mxu0 0.0
        %1487 = vmatpush1.msra.mxu0 0.0
        %1488 = vmatprep.subr.mxu0 0.0
        %1489 = vmatpush1.msra.mxu0 0.0
        %1490 = vmatprep.subr.mxu0 0.0
        %1491 = vmatpush1.msra.mxu0 0.0
        %1492 = vmatprep.subr.mxu0 0.0
        %1493 = vmatpush1.msra.mxu0 0.0
        %1494 = vmatprep.subr.mxu0 0.0
        %1495 = vmatpush1.msra.mxu0 0.0
        %1496 = vmatprep.subr.mxu0 0.0
        %1497 = vmatpush1.msra.mxu0 0.0
        %1498 = vmatprep.subr.mxu0 0.0
        %1499 = vmatpush1.msra.mxu0 0.0
        %1500 = vmatprep.subr.mxu0 0.0
        %1501 = vmatpush1.msra.mxu0 0.0
        %1502 = vmatprep.subr.mxu0 0.0
        %1503 = vmatpush1.msra.mxu0 0.0
        %1504 = vmatprep.subr.mxu0 0.0
        %1505 = vmatpush1.msra.mxu0 0.0
        %1506 = vmatprep.subr.mxu0 0.0
        %1507 = vmatpush1.msra.mxu0 0.0
        %1508 = vmatprep.subr.mxu0 0.0
        %1509 = vmatpush1.msra.mxu0 0.0
        %1510 = vmatprep.subr.mxu0 0.0
        %1511 = vmatpush1.msra.mxu0 0.0
        %1512 = vmatprep.subr.mxu0 0.0
        %1513 = vmatpush1.msra.mxu0 0.0
        %1514 = vmatprep.subr.mxu0 0.0
        %1515 = vmatpush1.msra.mxu0 0.0
        %1516 = vmatprep.subr.mxu0 0.0
        %1517 = vmatpush1.msra.mxu0 0.0
        %1518 = vmatprep.subr.mxu0 0.0
        %1519 = vmatpush1.msra.mxu0 0.0
        %1520 = vmatprep.mubr.f32.mxu0 0.0
        %1521 = vmatmul.mubr.f32.gmra.mrb[0].mxu0 %v1454
        %v1522 = vpop.f32.mrb[0].mxu0
        %v1523 = vadd.f32 0.0, %v1522
        %v1524 = vpop.f32.mrb[0].mxu0
        %1525 = vdwg.mxu0
        %v1526 = vrcp.pop %v1449
        %v1527 = vmul.f32 %v1523, %v1526
        %1528 = vrot.lane.b32.xlu0 %v631, 48
        %v1529 = vpop.permute.xlu0 %1528
        %1530 = vrot.lane.b32.xlu0 %v633, 48
        %v1531 = vpop.permute.xlu0 %1530
        %v1532 = vsel %vm705, %v1529, 0
        %v1534 = vsel %vm705, %v1531, 0
        %1536 = vmatprep.subr.mxu0 0.0
        %1537 = vmatpush1.xpose.msra.mxu0 %v1534
        %1538 = vmatprep.subr.mxu0 0.0
        %1539 = vmatpush1.xpose.msra.mxu0 0.0
        %1540 = vmatprep.subr.mxu0 0.0
        %1541 = vmatpush1.xpose.msra.mxu0 0.0
        %1542 = vmatprep.subr.mxu0 0.0
        %1543 = vmatpush1.xpose.msra.mxu0 0.0
        %1544 = vmatprep.subr.mxu0 0.0
        %1545 = vmatpush1.xpose.msra.mxu0 0.0
        %1546 = vmatprep.subr.mxu0 0.0
        %1547 = vmatpush1.xpose.msra.mxu0 0.0
        %1548 = vmatprep.subr.mxu0 0.0
        %1549 = vmatpush1.xpose.msra.mxu0 0.0
        %1550 = vmatprep.subr.mxu0 0.0
        %1551 = vmatpush1.xpose.msra.mxu0 0.0
        %1552 = vmatprep.subr.mxu0 0.0
        %1553 = vmatpush1.xpose.msra.mxu0 0.0
        %1554 = vmatprep.subr.mxu0 0.0
        %1555 = vmatpush1.xpose.msra.mxu0 0.0
        %1556 = vmatprep.subr.mxu0 0.0
        %1557 = vmatpush1.xpose.msra.mxu0 0.0
        %1558 = vmatprep.subr.mxu0 0.0
        %1559 = vmatpush1.xpose.msra.mxu0 0.0
        %1560 = vmatprep.subr.mxu0 0.0
        %1561 = vmatpush1.xpose.msra.mxu0 0.0
        %1562 = vmatprep.subr.mxu0 0.0
        %1563 = vmatpush1.xpose.msra.mxu0 0.0
        %1564 = vmatprep.subr.mxu0 0.0
        %1565 = vmatpush1.xpose.msra.mxu0 0.0
        %1566 = vmatprep.subr.mxu0 0.0
        %1567 = vmatpush1.xpose.msra.mxu0 0.0
        %1568 = vmatprep.subr.mxu0 0.0
        %1569 = vmatpush1.xpose.msra.mxu0 0.0
        %1570 = vmatprep.subr.mxu0 0.0
        %1571 = vmatpush1.xpose.msra.mxu0 0.0
        %1572 = vmatprep.subr.mxu0 0.0
        %1573 = vmatpush1.xpose.msra.mxu0 0.0
        %1574 = vmatprep.subr.mxu0 0.0
        %1575 = vmatpush1.xpose.msra.mxu0 0.0
        %1576 = vmatprep.subr.mxu0 0.0
        %1577 = vmatpush1.xpose.msra.mxu0 0.0
        %1578 = vmatprep.subr.mxu0 0.0
        %1579 = vmatpush1.xpose.msra.mxu0 0.0
        %1580 = vmatprep.subr.mxu0 0.0
        %1581 = vmatpush1.xpose.msra.mxu0 0.0
        %1582 = vmatprep.subr.mxu0 0.0
        %1583 = vmatpush1.xpose.msra.mxu0 0.0
        %1584 = vmatprep.subr.mxu0 0.0
        %1585 = vmatpush1.xpose.msra.mxu0 0.0
        %1586 = vmatprep.subr.mxu0 0.0
        %1587 = vmatpush1.xpose.msra.mxu0 0.0
        %1588 = vmatprep.subr.mxu0 0.0
        %1589 = vmatpush1.xpose.msra.mxu0 0.0
        %1590 = vmatprep.subr.mxu0 0.0
        %1591 = vmatpush1.xpose.msra.mxu0 0.0
        %1592 = vmatprep.subr.mxu0 0.0
        %1593 = vmatpush1.xpose.msra.mxu0 0.0
        %1594 = vmatprep.subr.mxu0 0.0
        %1595 = vmatpush1.xpose.msra.mxu0 0.0
        %1596 = vmatprep.subr.mxu0 0.0
        %1597 = vmatpush1.xpose.msra.mxu0 0.0
        %1598 = vmatprep.subr.mxu0 0.0
        %1599 = vmatpush1.xpose.msra.mxu0 0.0
        %1600 = vmatprep.mubr.f32.mxu0 0.0
        %1601 = vmatmul.mubr.f32.gmra.mrb[0].mxu0 %v1532
        %v1602 = vpop.f32.mrb[0].mxu0
        %v1603 = vadd.f32 0.0, %v1602
        %v1604 = vpop.f32.mrb[0].mxu0
        %1605 = vdwg.mxu0
        %v1606 = vsel %vm782, %v1603, -inf
        %1607 = vmax.xlane.f32.xlu0 %v1606
        %v1608 = vpop.xlane.xlu0 %1607
        %v1609 = vsub.f32 %v1603, %v1608
        %v1610 = vmul.f32 %v1609, 1.442695
        %v1611 = vpow.pop %v1610
        %v1612 = vsel %vm782, %v1611, 0.0
        %1613 = vadd.xlane.f32.xlu0 %v1612
        %v1614 = vpop.xlane.xlu0 %1613
        %1615 = vrot.lane.b32.xlu0 %v702, 48
        %v1616 = vpop.permute.xlu0 %1615
        %v1619 = vsel %vm782, %v1611, 0
        %1621 = vmatprep.subr.mxu0 0.0
        %1622 = vmatpush1.msra.mxu0 %v1616
        %1623 = vmatprep.subr.mxu0 0.0
        %1624 = vmatpush1.msra.mxu0 0.0
        %1625 = vmatprep.subr.mxu0 0.0
        %1626 = vmatpush1.msra.mxu0 0.0
        %1627 = vmatprep.subr.mxu0 0.0
        %1628 = vmatpush1.msra.mxu0 0.0
        %1629 = vmatprep.subr.mxu0 0.0
        %1630 = vmatpush1.msra.mxu0 0.0
        %1631 = vmatprep.subr.mxu0 0.0
        %1632 = vmatpush1.msra.mxu0 0.0
        %1633 = vmatprep.subr.mxu0 0.0
        %1634 = vmatpush1.msra.mxu0 0.0
        %1635 = vmatprep.subr.mxu0 0.0
        %1636 = vmatpush1.msra.mxu0 0.0
        %1637 = vmatprep.subr.mxu0 0.0
        %1638 = vmatpush1.msra.mxu0 0.0
        %1639 = vmatprep.subr.mxu0 0.0
        %1640 = vmatpush1.msra.mxu0 0.0
        %1641 = vmatprep.subr.mxu0 0.0
        %1642 = vmatpush1.msra.mxu0 0.0
        %1643 = vmatprep.subr.mxu0 0.0
        %1644 = vmatpush1.msra.mxu0 0.0
        %1645 = vmatprep.subr.mxu0 0.0
        %1646 = vmatpush1.msra.mxu0 0.0
        %1647 = vmatprep.subr.mxu0 0.0
        %1648 = vmatpush1.msra.mxu0 0.0
        %1649 = vmatprep.subr.mxu0 0.0
        %1650 = vmatpush1.msra.mxu0 0.0
        %1651 = vmatprep.subr.mxu0 0.0
        %1652 = vmatpush1.msra.mxu0 0.0
        %1653 = vmatprep.subr.mxu0 0.0
        %1654 = vmatpush1.msra.mxu0 0.0
        %1655 = vmatprep.subr.mxu0 0.0
        %1656 = vmatpush1.msra.mxu0 0.0
        %1657 = vmatprep.subr.mxu0 0.0
        %1658 = vmatpush1.msra.mxu0 0.0
        %1659 = vmatprep.subr.mxu0 0.0
        %1660 = vmatpush1.msra.mxu0 0.0
        %1661 = vmatprep.subr.mxu0 0.0
        %1662 = vmatpush1.msra.mxu0 0.0
        %1663 = vmatprep.subr.mxu0 0.0
        %1664 = vmatpush1.msra.mxu0 0.0
        %1665 = vmatprep.subr.mxu0 0.0
        %1666 = vmatpush1.msra.mxu0 0.0
        %1667 = vmatprep.subr.mxu0 0.0
        %1668 = vmatpush1.msra.mxu0 0.0
        %1669 = vmatprep.subr.mxu0 0.0
        %1670 = vmatpush1.msra.mxu0 0.0
        %1671 = vmatprep.subr.mxu0 0.0
        %1672 = vmatpush1.msra.mxu0 0.0
        %1673 = vmatprep.subr.mxu0 0.0
        %1674 = vmatpush1.msra.mxu0 0.0
        %1675 = vmatprep.subr.mxu0 0.0
        %1676 = vmatpush1.msra.mxu0 0.0
        %1677 = vmatprep.subr.mxu0 0.0
        %1678 = vmatpush1.msra.mxu0 0.0
        %1679 = vmatprep.subr.mxu0 0.0
        %1680 = vmatpush1.msra.mxu0 0.0
        %1681 = vmatprep.subr.mxu0 0.0
        %1682 = vmatpush1.msra.mxu0 0.0
        %1683 = vmatprep.subr.mxu0 0.0
        %1684 = vmatpush1.msra.mxu0 0.0
        %1685 = vmatprep.mubr.f32.mxu0 0.0
        %1686 = vmatmul.mubr.f32.gmra.mrb[0].mxu0 %v1619
        %v1687 = vpop.f32.mrb[0].mxu0
        %v1688 = vadd.f32 0.0, %v1687
        %v1689 = vpop.f32.mrb[0].mxu0
        %1690 = vdwg.mxu0
        %v1691 = vrcp.pop %v1614
        %v1692 = vmul.f32 %v1688, %v1691
        %1693 = vrot.lane.b32.xlu0 %v631, 32
        %v1694 = vpop.permute.xlu0 %1693
        %1695 = vrot.lane.b32.xlu0 %v633, 32
        %v1696 = vpop.permute.xlu0 %1695
        %v1697 = vsel %vm705, %v1694, 0
        %v1699 = vsel %vm705, %v1696, 0
        %1701 = vmatprep.subr.mxu0 0.0
        %1702 = vmatpush1.xpose.msra.mxu0 %v1699
        %1703 = vmatprep.subr.mxu0 0.0
        %1704 = vmatpush1.xpose.msra.mxu0 0.0
        %1705 = vmatprep.subr.mxu0 0.0
        %1706 = vmatpush1.xpose.msra.mxu0 0.0
        %1707 = vmatprep.subr.mxu0 0.0
        %1708 = vmatpush1.xpose.msra.mxu0 0.0
        %1709 = vmatprep.subr.mxu0 0.0
        %1710 = vmatpush1.xpose.msra.mxu0 0.0
        %1711 = vmatprep.subr.mxu0 0.0
        %1712 = vmatpush1.xpose.msra.mxu0 0.0
        %1713 = vmatprep.subr.mxu0 0.0
        %1714 = vmatpush1.xpose.msra.mxu0 0.0
        %1715 = vmatprep.subr.mxu0 0.0
        %1716 = vmatpush1.xpose.msra.mxu0 0.0
        %1717 = vmatprep.subr.mxu0 0.0
        %1718 = vmatpush1.xpose.msra.mxu0 0.0
        %1719 = vmatprep.subr.mxu0 0.0
        %1720 = vmatpush1.xpose.msra.mxu0 0.0
        %1721 = vmatprep.subr.mxu0 0.0
        %1722 = vmatpush1.xpose.msra.mxu0 0.0
        %1723 = vmatprep.subr.mxu0 0.0
        %1724 = vmatpush1.xpose.msra.mxu0 0.0
        %1725 = vmatprep.subr.mxu0 0.0
        %1726 = vmatpush1.xpose.msra.mxu0 0.0
        %1727 = vmatprep.subr.mxu0 0.0
        %1728 = vmatpush1.xpose.msra.mxu0 0.0
        %1729 = vmatprep.subr.mxu0 0.0
        %1730 = vmatpush1.xpose.msra.mxu0 0.0
        %1731 = vmatprep.subr.mxu0 0.0
        %1732 = vmatpush1.xpose.msra.mxu0 0.0
        %1733 = vmatprep.subr.mxu0 0.0
        %1734 = vmatpush1.xpose.msra.mxu0 0.0
        %1735 = vmatprep.subr.mxu0 0.0
        %1736 = vmatpush1.xpose.msra.mxu0 0.0
        %1737 = vmatprep.subr.mxu0 0.0
        %1738 = vmatpush1.xpose.msra.mxu0 0.0
        %1739 = vmatprep.subr.mxu0 0.0
        %1740 = vmatpush1.xpose.msra.mxu0 0.0
        %1741 = vmatprep.subr.mxu0 0.0
        %1742 = vmatpush1.xpose.msra.mxu0 0.0
        %1743 = vmatprep.subr.mxu0 0.0
        %1744 = vmatpush1.xpose.msra.mxu0 0.0
        %1745 = vmatprep.subr.mxu0 0.0
        %1746 = vmatpush1.xpose.msra.mxu0 0.0
        %1747 = vmatprep.subr.mxu0 0.0
        %1748 = vmatpush1.xpose.msra.mxu0 0.0
        %1749 = vmatprep.subr.mxu0 0.0
        %1750 = vmatpush1.xpose.msra.mxu0 0.0
        %1751 = vmatprep.subr.mxu0 0.0
        %1752 = vmatpush1.xpose.msra.mxu0 0.0
        %1753 = vmatprep.subr.mxu0 0.0
        %1754 = vmatpush1.xpose.msra.mxu0 0.0
        %1755 = vmatprep.subr.mxu0 0.0
        %1756 = vmatpush1.xpose.msra.mxu0 0.0
        %1757 = vmatprep.subr.mxu0 0.0
        %1758 = vmatpush1.xpose.msra.mxu0 0.0
        %1759 = vmatprep.subr.mxu0 0.0
        %1760 = vmatpush1.xpose.msra.mxu0 0.0
        %1761 = vmatprep.subr.mxu0 0.0
        %1762 = vmatpush1.xpose.msra.mxu0 0.0
        %1763 = vmatprep.subr.mxu0 0.0
        %1764 = vmatpush1.xpose.msra.mxu0 0.0
        %1765 = vmatprep.mubr.f32.mxu0 0.0
        %1766 = vmatmul.mubr.f32.gmra.mrb[0].mxu0 %v1697
        %v1767 = vpop.f32.mrb[0].mxu0
        %v1768 = vadd.f32 0.0, %v1767
        %v1769 = vpop.f32.mrb[0].mxu0
        %1770 = vdwg.mxu0
        %v1771 = vsel %vm782, %v1768, -inf
        %1772 = vmax.xlane.f32.xlu0 %v1771
        %v1773 = vpop.xlane.xlu0 %1772
        %v1774 = vsub.f32 %v1768, %v1773
        %v1775 = vmul.f32 %v1774, 1.442695
        %v1776 = vpow.pop %v1775
        %v1777 = vsel %vm782, %v1776, 0.0
        %1778 = vadd.xlane.f32.xlu0 %v1777
        %v1779 = vpop.xlane.xlu0 %1778
        %1780 = vrot.lane.b32.xlu0 %v702, 32
        %v1781 = vpop.permute.xlu0 %1780
        %v1784 = vsel %vm782, %v1776, 0
        %1786 = vmatprep.subr.mxu0 0.0
        %1787 = vmatpush1.msra.mxu0 %v1781
        %1788 = vmatprep.subr.mxu0 0.0
        %1789 = vmatpush1.msra.mxu0 0.0
        %1790 = vmatprep.subr.mxu0 0.0
        %1791 = vmatpush1.msra.mxu0 0.0
        %1792 = vmatprep.subr.mxu0 0.0
        %1793 = vmatpush1.msra.mxu0 0.0
        %1794 = vmatprep.subr.mxu0 0.0
        %1795 = vmatpush1.msra.mxu0 0.0
        %1796 = vmatprep.subr.mxu0 0.0
        %1797 = vmatpush1.msra.mxu0 0.0
        %1798 = vmatprep.subr.mxu0 0.0
        %1799 = vmatpush1.msra.mxu0 0.0
        %1800 = vmatprep.subr.mxu0 0.0
        %1801 = vmatpush1.msra.mxu0 0.0
        %1802 = vmatprep.subr.mxu0 0.0
        %1803 = vmatpush1.msra.mxu0 0.0
        %1804 = vmatprep.subr.mxu0 0.0
        %1805 = vmatpush1.msra.mxu0 0.0
        %1806 = vmatprep.subr.mxu0 0.0
        %1807 = vmatpush1.msra.mxu0 0.0
        %1808 = vmatprep.subr.mxu0 0.0
        %1809 = vmatpush1.msra.mxu0 0.0
        %1810 = vmatprep.subr.mxu0 0.0
        %1811 = vmatpush1.msra.mxu0 0.0
        %1812 = vmatprep.subr.mxu0 0.0
        %1813 = vmatpush1.msra.mxu0 0.0
        %1814 = vmatprep.subr.mxu0 0.0
        %1815 = vmatpush1.msra.mxu0 0.0
        %1816 = vmatprep.subr.mxu0 0.0
        %1817 = vmatpush1.msra.mxu0 0.0
        %1818 = vmatprep.subr.mxu0 0.0
        %1819 = vmatpush1.msra.mxu0 0.0
        %1820 = vmatprep.subr.mxu0 0.0
        %1821 = vmatpush1.msra.mxu0 0.0
        %1822 = vmatprep.subr.mxu0 0.0
        %1823 = vmatpush1.msra.mxu0 0.0
        %1824 = vmatprep.subr.mxu0 0.0
        %1825 = vmatpush1.msra.mxu0 0.0
        %1826 = vmatprep.subr.mxu0 0.0
        %1827 = vmatpush1.msra.mxu0 0.0
        %1828 = vmatprep.subr.mxu0 0.0
        %1829 = vmatpush1.msra.mxu0 0.0
        %1830 = vmatprep.subr.mxu0 0.0
        %1831 = vmatpush1.msra.mxu0 0.0
        %1832 = vmatprep.subr.mxu0 0.0
        %1833 = vmatpush1.msra.mxu0 0.0
        %1834 = vmatprep.subr.mxu0 0.0
        %1835 = vmatpush1.msra.mxu0 0.0
        %1836 = vmatprep.subr.mxu0 0.0
        %1837 = vmatpush1.msra.mxu0 0.0
        %1838 = vmatprep.subr.mxu0 0.0
        %1839 = vmatpush1.msra.mxu0 0.0
        %1840 = vmatprep.subr.mxu0 0.0
        %1841 = vmatpush1.msra.mxu0 0.0
        %1842 = vmatprep.subr.mxu0 0.0
        %1843 = vmatpush1.msra.mxu0 0.0
        %1844 = vmatprep.subr.mxu0 0.0
        %1845 = vmatpush1.msra.mxu0 0.0
        %1846 = vmatprep.subr.mxu0 0.0
        %1847 = vmatpush1.msra.mxu0 0.0
        %1848 = vmatprep.subr.mxu0 0.0
        %1849 = vmatpush1.msra.mxu0 0.0
        %1850 = vmatprep.mubr.f32.mxu0 0.0
        %1851 = vmatmul.mubr.f32.gmra.mrb[0].mxu0 %v1784
        %v1852 = vpop.f32.mrb[0].mxu0
        %v1853 = vadd.f32 0.0, %v1852
        %v1854 = vpop.f32.mrb[0].mxu0
        %1855 = vdwg.mxu0
        %v1856 = vrcp.pop %v1779
        %v1857 = vmul.f32 %v1853, %v1856
        %1858 = vrot.lane.b32.xlu0 %v631, 16
        %v1859 = vpop.permute.xlu0 %1858
        %1860 = vrot.lane.b32.xlu0 %v633, 16
        %v1861 = vpop.permute.xlu0 %1860
        %v1862 = vsel %vm705, %v1859, 0
        %v1864 = vsel %vm705, %v1861, 0
        %1866 = vmatprep.subr.mxu0 0.0
        %1867 = vmatpush1.xpose.msra.mxu0 %v1864
        %1868 = vmatprep.subr.mxu0 0.0
        %1869 = vmatpush1.xpose.msra.mxu0 0.0
        %1870 = vmatprep.subr.mxu0 0.0
        %1871 = vmatpush1.xpose.msra.mxu0 0.0
        %1872 = vmatprep.subr.mxu0 0.0
        %1873 = vmatpush1.xpose.msra.mxu0 0.0
        %1874 = vmatprep.subr.mxu0 0.0
        %1875 = vmatpush1.xpose.msra.mxu0 0.0
        %1876 = vmatprep.subr.mxu0 0.0
        %1877 = vmatpush1.xpose.msra.mxu0 0.0
        %1878 = vmatprep.subr.mxu0 0.0
        %1879 = vmatpush1.xpose.msra.mxu0 0.0
        %1880 = vmatprep.subr.mxu0 0.0
        %1881 = vmatpush1.xpose.msra.mxu0 0.0
        %1882 = vmatprep.subr.mxu0 0.0
        %1883 = vmatpush1.xpose.msra.mxu0 0.0
        %1884 = vmatprep.subr.mxu0 0.0
        %1885 = vmatpush1.xpose.msra.mxu0 0.0
        %1886 = vmatprep.subr.mxu0 0.0
        %1887 = vmatpush1.xpose.msra.mxu0 0.0
        %1888 = vmatprep.subr.mxu0 0.0
        %1889 = vmatpush1.xpose.msra.mxu0 0.0
        %1890 = vmatprep.subr.mxu0 0.0
        %1891 = vmatpush1.xpose.msra.mxu0 0.0
        %1892 = vmatprep.subr.mxu0 0.0
        %1893 = vmatpush1.xpose.msra.mxu0 0.0
        %1894 = vmatprep.subr.mxu0 0.0
        %1895 = vmatpush1.xpose.msra.mxu0 0.0
        %1896 = vmatprep.subr.mxu0 0.0
        %1897 = vmatpush1.xpose.msra.mxu0 0.0
        %1898 = vmatprep.subr.mxu0 0.0
        %1899 = vmatpush1.xpose.msra.mxu0 0.0
        %1900 = vmatprep.subr.mxu0 0.0
        %1901 = vmatpush1.xpose.msra.mxu0 0.0
        %1902 = vmatprep.subr.mxu0 0.0
        %1903 = vmatpush1.xpose.msra.mxu0 0.0
        %1904 = vmatprep.subr.mxu0 0.0
        %1905 = vmatpush1.xpose.msra.mxu0 0.0
        %1906 = vmatprep.subr.mxu0 0.0
        %1907 = vmatpush1.xpose.msra.mxu0 0.0
        %1908 = vmatprep.subr.mxu0 0.0
        %1909 = vmatpush1.xpose.msra.mxu0 0.0
        %1910 = vmatprep.subr.mxu0 0.0
        %1911 = vmatpush1.xpose.msra.mxu0 0.0
        %1912 = vmatprep.subr.mxu0 0.0
        %1913 = vmatpush1.xpose.msra.mxu0 0.0
        %1914 = vmatprep.subr.mxu0 0.0
        %1915 = vmatpush1.xpose.msra.mxu0 0.0
        %1916 = vmatprep.subr.mxu0 0.0
        %1917 = vmatpush1.xpose.msra.mxu0 0.0
        %1918 = vmatprep.subr.mxu0 0.0
        %1919 = vmatpush1.xpose.msra.mxu0 0.0
        %1920 = vmatprep.subr.mxu0 0.0
        %1921 = vmatpush1.xpose.msra.mxu0 0.0
        %1922 = vmatprep.subr.mxu0 0.0
        %1923 = vmatpush1.xpose.msra.mxu0 0.0
        %1924 = vmatprep.subr.mxu0 0.0
        %1925 = vmatpush1.xpose.msra.mxu0 0.0
        %1926 = vmatprep.subr.mxu0 0.0
        %1927 = vmatpush1.xpose.msra.mxu0 0.0
        %1928 = vmatprep.subr.mxu0 0.0
        %1929 = vmatpush1.xpose.msra.mxu0 0.0
        %1930 = vmatprep.mubr.f32.mxu0 0.0
        %1931 = vmatmul.mubr.f32.gmra.mrb[0].mxu0 %v1862
        %v1932 = vpop.f32.mrb[0].mxu0
        %v1933 = vadd.f32 0.0, %v1932
        %v1934 = vpop.f32.mrb[0].mxu0
        %1935 = vdwg.mxu0
        %v1936 = vsel %vm782, %v1933, -inf
        %1937 = vmax.xlane.f32.xlu0 %v1936
        %v1938 = vpop.xlane.xlu0 %1937
        %v1939 = vsub.f32 %v1933, %v1938
        %v1940 = vmul.f32 %v1939, 1.442695
        %v1941 = vpow.pop %v1940
        %v1942 = vsel %vm782, %v1941, 0.0
        %1943 = vadd.xlane.f32.xlu0 %v1942
        %v1944 = vpop.xlane.xlu0 %1943
        %1945 = vrot.lane.b32.xlu0 %v702, 16
        %v1946 = vpop.permute.xlu0 %1945
        %v1949 = vsel %vm782, %v1941, 0
        %1951 = vmatprep.subr.mxu0 0.0
        %1952 = vmatpush1.msra.mxu0 %v1946
        %1953 = vmatprep.subr.mxu0 0.0
        %1954 = vmatpush1.msra.mxu0 0.0
        %1955 = vmatprep.subr.mxu0 0.0
        %1956 = vmatpush1.msra.mxu0 0.0
        %1957 = vmatprep.subr.mxu0 0.0
        %1958 = vmatpush1.msra.mxu0 0.0
        %1959 = vmatprep.subr.mxu0 0.0
        %1960 = vmatpush1.msra.mxu0 0.0
        %1961 = vmatprep.subr.mxu0 0.0
        %1962 = vmatpush1.msra.mxu0 0.0
        %1963 = vmatprep.subr.mxu0 0.0
        %1964 = vmatpush1.msra.mxu0 0.0
        %1965 = vmatprep.subr.mxu0 0.0
        %1966 = vmatpush1.msra.mxu0 0.0
        %1967 = vmatprep.subr.mxu0 0.0
        %1968 = vmatpush1.msra.mxu0 0.0
        %1969 = vmatprep.subr.mxu0 0.0
        %1970 = vmatpush1.msra.mxu0 0.0
        %1971 = vmatprep.subr.mxu0 0.0
        %1972 = vmatpush1.msra.mxu0 0.0
        %1973 = vmatprep.subr.mxu0 0.0
        %1974 = vmatpush1.msra.mxu0 0.0
        %1975 = vmatprep.subr.mxu0 0.0
        %1976 = vmatpush1.msra.mxu0 0.0
        %1977 = vmatprep.subr.mxu0 0.0
        %1978 = vmatpush1.msra.mxu0 0.0
        %1979 = vmatprep.subr.mxu0 0.0
        %1980 = vmatpush1.msra.mxu0 0.0
        %1981 = vmatprep.subr.mxu0 0.0
        %1982 = vmatpush1.msra.mxu0 0.0
        %1983 = vmatprep.subr.mxu0 0.0
        %1984 = vmatpush1.msra.mxu0 0.0
        %1985 = vmatprep.subr.mxu0 0.0
        %1986 = vmatpush1.msra.mxu0 0.0
        %1987 = vmatprep.subr.mxu0 0.0
        %1988 = vmatpush1.msra.mxu0 0.0
        %1989 = vmatprep.subr.mxu0 0.0
        %1990 = vmatpush1.msra.mxu0 0.0
        %1991 = vmatprep.subr.mxu0 0.0
        %1992 = vmatpush1.msra.mxu0 0.0
        %1993 = vmatprep.subr.mxu0 0.0
        %1994 = vmatpush1.msra.mxu0 0.0
        %1995 = vmatprep.subr.mxu0 0.0
        %1996 = vmatpush1.msra.mxu0 0.0
        %1997 = vmatprep.subr.mxu0 0.0
        %1998 = vmatpush1.msra.mxu0 0.0
        %1999 = vmatprep.subr.mxu0 0.0
        %2000 = vmatpush1.msra.mxu0 0.0
        %2001 = vmatprep.subr.mxu0 0.0
        %2002 = vmatpush1.msra.mxu0 0.0
        %2003 = vmatprep.subr.mxu0 0.0
        %2004 = vmatpush1.msra.mxu0 0.0
        %2005 = vmatprep.subr.mxu0 0.0
        %2006 = vmatpush1.msra.mxu0 0.0
        %2007 = vmatprep.subr.mxu0 0.0
        %2008 = vmatpush1.msra.mxu0 0.0
        %2009 = vmatprep.subr.mxu0 0.0
        %2010 = vmatpush1.msra.mxu0 0.0
        %2011 = vmatprep.subr.mxu0 0.0
        %2012 = vmatpush1.msra.mxu0 0.0
        %2013 = vmatprep.subr.mxu0 0.0
        %2014 = vmatpush1.msra.mxu0 0.0
        %2015 = vmatprep.mubr.f32.mxu0 0.0
        %2016 = vmatmul.mubr.f32.gmra.mrb[0].mxu0 %v1949
        %v2017 = vpop.f32.mrb[0].mxu0
        %v2018 = vadd.f32 0.0, %v2017
        %v2019 = vpop.f32.mrb[0].mxu0
        %2020 = vdwg.mxu0
        %v2021 = vrcp.pop %v1944
        %v2022 = vmul.f32 %v2018, %v2021
        %2024 = vrot.lane.b32.xlu0 %v1032, 16
        %v2025 = vpop.permute.xlu0 %2024
        %2028 = vrot.lane.b32.xlu0 %v1197, 32
        %v2029 = vpop.permute.xlu0 %2028
        %2032 = vrot.lane.b32.xlu0 %v1362, 48
        %v2033 = vpop.permute.xlu0 %2032
        %2036 = vrot.lane.b32.xlu0 %v1527, 64
        %v2037 = vpop.permute.xlu0 %2036
        %2040 = vrot.lane.b32.xlu0 %v1692, 80
        %v2041 = vpop.permute.xlu0 %2040
        %2044 = vrot.lane.b32.xlu0 %v1857, 96
        %v2045 = vpop.permute.xlu0 %2044
        %2048 = vrot.lane.b32.xlu0 %v2022, 112
        %v2049 = vpop.permute.xlu0 %2048
        %v2051 = vsel %vm705, %v866, %v2025
        %vm2052 = vcmask 261120
        %v2053 = vsel %vm2052, %v2051, %v2029
        %vm2054 = vcmask 392192
        %v2055 = vsel %vm2054, %v2053, %v2033
        %vm2056 = vcmask 523264
        %v2057 = vsel %vm2056, %v2055, %v2037
        %vm2058 = vcmask 654336
        %v2059 = vsel %vm2058, %v2057, %v2041
        %vm2060 = vcmask 785408
        %v2061 = vsel %vm2060, %v2059, %v2045
        %vm2062 = vcmask 916480
        %v2063 = vsel %vm2062, %v2061, %v2049
        %v2064 = vld [vmem:[#allocation7] sm:$0xff]
        %v2065 = vld [vmem:[#allocation7 + $0x8] sm:$0xff]
        %v2066 = vld [vmem:[#allocation7 + $0x10] sm:$0xff]
        %v2067 = vld [vmem:[#allocation7 + $0x18] sm:$0xff]
        %v2068 = vld [vmem:[#allocation7 + $0x20] sm:$0xff]
        %v2069 = vld [vmem:[#allocation7 + $0x28] sm:$0xff]
        %v2070 = vld [vmem:[#allocation7 + $0x30] sm:$0xff]
        %v2071 = vld [vmem:[#allocation7 + $0x38] sm:$0xff]
        %v2072 = vld [vmem:[#allocation7 + $0x40] sm:$0xff]
        %v2073 = vld [vmem:[#allocation7 + $0x48] sm:$0xff]
        %v2074 = vld [vmem:[#allocation7 + $0x50] sm:$0xff]
        %v2075 = vld [vmem:[#allocation7 + $0x58] sm:$0xff]
        %v2076 = vld [vmem:[#allocation7 + $0x60] sm:$0xff]
        %v2077 = vld [vmem:[#allocation7 + $0x68] sm:$0xff]
        %v2078 = vld [vmem:[#allocation7 + $0x70] sm:$0xff]
        %v2079 = vld [vmem:[#allocation7 + $0x78] sm:$0xff]
        %v2080 = vld [vmem:[%s5] sm:$0x1]
        %v2082 = vlaneseq
        %v2083 = vshrl.u32 %v2082, 7
        %v2084 = vsub.s32 0, %v2083
        %v2085 = vrot.slane %v2080, %v2084
        %2087 = vmatprep.subr.mxu0 0.0
        %2088 = vmatpush1.msra.mxu0 %v2064
        %2089 = vmatprep.subr.mxu0 0.0
        %2090 = vmatpush1.msra.mxu0 %v2065
        %2091 = vmatprep.subr.mxu0 0.0
        %2092 = vmatpush1.msra.mxu0 %v2066
        %2093 = vmatprep.subr.mxu0 0.0
        %2094 = vmatpush1.msra.mxu0 %v2067
        %2095 = vmatprep.subr.mxu0 0.0
        %2096 = vmatpush1.msra.mxu0 %v2068
        %2097 = vmatprep.subr.mxu0 0.0
        %2098 = vmatpush1.msra.mxu0 %v2069
        %2099 = vmatprep.subr.mxu0 0.0
        %2100 = vmatpush1.msra.mxu0 %v2070
        %2101 = vmatprep.subr.mxu0 0.0
        %2102 = vmatpush1.msra.mxu0 %v2071
        %2103 = vmatprep.subr.mxu0 0.0
        %2104 = vmatpush1.msra.mxu0 %v2072
        %2105 = vmatprep.subr.mxu0 0.0
        %2106 = vmatpush1.msra.mxu0 %v2073
        %2107 = vmatprep.subr.mxu0 0.0
        %2108 = vmatpush1.msra.mxu0 %v2074
        %2109 = vmatprep.subr.mxu0 0.0
        %2110 = vmatpush1.msra.mxu0 %v2075
        %2111 = vmatprep.subr.mxu0 0.0
        %2112 = vmatpush1.msra.mxu0 %v2076
        %2113 = vmatprep.subr.mxu0 0.0
        %2114 = vmatpush1.msra.mxu0 %v2077
        %2115 = vmatprep.subr.mxu0 0.0
        %2116 = vmatpush1.msra.mxu0 %v2078
        %2117 = vmatprep.subr.mxu0 0.0
        %2118 = vmatpush1.msra.mxu0 %v2079
        %2119 = vmatprep.subr.mxu0 0.0
        %2120 = vmatpush1.msra.mxu0 0.0
        %2121 = vmatprep.subr.mxu0 0.0
        %2122 = vmatpush1.msra.mxu0 0.0
        %2123 = vmatprep.subr.mxu0 0.0
        %2124 = vmatpush1.msra.mxu0 0.0
        %2125 = vmatprep.subr.mxu0 0.0
        %2126 = vmatpush1.msra.mxu0 0.0
        %2127 = vmatprep.subr.mxu0 0.0
        %2128 = vmatpush1.msra.mxu0 0.0
        %2129 = vmatprep.subr.mxu0 0.0
        %2130 = vmatpush1.msra.mxu0 0.0
        %2131 = vmatprep.subr.mxu0 0.0
        %2132 = vmatpush1.msra.mxu0 0.0
        %2133 = vmatprep.subr.mxu0 0.0
        %2134 = vmatpush1.msra.mxu0 0.0
        %2135 = vmatprep.subr.mxu0 0.0
        %2136 = vmatpush1.msra.mxu0 0.0
        %2137 = vmatprep.subr.mxu0 0.0
        %2138 = vmatpush1.msra.mxu0 0.0
        %2139 = vmatprep.subr.mxu0 0.0
        %2140 = vmatpush1.msra.mxu0 0.0
        %2141 = vmatprep.subr.mxu0 0.0
        %2142 = vmatpush1.msra.mxu0 0.0
        %2143 = vmatprep.subr.mxu0 0.0
        %2144 = vmatpush1.msra.mxu0 0.0
        %2145 = vmatprep.subr.mxu0 0.0
        %2146 = vmatpush1.msra.mxu0 0.0
        %2147 = vmatprep.subr.mxu0 0.0
        %2148 = vmatpush1.msra.mxu0 0.0
        %2149 = vmatprep.subr.mxu0 0.0
        %2150 = vmatpush1.msra.mxu0 0.0
        %2151 = vmatprep.mubr.f32.mxu0 0.0
        %2152 = vmatmul.mubr.f32.gmra.mrb[0].mxu0 %v2063
        %v2153 = vpop.f32.mrb[0].mxu0
        %v2154 = vadd.f32 %v2085, %v2153
        %v2155 = vpop.f32.mrb[0].mxu0
        %2156 = vdwg.mxu0
        %v2157 = vadd.f32 %v487, %v2154
        %v2158 = vld [vmem:[%s6] sm:$0x1]
        %v2159 = vld [vmem:[%s7] sm:$0x1]
        %2160 = vadd.xlane.f32.xlu0 %v2157
        %v2161 = vpop.xlane.xlu0 %2160
        %v2162 = vmul.f32 %v2161, %v492
        %v2163 = vsub.f32 %v2157, %v2162
        %v2164 = vmul.f32 %v2163, %v2163
        %2165 = vadd.xlane.f32.xlu0 %v2164
        %v2166 = vpop.xlane.xlu0 %2165
        %v2167 = vmul.f32 %v2166, %v492
        %v2168 = vadd.f32 %v2167, 1e-05
        %v2169 = vrsqrt.pop %v2168
        %v2170 = vmul.f32 %v2163, %v2169
        %v2172 = vlaneseq
        %v2173 = vshrl.u32 %v2172, 7
        %v2174 = vsub.s32 0, %v2173
        %v2175 = vrot.slane %v2158, %v2174
        %v2177 = vmul.f32 %v2170, %v2175
        %v2179 = vlaneseq
        %v2180 = vshrl.u32 %v2179, 7
        %v2181 = vsub.s32 0, %v2180
        %v2182 = vrot.slane %v2159, %v2181
        %v2184 = vadd.f32 %v2177, %v2182
        %v2185 = vld [vmem:[#allocation8] sm:$0xff]
        %v2186 = vld [vmem:[#allocation8 + $0x8] sm:$0xff]
        %v2187 = vld [vmem:[#allocation8 + $0x10] sm:$0xff]
        %v2188 = vld [vmem:[#allocation8 + $0x18] sm:$0xff]
        %v2189 = vld [vmem:[#allocation8 + $0x20] sm:$0xff]
        %v2190 = vld [vmem:[#allocation8 + $0x28] sm:$0xff]
        %v2191 = vld [vmem:[#allocation8 + $0x30] sm:$0xff]
        %v2192 = vld [vmem:[#allocation8 + $0x38] sm:$0xff]
        %v2193 = vld [vmem:[#allocation8 + $0x40] sm:$0xff]
        %v2194 = vld [vmem:[#allocation8 + $0x48] sm:$0xff]
        %v2195 = vld [vmem:[#allocation8 + $0x50] sm:$0xff]
        %v2196 = vld [vmem:[#allocation8 + $0x58] sm:$0xff]
        %v2197 = vld [vmem:[#allocation8 + $0x60] sm:$0xff]
        %v2198 = vld [vmem:[#allocation8 + $0x68] sm:$0xff]
        %v2199 = vld [vmem:[#allocation8 + $0x70] sm:$0xff]
        %v2200 = vld [vmem:[#allocation8 + $0x78] sm:$0xff]
        %v2201 = vld [vmem:[#allocation8 + $0x80] sm:$0xff]
        %v2202 = vld [vmem:[#allocation8 + $0x88] sm:$0xff]
        %v2203 = vld [vmem:[#allocation8 + $0x90] sm:$0xff]
        %v2204 = vld [vmem:[#allocation8 + $0x98] sm:$0xff]
        %v2205 = vld [vmem:[#allocation8 + $0xa0] sm:$0xff]
        %v2206 = vld [vmem:[#allocation8 + $0xa8] sm:$0xff]
        %v2207 = vld [vmem:[#allocation8 + $0xb0] sm:$0xff]
        %v2208 = vld [vmem:[#allocation8 + $0xb8] sm:$0xff]
        %v2209 = vld [vmem:[#allocation8 + $0xc0] sm:$0xff]
        %v2210 = vld [vmem:[#allocation8 + $0xc8] sm:$0xff]
        %v2211 = vld [vmem:[#allocation8 + $0xd0] sm:$0xff]
        %v2212 = vld [vmem:[#allocation8 + $0xd8] sm:$0xff]
        %v2213 = vld [vmem:[#allocation8 + $0xe0] sm:$0xff]
        %v2214 = vld [vmem:[#allocation8 + $0xe8] sm:$0xff]
        %v2215 = vld [vmem:[#allocation8 + $0xf0] sm:$0xff]
        %v2216 = vld [vmem:[#allocation8 + $0xf8] sm:$0xff]
        %v2217 = vld [vmem:[#allocation8 + $0x100] sm:$0xff]
        %v2218 = vld [vmem:[#allocation8 + $0x108] sm:$0xff]
        %v2219 = vld [vmem:[#allocation8 + $0x110] sm:$0xff]
        %v2220 = vld [vmem:[#allocation8 + $0x118] sm:$0xff]
        %v2221 = vld [vmem:[#allocation8 + $0x120] sm:$0xff]
        %v2222 = vld [vmem:[#allocation8 + $0x128] sm:$0xff]
        %v2223 = vld [vmem:[#allocation8 + $0x130] sm:$0xff]
        %v2224 = vld [vmem:[#allocation8 + $0x138] sm:$0xff]
        %v2225 = vld [vmem:[#allocation8 + $0x140] sm:$0xff]
        %v2226 = vld [vmem:[#allocation8 + $0x148] sm:$0xff]
        %v2227 = vld [vmem:[#allocation8 + $0x150] sm:$0xff]
        %v2228 = vld [vmem:[#allocation8 + $0x158] sm:$0xff]
        %v2229 = vld [vmem:[#allocation8 + $0x160] sm:$0xff]
        %v2230 = vld [vmem:[#allocation8 + $0x168] sm:$0xff]
        %v2231 = vld [vmem:[#allocation8 + $0x170] sm:$0xff]
        %v2232 = vld [vmem:[#allocation8 + $0x178] sm:$0xff]
        %v2233 = vld [vmem:[#allocation8 + $0x180] sm:$0xff]
        %v2234 = vld [vmem:[#allocation8 + $0x188] sm:$0xff]
        %v2235 = vld [vmem:[#allocation8 + $0x190] sm:$0xff]
        %v2236 = vld [vmem:[#allocation8 + $0x198] sm:$0xff]
        %v2237 = vld [vmem:[#allocation8 + $0x1a0] sm:$0xff]
        %v2238 = vld [vmem:[#allocation8 + $0x1a8] sm:$0xff]
        %v2239 = vld [vmem:[#allocation8 + $0x1b0] sm:$0xff]
        %v2240 = vld [vmem:[#allocation8 + $0x1b8] sm:$0xff]
        %v2241 = vld [vmem:[#allocation8 + $0x1c0] sm:$0xff]
        %v2242 = vld [vmem:[#allocation8 + $0x1c8] sm:$0xff]
        %v2243 = vld [vmem:[#allocation8 + $0x1d0] sm:$0xff]
        %v2244 = vld [vmem:[#allocation8 + $0x1d8] sm:$0xff]
        %v2245 = vld [vmem:[#allocation8 + $0x1e0] sm:$0xff]
        %v2246 = vld [vmem:[#allocation8 + $0x1e8] sm:$0xff]
        %v2247 = vld [vmem:[#allocation8 + $0x1f0] sm:$0xff]
        %v2248 = vld [vmem:[#allocation8 + $0x1f8] sm:$0xff]
        %v2249 = vld [vmem:[%s9] sm:$0xf]
        %v2251 = vlaneseq
        %v2252 = vshrl.u32 %v2251, 7
        %v2253 = vsub.s32 0, %v2252
        %v2254 = vrot.slane %v2249, %v2253
        %v2255 = vlaneseq
        %v2256 = vshrl.u32 %v2255, 7
        %v2257 = vsub.s32 1, %v2256
        %v2258 = vrot.slane %v2249, %v2257
        %v2259 = vlaneseq
        %v2260 = vshrl.u32 %v2259, 7
        %v2261 = vsub.s32 2, %v2260
        %v2262 = vrot.slane %v2249, %v2261
        %v2263 = vlaneseq
        %v2264 = vshrl.u32 %v2263, 7
        %v2265 = vsub.s32 3, %v2264
        %v2266 = vrot.slane %v2249, %v2265
        %2271 = vmatprep.subr.mxu0 %v2186
        %2272 = vmatpush1.msra.mxu0 %v2185
        %2273 = vmatprep.subr.mxu0 %v2190
        %2274 = vmatpush1.msra.mxu0 %v2189
        %2275 = vmatprep.subr.mxu0 %v2194
        %2276 = vmatpush1.msra.mxu0 %v2193
        %2277 = vmatprep.subr.mxu0 %v2198
        %2278 = vmatpush1.msra.mxu0 %v2197
        %2279 = vmatprep.subr.mxu0 %v2202
        %2280 = vmatpush1.msra.mxu0 %v2201
        %2281 = vmatprep.subr.mxu0 %v2206
        %2282 = vmatpush1.msra.mxu0 %v2205
        %2283 = vmatprep.subr.mxu0 %v2210
        %2284 = vmatpush1.msra.mxu0 %v2209
        %2285 = vmatprep.subr.mxu0 %v2214
        %2286 = vmatpush1.msra.mxu0 %v2213
        %2287 = vmatprep.subr.mxu0 %v2218
        %2288 = vmatpush1.msra.mxu0 %v2217
        %2289 = vmatprep.subr.mxu0 %v2222
        %2290 = vmatpush1.msra.mxu0 %v2221
        %2291 = vmatprep.subr.mxu0 %v2226
        %2292 = vmatpush1.msra.mxu0 %v2225
        %2293 = vmatprep.subr.mxu0 %v2230
        %2294 = vmatpush1.msra.mxu0 %v2229
        %2295 = vmatprep.subr.mxu0 %v2234
        %2296 = vmatpush1.msra.mxu0 %v2233
        %2297 = vmatprep.subr.mxu0 %v2238
        %2298 = vmatpush1.msra.mxu0 %v2237
        %2299 = vmatprep.subr.mxu0 %v2242
        %2300 = vmatpush1.msra.mxu0 %v2241
        %2301 = vmatprep.subr.mxu0 %v2246
        %2302 = vmatpush1.msra.mxu0 %v2245
        %2303 = vmatprep.subr.mxu0 0.0
        %2304 = vmatpush1.msra.mxu0 0.0
        %2305 = vmatprep.subr.mxu0 0.0
        %2306 = vmatpush1.msra.mxu0 0.0
        %2307 = vmatprep.subr.mxu0 0.0
        %2308 = vmatpush1.msra.mxu0 0.0
        %2309 = vmatprep.subr.mxu0 0.0
        %2310 = vmatpush1.msra.mxu0 0.0
        %2311 = vmatprep.subr.mxu0 0.0
        %2312 = vmatpush1.msra.mxu0 0.0
        %2313 = vmatprep.subr.mxu0 0.0
        %2314 = vmatpush1.msra.mxu0 0.0
        %2315 = vmatprep.subr.mxu0 0.0
        %2316 = vmatpush1.msra.mxu0 0.0
        %2317 = vmatprep.subr.mxu0 0.0
        %2318 = vmatpush1.msra.mxu0 0.0
        %2319 = vmatprep.subr.mxu0 0.0
        %2320 = vmatpush1.msra.mxu0 0.0
        %2321 = vmatprep.subr.mxu0 0.0
        %2322 = vmatpush1.msra.mxu0 0.0
        %2323 = vmatprep.subr.mxu0 0.0
        %2324 = vmatpush1.msra.mxu0 0.0
        %2325 = vmatprep.subr.mxu0 0.0
        %2326 = vmatpush1.msra.mxu0 0.0
        %2327 = vmatprep.subr.mxu0 0.0
        %2328 = vmatpush1.msra.mxu0 0.0
        %2329 = vmatprep.subr.mxu0 0.0
        %2330 = vmatpush1.msra.mxu0 0.0
        %2331 = vmatprep.subr.mxu0 0.0
        %2332 = vmatpush1.msra.mxu0 0.0
        %2333 = vmatprep.subr.mxu0 0.0
        %2334 = vmatpush1.msra.mxu0 0.0
        %2335 = vmatprep.mubr.f32.mxu0 0.0
        %2336 = vmatmul.mubr.f32.gmra.mrb[0].mxu0 %v2184
        %v2337 = vpop.f32.mrb[0].mxu0
        %v2338 = vadd.f32 %v2254, %v2337
        %v2339 = vpop.f32.mrb[0].mxu0
        %v2340 = vadd.f32 %v2258, %v2339
        %2341 = vdwg.mxu0
        %2342 = vmatprep.subr.mxu0 %v2188
        %2343 = vmatpush1.msra.mxu0 %v2187
        %2344 = vmatprep.subr.mxu0 %v2192
        %2345 = vmatpush1.msra.mxu0 %v2191
        %2346 = vmatprep.subr.mxu0 %v2196
        %2347 = vmatpush1.msra.mxu0 %v2195
        %2348 = vmatprep.subr.mxu0 %v2200
        %2349 = vmatpush1.msra.mxu0 %v2199
        %2350 = vmatprep.subr.mxu0 %v2204
        %2351 = vmatpush1.msra.mxu0 %v2203
        %2352 = vmatprep.subr.mxu0 %v2208
        %2353 = vmatpush1.msra.mxu0 %v2207
        %2354 = vmatprep.subr.mxu0 %v2212
        %2355 = vmatpush1.msra.mxu0 %v2211
        %2356 = vmatprep.subr.mxu0 %v2216
        %2357 = vmatpush1.msra.mxu0 %v2215
        %2358 = vmatprep.subr.mxu0 %v2220
        %2359 = vmatpush1.msra.mxu0 %v2219
        %2360 = vmatprep.subr.mxu0 %v2224
        %2361 = vmatpush1.msra.mxu0 %v2223
        %2362 = vmatprep.subr.mxu0 %v2228
        %2363 = vmatpush1.msra.mxu0 %v2227
        %2364 = vmatprep.subr.mxu0 %v2232
        %2365 = vmatpush1.msra.mxu0 %v2231
        %2366 = vmatprep.subr.mxu0 %v2236
        %2367 = vmatpush1.msra.mxu0 %v2235
        %2368 = vmatprep.subr.mxu0 %v2240
        %2369 = vmatpush1.msra.mxu0 %v2239
        %2370 = vmatprep.subr.mxu0 %v2244
        %2371 = vmatpush1.msra.mxu0 %v2243
        %2372 = vmatprep.subr.mxu0 %v2248
        %2373 = vmatpush1.msra.mxu0 %v2247
        %2374 = vmatprep.subr.mxu0 0.0
        %2375 = vmatpush1.msra.mxu0 0.0
        %2376 = vmatprep.subr.mxu0 0.0
        %2377 = vmatpush1.msra.mxu0 0.0
        %2378 = vmatprep.subr.mxu0 0.0
        %2379 = vmatpush1.msra.mxu0 0.0
        %2380 = vmatprep.subr.mxu0 0.0
        %2381 = vmatpush1.msra.mxu0 0.0
        %2382 = vmatprep.subr.mxu0 0.0
        %2383 = vmatpush1.msra.mxu0 0.0
        %2384 = vmatprep.subr.mxu0 0.0
        %2385 = vmatpush1.msra.mxu0 0.0
        %2386 = vmatprep.subr.mxu0 0.0
        %2387 = vmatpush1.msra.mxu0 0.0
        %2388 = vmatprep.subr.mxu0 0.0
        %2389 = vmatpush1.msra.mxu0 0.0
        %2390 = vmatprep.subr.mxu0 0.0
        %2391 = vmatpush1.msra.mxu0 0.0
        %2392 = vmatprep.subr.mxu0 0.0
        %2393 = vmatpush1.msra.mxu0 0.0
        %2394 = vmatprep.subr.mxu0 0.0
        %2395 = vmatpush1.msra.mxu0 0.0
        %2396 = vmatprep.subr.mxu0 0.0
        %2397 = vmatpush1.msra.mxu0 0.0
        %2398 = vmatprep.subr.mxu0 0.0
        %2399 = vmatpush1.msra.mxu0 0.0
        %2400 = vmatprep.subr.mxu0 0.0
        %2401 = vmatpush1.msra.mxu0 0.0
        %2402 = vmatprep.subr.mxu0 0.0
        %2403 = vmatpush1.msra.mxu0 0.0
        %2404 = vmatprep.subr.mxu0 0.0
        %2405 = vmatpush1.msra.mxu0 0.0
        %2406 = vmatprep.mubr.f32.mxu0 0.0
        %2407 = vmatmul.mubr.f32.gmra.mrb[0].mxu0 %v2184
        %v2408 = vpop.f32.mrb[0].mxu0
        %v2409 = vadd.f32 %v2262, %v2408
        %v2410 = vpop.f32.mrb[0].mxu0
        %v2411 = vadd.f32 %v2266, %v2410
        %2412 = vdwg.mxu0
        %v2413 = vmul.f32 %v2338, 0.5
        %v2414 = vmul.f32 %v2340, 0.5
        %v2415 = vmul.f32 %v2409, 0.5
        %v2416 = vmul.f32 %v2411, 0.5
        %v2417 = vmul.f32 %v2338, 0.70710677
        %v2418 = vmul.f32 %v2340, 0.70710677
        %v2419 = vmul.f32 %v2409, 0.70710677
        %v2420 = vmul.f32 %v2411, 0.70710677
        %v2421 = verf.f32.pop %v2417
        %v2422 = verf.f32.pop %v2418
        %v2423 = verf.f32.pop %v2419
        %v2424 = verf.f32.pop %v2420
        %v2425 = vadd.f32 %v2421, 1.0
        %v2426 = vadd.f32 %v2422, 1.0
        %v2427 = vadd.f32 %v2423, 1.0
        %v2428 = vadd.f32 %v2424, 1.0
        %v2429 = vmul.f32 %v2413, %v2425
        %v2430 = vmul.f32 %v2414, %v2426
        %v2431 = vmul.f32 %v2415, %v2427
        %v2432 = vmul.f32 %v2416, %v2428
        %v2433 = vld [vmem:[#allocation10] sm:$0xff]
        %v2434 = vld [vmem:[#allocation10 + $0x8] sm:$0xff]
        %v2435 = vld [vmem:[#allocation10 + $0x10] sm:$0xff]
        %v2436 = vld [vmem:[#allocation10 + $0x18] sm:$0xff]
        %v2437 = vld [vmem:[#allocation10 + $0x20] sm:$0xff]
        %v2438 = vld [vmem:[#allocation10 + $0x28] sm:$0xff]
        %v2439 = vld [vmem:[#allocation10 + $0x30] sm:$0xff]
        %v2440 = vld [vmem:[#allocation10 + $0x38] sm:$0xff]
        %v2441 = vld [vmem:[#allocation10 + $0x40] sm:$0xff]
        %v2442 = vld [vmem:[#allocation10 + $0x48] sm:$0xff]
        %v2443 = vld [vmem:[#allocation10 + $0x50] sm:$0xff]
        %v2444 = vld [vmem:[#allocation10 + $0x58] sm:$0xff]
        %v2445 = vld [vmem:[#allocation10 + $0x60] sm:$0xff]
        %v2446 = vld [vmem:[#allocation10 + $0x68] sm:$0xff]
        %v2447 = vld [vmem:[#allocation10 + $0x70] sm:$0xff]
        %v2448 = vld [vmem:[#allocation10 + $0x78] sm:$0xff]
        %v2449 = vld [vmem:[#allocation10 + $0x80] sm:$0xff]
        %v2450 = vld [vmem:[#allocation10 + $0x88] sm:$0xff]
        %v2451 = vld [vmem:[#allocation10 + $0x90] sm:$0xff]
        %v2452 = vld [vmem:[#allocation10 + $0x98] sm:$0xff]
        %v2453 = vld [vmem:[#allocation10 + $0xa0] sm:$0xff]
        %v2454 = vld [vmem:[#allocation10 + $0xa8] sm:$0xff]
        %v2455 = vld [vmem:[#allocation10 + $0xb0] sm:$0xff]
        %v2456 = vld [vmem:[#allocation10 + $0xb8] sm:$0xff]
        %v2457 = vld [vmem:[#allocation10 + $0xc0] sm:$0xff]
        %v2458 = vld [vmem:[#allocation10 + $0xc8] sm:$0xff]
        %v2459 = vld [vmem:[#allocation10 + $0xd0] sm:$0xff]
        %v2460 = vld [vmem:[#allocation10 + $0xd8] sm:$0xff]
        %v2461 = vld [vmem:[#allocation10 + $0xe0] sm:$0xff]
        %v2462 = vld [vmem:[#allocation10 + $0xe8] sm:$0xff]
        %v2463 = vld [vmem:[#allocation10 + $0xf0] sm:$0xff]
        %v2464 = vld [vmem:[#allocation10 + $0xf8] sm:$0xff]
        %v2465 = vld [vmem:[#allocation10 + $0x100] sm:$0xff]
        %v2466 = vld [vmem:[#allocation10 + $0x108] sm:$0xff]
        %v2467 = vld [vmem:[#allocation10 + $0x110] sm:$0xff]
        %v2468 = vld [vmem:[#allocation10 + $0x118] sm:$0xff]
        %v2469 = vld [vmem:[#allocation10 + $0x120] sm:$0xff]
        %v2470 = vld [vmem:[#allocation10 + $0x128] sm:$0xff]
        %v2471 = vld [vmem:[#allocation10 + $0x130] sm:$0xff]
        %v2472 = vld [vmem:[#allocation10 + $0x138] sm:$0xff]
        %v2473 = vld [vmem:[#allocation10 + $0x140] sm:$0xff]
        %v2474 = vld [vmem:[#allocation10 + $0x148] sm:$0xff]
        %v2475 = vld [vmem:[#allocation10 + $0x150] sm:$0xff]
        %v2476 = vld [vmem:[#allocation10 + $0x158] sm:$0xff]
        %v2477 = vld [vmem:[#allocation10 + $0x160] sm:$0xff]
        %v2478 = vld [vmem:[#allocation10 + $0x168] sm:$0xff]
        %v2479 = vld [vmem:[#allocation10 + $0x170] sm:$0xff]
        %v2480 = vld [vmem:[#allocation10 + $0x178] sm:$0xff]
        %v2481 = vld [vmem:[#allocation10 + $0x180] sm:$0xff]
        %v2482 = vld [vmem:[#allocation10 + $0x188] sm:$0xff]
        %v2483 = vld [vmem:[#allocation10 + $0x190] sm:$0xff]
        %v2484 = vld [vmem:[#allocation10 + $0x198] sm:$0xff]
        %v2485 = vld [vmem:[#allocation10 + $0x1a0] sm:$0xff]
        %v2486 = vld [vmem:[#allocation10 + $0x1a8] sm:$0xff]
        %v2487 = vld [vmem:[#allocation10 + $0x1b0] sm:$0xff]
        %v2488 = vld [vmem:[#allocation10 + $0x1b8] sm:$0xff]
        %v2489 = vld [vmem:[#allocation10 + $0x1c0] sm:$0xff]
        %v2490 = vld [vmem:[#allocation10 + $0x1c8] sm:$0xff]
        %v2491 = vld [vmem:[#allocation10 + $0x1d0] sm:$0xff]
        %v2492 = vld [vmem:[#allocation10 + $0x1d8] sm:$0xff]
        %v2493 = vld [vmem:[#allocation10 + $0x1e0] sm:$0xff]
        %v2494 = vld [vmem:[#allocation10 + $0x1e8] sm:$0xff]
        %v2495 = vld [vmem:[#allocation10 + $0x1f0] sm:$0xff]
        %v2496 = vld [vmem:[#allocation10 + $0x1f8] sm:$0xff]
        %v2497 = vld [vmem:[%s11] sm:$0x1]
        %v2499 = vlaneseq
        %v2500 = vshrl.u32 %v2499, 7
        %v2501 = vsub.s32 0, %v2500
        %v2502 = vrot.slane %v2497, %v2501
        %2504 = vmatprep.subr.mxu0 0.0
        %2505 = vmatpush1.msra.mxu0 %v2433
        %2506 = vmatprep.subr.mxu0 0.0
        %2507 = vmatpush1.msra.mxu0 %v2434
        %2508 = vmatprep.subr.mxu0 0.0
        %2509 = vmatpush1.msra.mxu0 %v2435
        %2510 = vmatprep.subr.mxu0 0.0
        %2511 = vmatpush1.msra.mxu0 %v2436
        %2512 = vmatprep.subr.mxu0 0.0
        %2513 = vmatpush1.msra.mxu0 %v2437
        %2514 = vmatprep.subr.mxu0 0.0
        %2515 = vmatpush1.msra.mxu0 %v2438
        %2516 = vmatprep.subr.mxu0 0.0
        %2517 = vmatpush1.msra.mxu0 %v2439
        %2518 = vmatprep.subr.mxu0 0.0
        %2519 = vmatpush1.msra.mxu0 %v2440
        %2520 = vmatprep.subr.mxu0 0.0
        %2521 = vmatpush1.msra.mxu0 %v2441
        %2522 = vmatprep.subr.mxu0 0.0
        %2523 = vmatpush1.msra.mxu0 %v2442
        %2524 = vmatprep.subr.mxu0 0.0
        %2525 = vmatpush1.msra.mxu0 %v2443
        %2526 = vmatprep.subr.mxu0 0.0
        %2527 = vmatpush1.msra.mxu0 %v2444
        %2528 = vmatprep.subr.mxu0 0.0
        %2529 = vmatpush1.msra.mxu0 %v2445
        %2530 = vmatprep.subr.mxu0 0.0
        %2531 = vmatpush1.msra.mxu0 %v2446
        %2532 = vmatprep.subr.mxu0 0.0
        %2533 = vmatpush1.msra.mxu0 %v2447
        %2534 = vmatprep.subr.mxu0 0.0
        %2535 = vmatpush1.msra.mxu0 %v2448
        %2536 = vmatprep.subr.mxu0 0.0
        %2537 = vmatpush1.msra.mxu0 %v2449
        %2538 = vmatprep.subr.mxu0 0.0
        %2539 = vmatpush1.msra.mxu0 %v2450
        %2540 = vmatprep.subr.mxu0 0.0
        %2541 = vmatpush1.msra.mxu0 %v2451
        %2542 = vmatprep.subr.mxu0 0.0
        %2543 = vmatpush1.msra.mxu0 %v2452
        %2544 = vmatprep.subr.mxu0 0.0
        %2545 = vmatpush1.msra.mxu0 %v2453
        %2546 = vmatprep.subr.mxu0 0.0
        %2547 = vmatpush1.msra.mxu0 %v2454
        %2548 = vmatprep.subr.mxu0 0.0
        %2549 = vmatpush1.msra.mxu0 %v2455
        %2550 = vmatprep.subr.mxu0 0.0
        %2551 = vmatpush1.msra.mxu0 %v2456
        %2552 = vmatprep.subr.mxu0 0.0
        %2553 = vmatpush1.msra.mxu0 %v2457
        %2554 = vmatprep.subr.mxu0 0.0
        %2555 = vmatpush1.msra.mxu0 %v2458
        %2556 = vmatprep.subr.mxu0 0.0
        %2557 = vmatpush1.msra.mxu0 %v2459
        %2558 = vmatprep.subr.mxu0 0.0
        %2559 = vmatpush1.msra.mxu0 %v2460
        %2560 = vmatprep.subr.mxu0 0.0
        %2561 = vmatpush1.msra.mxu0 %v2461
        %2562 = vmatprep.subr.mxu0 0.0
        %2563 = vmatpush1.msra.mxu0 %v2462
        %2564 = vmatprep.subr.mxu0 0.0
        %2565 = vmatpush1.msra.mxu0 %v2463
        %2566 = vmatprep.subr.mxu0 0.0
        %2567 = vmatpush1.msra.mxu0 %v2464
        %2568 = vmatprep.mubr.f32.mxu0 %v2430
        %2569 = vmatmul.mubr.f32.gmra.mrb[0].mxu0 %v2429
        %v2570 = vpop.f32.mrb[0].mxu0
        %v2571 = vadd.f32 %v2502, %v2570
        %v2572 = vpop.f32.mrb[0].mxu0
        %2573 = vdwg.mxu0
        %2574 = vmatprep.subr.mxu0 0.0
        %2575 = vmatpush1.msra.mxu0 %v2465
        %2576 = vmatprep.subr.mxu0 0.0
        %2577 = vmatpush1.msra.mxu0 %v2466
        %2578 = vmatprep.subr.mxu0 0.0
        %2579 = vmatpush1.msra.mxu0 %v2467
        %2580 = vmatprep.subr.mxu0 0.0
        %2581 = vmatpush1.msra.mxu0 %v2468
        %2582 = vmatprep.subr.mxu0 0.0
        %2583 = vmatpush1.msra.mxu0 %v2469
        %2584 = vmatprep.subr.mxu0 0.0
        %2585 = vmatpush1.msra.mxu0 %v2470
        %2586 = vmatprep.subr.mxu0 0.0
        %2587 = vmatpush1.msra.mxu0 %v2471
        %2588 = vmatprep.subr.mxu0 0.0
        %2589 = vmatpush1.msra.mxu0 %v2472
        %2590 = vmatprep.subr.mxu0 0.0
        %2591 = vmatpush1.msra.mxu0 %v2473
        %2592 = vmatprep.subr.mxu0 0.0
        %2593 = vmatpush1.msra.mxu0 %v2474
        %2594 = vmatprep.subr.mxu0 0.0
        %2595 = vmatpush1.msra.mxu0 %v2475
        %2596 = vmatprep.subr.mxu0 0.0
        %2597 = vmatpush1.msra.mxu0 %v2476
        %2598 = vmatprep.subr.mxu0 0.0
        %2599 = vmatpush1.msra.mxu0 %v2477
        %2600 = vmatprep.subr.mxu0 0.0
        %2601 = vmatpush1.msra.mxu0 %v2478
        %2602 = vmatprep.subr.mxu0 0.0
        %2603 = vmatpush1.msra.mxu0 %v2479
        %2604 = vmatprep.subr.mxu0 0.0
        %2605 = vmatpush1.msra.mxu0 %v2480
        %2606 = vmatprep.subr.mxu0 0.0
        %2607 = vmatpush1.msra.mxu0 %v2481
        %2608 = vmatprep.subr.mxu0 0.0
        %2609 = vmatpush1.msra.mxu0 %v2482
        %2610 = vmatprep.subr.mxu0 0.0
        %2611 = vmatpush1.msra.mxu0 %v2483
        %2612 = vmatprep.subr.mxu0 0.0
        %2613 = vmatpush1.msra.mxu0 %v2484
        %2614 = vmatprep.subr.mxu0 0.0
        %2615 = vmatpush1.msra.mxu0 %v2485
        %2616 = vmatprep.subr.mxu0 0.0
        %2617 = vmatpush1.msra.mxu0 %v2486
        %2618 = vmatprep.subr.mxu0 0.0
        %2619 = vmatpush1.msra.mxu0 %v2487
        %2620 = vmatprep.subr.mxu0 0.0
        %2621 = vmatpush1.msra.mxu0 %v2488
        %2622 = vmatprep.subr.mxu0 0.0
        %2623 = vmatpush1.msra.mxu0 %v2489
        %2624 = vmatprep.subr.mxu0 0.0
        %2625 = vmatpush1.msra.mxu0 %v2490
        %2626 = vmatprep.subr.mxu0 0.0
        %2627 = vmatpush1.msra.mxu0 %v2491
        %2628 = vmatprep.subr.mxu0 0.0
        %2629 = vmatpush1.msra.mxu0 %v2492
        %2630 = vmatprep.subr.mxu0 0.0
        %2631 = vmatpush1.msra.mxu0 %v2493
        %2632 = vmatprep.subr.mxu0 0.0
        %2633 = vmatpush1.msra.mxu0 %v2494
        %2634 = vmatprep.subr.mxu0 0.0
        %2635 = vmatpush1.msra.mxu0 %v2495
        %2636 = vmatprep.subr.mxu0 0.0
        %2637 = vmatpush1.msra.mxu0 %v2496
        %2638 = vmatprep.mubr.f32.mxu0 %v2432
        %2639 = vmatmul.mubr.f32.gmra.mrb[0].mxu0 %v2431
        %v2640 = vpop.f32.mrb[0].mxu0
        %v2641 = vadd.f32 %v2571, %v2640
        %v2642 = vpop.f32.mrb[0].mxu0
        %2643 = vdwg.mxu0
        %v2644 = vadd.f32 %v2184, %v2641
        %2645 = vst [vmem:[%s486] sm:$0xff] %v2644
        %s2646 = sand.u32 %s296, 1
        %s2647 = scalar_lea.sflag [#allocation4], %s2646
        %s2648 = sand.u32 %s296, 1
        %s2649 = smul.addr %s2648, 8
        %s2650 = scalar_lea.vmem [#allocation11], %s2649
        // Predicated region
        $region89: #{tpu_custom_call.1} parent=67 // pred_check
          %p2651 = pneg %p306
        $region90: #{tpu_custom_call.1} parent=67 // pred_check_branch
          %2653 = sbr.rel (%p2651) target = $region92
        $region91: #{tpu_custom_call.1} parent=67 // pred_region
          %s2655 = ssub.s32 128, 128
          %2656 = vsyncadd %s2647, %s2655
          %s2657 = smul.addr %s31, 128
          %s2658 = scalar_lea.hbm %s12, %s2657
          %s2660 = sshll.u32 %s2650, 4
          %s2661 = int_to_ptr.vmem [resolvable:$true] %s2660
          %2663 = dma.vmem_to_hbm [thread:$0]  %s2661, 128, %s2658, %s2647
        $region92: #{tpu_custom_call.1} parent=67 // pred_fallthru
          _
      $region68: #{tpu_custom_call.1} parent=5 // pred_fallthru
        _
      %p2664 = scmp.le.s32.totalorder 2, %s26
      // Predicated region
      $region93: #{tpu_custom_call.1} parent=5 // pred_check
        %p2665 = pneg %p2664
      $region94: #{tpu_custom_call.1} parent=5 // pred_check_branch
        %2667 = sbr.rel (%p2665) target = $region96
      $region95: #{tpu_custom_call.1} parent=5 // pred_region
        %s2668 = ssub.s32 %s26, 2
        // Predicated region
        $region97: #{tpu_custom_call.1} parent=95 // pred_check
          %p2669 = pneg %p312
        $region98: #{tpu_custom_call.1} parent=95 // pred_check_branch
          %2671 = sbr.rel (%p2669) target = $region100
        $region99: #{tpu_custom_call.1} parent=95 // pred_region
          %s2672 = sand.u32 %s297, 1
          %s2673 = scalar_lea.sflag [#allocation4], %s2672
          %s2674 = sand.u32 %s297, 1
          %s2675 = smul.addr %s2674, 8
          %s2676 = scalar_lea.vmem [#allocation11], %s2675
          %2677 = dma.done %s2673, 128
        $region100: #{tpu_custom_call.1} parent=95 // pred_fallthru
          _
      $region96: #{tpu_custom_call.1} parent=5 // pred_fallthru
        _
    $region6: #{tpu_custom_call.1} parent=1 // loop_footer
      %s30 = sadd.s32 1, %s26
    $region7: #{tpu_custom_call.1} parent=1 // loop_footer_branch
      %25 = sbr.rel target = $region3
    $region8: #{tpu_custom_call.1} parent=1 // loop_exit
      _
    %2678 = vsyncpa [#allocation3], 1
    %s2679 = scalar_lea.sflag [#allocation3], 1
    %2680 = vsyncpa %s2679, 1
    %2681 = vsyncpa [#allocation6], 1
    %2682 = vsyncpa [#allocation9], 1
    %2683 = vsyncpa [#allocation4], 1
    %s2684 = scalar_lea.sflag [#allocation4], 1
    %2685 = vsyncpa %s2684, 1

</llo_original>
